<compile_context>
chip_gen: v5e
topology: v5e:2x2
jax: 0.10.0
libtpu: 0.0.40
codegen_flags: <defaults>
</compile_context>

<pallas_src>
import jax
import jax.numpy as jnp
from jax import lax
from jax.experimental import pallas as pl
from jax.experimental.pallas import tpu as pltpu


# ----------------------------------------------------------------------------- MLP
def mlp_kernel(xt_ref, w1t_ref, b1t_ref, w2_ref, b2_ref, o_ref):
    # xt: [p, nt]  w1t: [hidden, p]  b1t/w2: [hidden, 1]  b2: [1, 1]  o: [1, nt]
    h = jnp.dot(w1t_ref[...], xt_ref[...], preferred_element_type=jnp.float32) + b1t_ref[...]
    h = jnp.maximum(h, 0.0)
    # Output width 1 -> sublane reduction (VPU/XLU) instead of an MXU matmul with N=1;
    # the store stays lane-dense over n.
    o_ref[...] = jnp.sum(h * w2_ref[...], axis=0, keepdims=True) + b2_ref[...]


def mlp_pallas(x, w1, b1, w2, b2, *, n_tile=512):
    n, p = x.shape
    hidden = w1.shape[1]
    n_tile = min(n_tile, n)
    assert n % n_tile == 0, "demo keeps n a multiple of the tile size"

    xt = jnp.transpose(x)                 # [p, n]  (node dim -> lanes)
    w1t = jnp.transpose(w1)               # [hidden, p]
    b1t = b1.reshape(hidden, 1)
    w2c = w2.reshape(hidden, 1)
    b2c = b2.reshape(1, 1)

    out = pl.pallas_call(
        mlp_kernel,
        out_shape=jax.ShapeDtypeStruct((1, n), jnp.float32),
        grid=(n // n_tile,),
        in_specs=[
            pl.BlockSpec((p, n_tile), lambda i: (0, i)),
            pl.BlockSpec((hidden, p), lambda i: (0, 0)),
            pl.BlockSpec((hidden, 1), lambda i: (0, 0)),
            pl.BlockSpec((hidden, 1), lambda i: (0, 0)),
            pl.BlockSpec((1, 1), lambda i: (0, 0)),
        ],
        out_specs=pl.BlockSpec((1, n_tile), lambda i: (0, i)),
        compiler_params=pltpu.CompilerParams(dimension_semantics=("parallel",)),
    )(xt, w1t, b1t, w2c, b2c)
    return out.reshape(-1)                # [n]


# ----------------------------------------------------------------- spatial decorrelation
def decor_kernel(theta_ref, npos_ref, tpos_ref, y_nb_ref, o_nb_ref, y_tgt_ref, o_tgt_ref,
                 yo_dec_ref):
    sigma_sq = theta_ref[0]
    phi = theta_ref[1]
    tau = theta_ref[2]

    d, k, bt = npos_ref.shape             # coord dim, neighbor count, batch tile (lanes)

    # Squared distances target<->neighbors [k, bt] and neighbor<->neighbor [k, k, bt];
    # coordinate dimension d is small and static -> unrolled (pure VPU work).
    dist2_in = jnp.zeros((k, bt), jnp.float32)
    dist2_nn = jnp.zeros((k, k, bt), jnp.float32)
    for t in range(d):
        nb_t = npos_ref[t]                               # [k, bt]
        tg_t = tpos_ref[t]                               # [1, bt]
        diff_in = nb_t - tg_t
        dist2_in = dist2_in + diff_in * diff_in
        diff_nn = nb_t[:, None, :] - nb_t[None, :, :]    # [k, k, bt]
        dist2_nn = dist2_nn + diff_nn * diff_nn

    # Exponential covariance family (batch in lanes -> everything elementwise / EUP).
    c = sigma_sq * jnp.exp(-phi * jnp.sqrt(dist2_in))                 # cov(i, N_i), no nugget

    # Neighbor-neighbor covariance; the diagonal is analytically sigma^2 (1 + tau)
    # (dist = 0 plus nugget) -> jnp.where on the diag mask instead of an eye multiply-add.
    row_kb = lax.broadcasted_iota(jnp.int32, (k, bt), 0)
    diag3 = row_kb[:, None, :] == row_kb[None, :, :]                  # [k, k, bt] bool
    A = jnp.where(diag3, sigma_sq * (1.0 + tau),
                  sigma_sq * jnp.exp(-phi * jnp.sqrt(dist2_nn)))      # [k, k, bt], SPD

    # Batched (over lanes) right-looking LDL^T elimination with fused forward solves.
    #   A = L D L^T (L unit lower)  =>  v^T A^{-1} c = (L^{-1} v) . D^{-1} (L^{-1} c)
    # so no back substitution and no explicit B_i are needed.  The pivot column below the
    # diagonal equals the pivot-row slice (trailing block stays symmetric) -> no strided
    # A[:, p, :] extraction; trailing-rows-only updates ~halve the [k,k,bt] FMAs.
    r_c = c                                              # shrinking forward-solve residuals
    r_y = y_nb_ref[...]                                  # [k, bt]
    r_o = o_nb_ref[...]                                  # [k, bt]
    acc_F = jnp.zeros((1, bt), jnp.float32)              # accumulates c^T A^{-1} c
    acc_y = jnp.zeros((1, bt), jnp.float32)              # accumulates y_nb^T A^{-1} c
    acc_o = jnp.zeros((1, bt), jnp.float32)              # accumulates o_nb^T A^{-1} c
    A_cur = A                                            # rows p..k-1 of the updated matrix
    # TODO(synk): for production k (15-20), bound live ranges with lax.fori_loop(unroll=True).
    for p in range(k):
        row_p = A_cur[0]                                 # [k, bt] pivot row (== pivot column)
        piv = row_p[p:p + 1]                             # [1, bt]
        inv_piv = pl.reciprocal(piv, approx=True)        # EUP vrcp ...
        inv_piv = inv_piv * (2.0 - piv * inv_piv)        # ... + one Newton step (f32 accuracy)
        u_c = r_c[0:1]                                   # solved components u_*[p], [1, bt]
        u_y = r_y[0:1]
        u_o = r_o[0:1]
        w_c = u_c * inv_piv                              # (D^{-1} L^{-1} c)[p]
        acc_F = acc_F + u_c * w_c
        acc_y = acc_y + u_y * w_c
        acc_o = acc_o + u_o * w_c
        if p < k - 1:
            fac = row_p[p + 1:] * inv_piv                # [k-1-p, bt] elimination factors
            A_cur = A_cur[1:] - fac[:, None, :] * row_p[None, :, :]
            r_c = r_c[1:] - fac * u_c
            r_y = r_y[1:] - fac * u_y
            r_o = r_o[1:] - fac * u_o

    # F_i = sigma^2 (1 + tau) - c^T A^{-1} c
    F = sigma_sq * (1.0 + tau) - acc_F                   # [1, bt]
    inv_sqrt_F = lax.rsqrt(F)

    y_dec = (y_tgt_ref[...] - acc_y) * inv_sqrt_F        # [1, bt]
    o_dec = (o_tgt_ref[...] - acc_o) * inv_sqrt_F
    yo_dec_ref[...] = jnp.concatenate([y_dec, o_dec], axis=0)   # lane-dense [2, bt] store


def decorrelate_pallas(theta, npos_t, tpos_t, y_nb, o_nb, y_tgt, o_tgt, *, b_tile=512):
    d, k, b = npos_t.shape
    b_tile = min(b_tile, b)
    assert b % b_tile == 0, "demo keeps b a multiple of the tile size"
    return pl.pallas_call(
        decor_kernel,
        out_shape=jax.ShapeDtypeStruct((2, b), jnp.float32),
        grid=(b // b_tile,),
        in_specs=[
            pl.BlockSpec(memory_space=pltpu.MemorySpace.SMEM),            # theta scalars
            pl.BlockSpec((d, k, b_tile), lambda i: (0, 0, i)),            # neighbor coords
            pl.BlockSpec((d, 1, b_tile), lambda i: (0, 0, i)),            # target coords
            pl.BlockSpec((k, b_tile), lambda i: (0, i)),                  # y neighbors
            pl.BlockSpec((k, b_tile), lambda i: (0, i)),                  # o neighbors
            pl.BlockSpec((1, b_tile), lambda i: (0, i)),                  # y targets
            pl.BlockSpec((1, b_tile), lambda i: (0, i)),                  # o targets
        ],
        out_specs=pl.BlockSpec((2, b_tile), lambda i: (0, i)),
        compiler_params=pltpu.CompilerParams(
            dimension_semantics=("parallel",),
            vmem_limit_bytes=32 * 1024 * 1024,
        ),
    )(theta, npos_t, tpos_t, y_nb, o_nb, y_tgt, o_tgt)


# ----------------------------------------------------------------------------- forward
def precompute_decor_inputs(pos, y, nn_idx):
    """Gather glue that depends only on (pos, y, nn_idx): constant across training steps,
    hoisted off the per-step critical path.  Batch-in-lanes layout ([.., b] last)."""
    b, k = nn_idx.shape
    nn_idx_t = jnp.transpose(nn_idx)                               # [k, b]
    npos_t = jnp.transpose(pos[nn_idx_t], (2, 0, 1))               # [d, k, b]
    tpos_t = jnp.transpose(pos[:b])[:, None, :]                    # [d, 1, b]
    y_nb = y[nn_idx_t]                                             # [k, b]
    y_tgt = y[:b][None, :]                                         # [1, b]
    return {"nn_idx_t": nn_idx_t, "npos_t": npos_t, "tpos_t": tpos_t,
            "y_nb": y_nb, "y_tgt": y_tgt}


def nngls_forward(x, y, pos, nn_idx, theta, mlp_params, decor_consts=None):
    """Returns (y_decor [b], o_decor [b], o [n]) -- same semantics as nngls.forward."""
    if decor_consts is None:
        decor_consts = precompute_decor_inputs(pos, y, nn_idx)
    w1, b1, w2, b2 = mlp_params
    b = nn_idx.shape[0]

    # o = mlp(x).squeeze().reshape(-1)
    o = mlp_pallas(x, w1, b1, w2, b2)                              # [n]

    # Only o-dependent glue is on the per-step path: gather straight into [k, b] layout.
    nn_idx_t = decor_consts["nn_idx_t"]
    o_nb = o[nn_idx_t]                                             # [k, b]
    o_tgt = o[:b][None, :]                                         # [1, b]

    yo_dec = decorrelate_pallas(theta, decor_consts["npos_t"], decor_consts["tpos_t"],
                                decor_consts["y_nb"], o_nb, decor_consts["y_tgt"], o_tgt)
    return yo_dec[0], yo_dec[1], o


# -------------------------------------------------------------------- pure-JAX reference
def nngls_reference(x, y, pos, nn_idx, theta, mlp_params):
    w1, b1, w2, b2 = mlp_params
    sigma_sq, phi, tau = theta[0], theta[1], theta[2]
    o = (jnp.maximum(x @ w1 + b1, 0.0) @ w2 + b2).reshape(-1)
    b, k = nn_idx.shape
    npos = pos[nn_idx]
    tpos = pos[:b]
    dist_in = jnp.sqrt(jnp.sum((npos - tpos[:, None, :]) ** 2, axis=-1))
    cov_i_Ni = sigma_sq * jnp.exp(-phi * dist_in)
    dist_nn = jnp.sqrt(jnp.sum((npos[:, :, None, :] - npos[:, None, :, :]) ** 2, axis=-1))
    cov_nn = sigma_sq * jnp.exp(-phi * dist_nn) + sigma_sq * tau * jnp.eye(k)
    inv = jnp.linalg.inv(cov_nn)
    B_i = jnp.einsum('bij,bj->bi', inv, cov_i_Ni)
    F_i = sigma_sq * (1.0 + tau) - jnp.sum(B_i * cov_i_Ni, axis=-1)
    y_dec = (y[:b] - jnp.sum(y[nn_idx] * B_i, axis=-1)) / jnp.sqrt(F_i)
    o_dec = (o[:b] - jnp.sum(o[nn_idx] * B_i, axis=-1)) / jnp.sqrt(F_i)
    return y_dec, o_dec, o


# ------------------------------------------------------------------------------- main
if __name__ == "__main__":
    # Small demo shapes; multiples of the 512-wide tiles so both "parallel" grids have
    # >= 4 steps (keeps v7x's two TensorCores populated).
    n, b, k, d, p, hidden = 2048, 2048, 8, 2, 4, 16

    key = jax.random.PRNGKey(0)
    k_pos, k_x, k_y, k_w1, k_w2 = jax.random.split(key, 5)

    pos = jax.random.uniform(k_pos, (n, d), jnp.float32)
    x = jax.random.normal(k_x, (n, p), jnp.float32)
    y = jax.random.normal(k_y, (n,), jnp.float32)

    # Dense neighbor table (full k-neighborhoods, never including the node itself).
    nn_idx = ((jnp.arange(b)[:, None] + 1 + jnp.arange(k)[None, :]) % n).astype(jnp.int32)

    # theta = (sigma^2, phi, tau)  -- nn.Parameter in the torch module.
    theta = jnp.array([1.0, 1.5, 0.1], jnp.float32)

    # Deterministic MLP parameters (Linear(p->hidden), ReLU, Linear(hidden->1)).
    w1 = jax.random.normal(k_w1, (p, hidden), jnp.float32) * 0.3
    b1 = jnp.zeros((1, hidden), jnp.float32)
    w2 = jax.random.normal(k_w2, (hidden, 1), jnp.float32) * 0.3
    b2 = jnp.zeros((1, 1), jnp.float32)
    mlp_params = (w1, b1, w2, b2)

    # Step-invariant gather glue hoisted out of the per-step path.
    decor_consts = precompute_decor_inputs(pos, y, nn_idx)

    fwd = jax.jit(nngls_forward)
    y_dec, o_dec, o = fwd(x, y, pos, nn_idx, theta, mlp_params, decor_consts)
    jax.block_until_ready((y_dec, o_dec, o))

    y_refv, o_refv, o_full_ref = nngls_reference(x, y, pos, nn_idx, theta, mlp_params)
    assert jnp.allclose(y_dec, y_refv, rtol=1e-3, atol=1e-3)
    assert jnp.allclose(o_dec, o_refv, rtol=1e-3, atol=1e-3)
    assert jnp.allclose(o, o_full_ref, rtol=1e-3, atol=1e-3)

    print("KERNEL_OK")
</pallas_src>

<mosaic_0001>
module attributes {stable_mosaic.version = 11 : i64} {
  func.func @mlp_kernel(%arg0: i32, %arg1: memref<4x512xf32, #tpu.memory_space<vmem>>, %arg2: memref<16x4xf32, #tpu.memory_space<vmem>>, %arg3: memref<16x1xf32, #tpu.memory_space<vmem>>, %arg4: memref<16x1xf32, #tpu.memory_space<vmem>>, %arg5: memref<1x1xf32, #tpu.memory_space<vmem>>, %arg6: memref<1x512xf32, #tpu.memory_space<vmem>>) attributes {dimension_semantics = [#tpu.dimension_semantics<parallel>], iteration_bounds = array<i64: 4>, scalar_prefetch = 0 : i64, scratch_operands = 0 : i64, tpu.core_type = #tpu.core_type<tc>, window_params = [{transform_indices = @transform_0, window_bounds = array<i64: 4, 512>}, {pipeline_mode = #tpu.pipeline_mode<synchronous>, transform_indices = @transform_1, window_bounds = array<i64: 16, 4>}, {pipeline_mode = #tpu.pipeline_mode<synchronous>, transform_indices = @transform_2, window_bounds = array<i64: 16, 1>}, {pipeline_mode = #tpu.pipeline_mode<synchronous>, transform_indices = @transform_3, window_bounds = array<i64: 16, 1>}, {pipeline_mode = #tpu.pipeline_mode<synchronous>, transform_indices = @transform_4, window_bounds = array<i64: 1, 1>}, {transform_indices = @transform_5, window_bounds = array<i64: 1, 512>}]} {
    %c0 = arith.constant 0 : index
    %c0_0 = arith.constant 0 : index
    %0 = vector.load %arg2[%c0, %c0_0] : memref<16x4xf32, #tpu.memory_space<vmem>>, vector<16x4xf32>
    %c0_1 = arith.constant 0 : index
    %c0_2 = arith.constant 0 : index
    %1 = vector.load %arg1[%c0_1, %c0_2] : memref<4x512xf32, #tpu.memory_space<vmem>>, vector<4x512xf32>
    %cst = arith.constant dense<0.000000e+00> : vector<16x512xf32>
    %2 = tpu.matmul %0, %1, %cst {dimension_numbers = #tpu.dot_dimension_numbers<[1], [0], [0], [1], [0, 0, 1, 1], [], []>} : vector<16x4xf32>, vector<4x512xf32>, vector<16x512xf32> -> vector<16x512xf32>
    %c0_3 = arith.constant 0 : index
    %c0_4 = arith.constant 0 : index
    %3 = vector.load %arg3[%c0_3, %c0_4] : memref<16x1xf32, #tpu.memory_space<vmem>>, vector<16x1xf32>
    %4 = vector.broadcast %3 : vector<16x1xf32> to vector<16x512xf32>
    %5 = arith.addf %2, %4 : vector<16x512xf32>
    %cst_5 = arith.constant 0.000000e+00 : f32
    %6 = vector.broadcast %cst_5 : f32 to vector<16x512xf32>
    %7 = arith.maximumf %5, %6 : vector<16x512xf32>
    %c0_6 = arith.constant 0 : index
    %c0_7 = arith.constant 0 : index
    %8 = vector.load %arg4[%c0_6, %c0_7] : memref<16x1xf32, #tpu.memory_space<vmem>>, vector<16x1xf32>
    %9 = vector.broadcast %8 : vector<16x1xf32> to vector<16x512xf32>
    %10 = arith.mulf %7, %9 : vector<16x512xf32>
    %cst_8 = arith.constant dense<0.000000e+00> : vector<512xf32>
    %11 = vector.multi_reduction <add>, %10, %cst_8 [0] : vector<16x512xf32> to vector<512xf32>
    %12 = vector.shape_cast %11 : vector<512xf32> to vector<1x512xf32>
    %c0_9 = arith.constant 0 : index
    %c0_10 = arith.constant 0 : index
    %13 = vector.load %arg5[%c0_9, %c0_10] : memref<1x1xf32, #tpu.memory_space<vmem>>, vector<1x1xf32>
    %14 = vector.broadcast %13 : vector<1x1xf32> to vector<1x512xf32>
    %15 = arith.addf %12, %14 : vector<1x512xf32>
    %c0_11 = arith.constant 0 : index
    %c0_12 = arith.constant 0 : index
    %16 = vector.load %arg6[%c0_11, %c0_12] : memref<1x512xf32, #tpu.memory_space<vmem>>, vector<1x512xf32>
    tpu.vector_store %arg6[%c0_11, %c0_12], %15 {strides = array<i32>} : memref<1x512xf32, #tpu.memory_space<vmem>>, vector<1x512xf32>,
    return
  }
  func.func @transform_0(%arg0: i32) -> (i32, i32) {
    %c0_i32 = arith.constant 0 : i32
    %c0_i32_0 = arith.constant 0 : i32
    return %c0_i32, %arg0 : i32, i32
  }
  func.func @transform_1(%arg0: i32) -> (i32, i32) {
    %c0_i32 = arith.constant 0 : i32
    %c0_i32_0 = arith.constant 0 : i32
    %c0_i32_1 = arith.constant 0 : i32
    return %c0_i32, %c0_i32_0 : i32, i32
  }
  func.func @transform_2(%arg0: i32) -> (i32, i32) {
    %c0_i32 = arith.constant 0 : i32
    %c0_i32_0 = arith.constant 0 : i32
    %c0_i32_1 = arith.constant 0 : i32
    return %c0_i32, %c0_i32_0 : i32, i32
  }
  func.func @transform_3(%arg0: i32) -> (i32, i32) {
    %c0_i32 = arith.constant 0 : i32
    %c0_i32_0 = arith.constant 0 : i32
    %c0_i32_1 = arith.constant 0 : i32
    return %c0_i32, %c0_i32_0 : i32, i32
  }
  func.func @transform_4(%arg0: i32) -> (i32, i32) {
    %c0_i32 = arith.constant 0 : i32
    %c0_i32_0 = arith.constant 0 : i32
    %c0_i32_1 = arith.constant 0 : i32
    return %c0_i32, %c0_i32_0 : i32, i32
  }
  func.func @transform_5(%arg0: i32) -> (i32, i32) {
    %c0_i32 = arith.constant 0 : i32
    %c0_i32_0 = arith.constant 0 : i32
    return %c0_i32, %arg0 : i32, i32
  }
}

module attributes {stable_mosaic.version = 11 : i64} {
  func.func @decor_kernel(%arg0: i32, %arg1: memref<3xf32, #tpu.memory_space<smem>>, %arg2: memref<2x8x512xf32, #tpu.memory_space<vmem>>, %arg3: memref<2x1x512xf32, #tpu.memory_space<vmem>>, %arg4: memref<8x512xf32, #tpu.memory_space<vmem>>, %arg5: memref<8x512xf32, #tpu.memory_space<vmem>>, %arg6: memref<1x512xf32, #tpu.memory_space<vmem>>, %arg7: memref<1x512xf32, #tpu.memory_space<vmem>>, %arg8: memref<2x512xf32, #tpu.memory_space<vmem>>) attributes {dimension_semantics = [#tpu.dimension_semantics<parallel>], iteration_bounds = array<i64: 4>, scalar_prefetch = 0 : i64, scratch_operands = 0 : i64, tpu.core_type = #tpu.core_type<tc>, window_params = [{transform_indices = @transform_0, window_bounds = array<i64: 3>}, {transform_indices = @transform_1, window_bounds = array<i64: 2, 8, 512>}, {transform_indices = @transform_2, window_bounds = array<i64: 2, 1, 512>}, {transform_indices = @transform_3, window_bounds = array<i64: 8, 512>}, {transform_indices = @transform_4, window_bounds = array<i64: 8, 512>}, {transform_indices = @transform_5, window_bounds = array<i64: 1, 512>}, {transform_indices = @transform_6, window_bounds = array<i64: 1, 512>}, {transform_indices = @transform_7, window_bounds = array<i64: 2, 512>}]} {
    %c0 = arith.constant 0 : index
    %0 = memref.load %arg1[%c0] : memref<3xf32, #tpu.memory_space<smem>>
    %c1 = arith.constant 1 : index
    %1 = memref.load %arg1[%c1] : memref<3xf32, #tpu.memory_space<smem>>
    %c2 = arith.constant 2 : index
    %2 = memref.load %arg1[%c2] : memref<3xf32, #tpu.memory_space<smem>>
    %cst = arith.constant 0.000000e+00 : f32
    %3 = vector.broadcast %cst : f32 to vector<8x512xf32>
    %cst_0 = arith.constant 0.000000e+00 : f32
    %4 = vector.broadcast %cst_0 : f32 to vector<8x8x512xf32>
    %c0_1 = arith.constant 0 : index
    %c0_2 = arith.constant 0 : index
    %c0_3 = arith.constant 0 : index
    %5 = vector.load %arg2[%c0_1, %c0_2, %c0_3] : memref<2x8x512xf32, #tpu.memory_space<vmem>>, vector<1x8x512xf32>
    %6 = vector.shape_cast %5 : vector<1x8x512xf32> to vector<8x512xf32>
    %c0_4 = arith.constant 0 : index
    %c0_5 = arith.constant 0 : index
    %c0_6 = arith.constant 0 : index
    %7 = vector.load %arg3[%c0_4, %c0_5, %c0_6] : memref<2x1x512xf32, #tpu.memory_space<vmem>>, vector<1x1x512xf32>
    %8 = vector.shape_cast %7 : vector<1x1x512xf32> to vector<1x512xf32>
    %9 = vector.broadcast %8 : vector<1x512xf32> to vector<8x512xf32>
    %10 = arith.subf %6, %9 : vector<8x512xf32>
    %11 = arith.mulf %10, %10 : vector<8x512xf32>
    %12 = arith.addf %3, %11 : vector<8x512xf32>
    %13 = vector.shape_cast %6 : vector<8x512xf32> to vector<8x1x512xf32>
    %14 = vector.shape_cast %6 : vector<8x512xf32> to vector<1x8x512xf32>
    %15 = vector.broadcast %13 : vector<8x1x512xf32> to vector<8x8x512xf32>
    %16 = vector.broadcast %14 : vector<1x8x512xf32> to vector<8x8x512xf32>
    %17 = arith.subf %15, %16 : vector<8x8x512xf32>
    %18 = arith.mulf %17, %17 : vector<8x8x512xf32>
    %19 = arith.addf %4, %18 : vector<8x8x512xf32>
    %c1_7 = arith.constant 1 : index
    %c0_8 = arith.constant 0 : index
    %c0_9 = arith.constant 0 : index
    %20 = vector.load %arg2[%c1_7, %c0_8, %c0_9] : memref<2x8x512xf32, #tpu.memory_space<vmem>>, vector<1x8x512xf32>
    %21 = vector.shape_cast %20 : vector<1x8x512xf32> to vector<8x512xf32>
    %c1_10 = arith.constant 1 : index
    %c0_11 = arith.constant 0 : index
    %c0_12 = arith.constant 0 : index
    %22 = vector.load %arg3[%c1_10, %c0_11, %c0_12] : memref<2x1x512xf32, #tpu.memory_space<vmem>>, vector<1x1x512xf32>
    %23 = vector.shape_cast %22 : vector<1x1x512xf32> to vector<1x512xf32>
    %24 = vector.broadcast %23 : vector<1x512xf32> to vector<8x512xf32>
    %25 = arith.subf %21, %24 : vector<8x512xf32>
    %26 = arith.mulf %25, %25 : vector<8x512xf32>
    %27 = arith.addf %12, %26 : vector<8x512xf32>
    %28 = vector.shape_cast %21 : vector<8x512xf32> to vector<8x1x512xf32>
    %29 = vector.shape_cast %21 : vector<8x512xf32> to vector<1x8x512xf32>
    %30 = vector.broadcast %28 : vector<8x1x512xf32> to vector<8x8x512xf32>
    %31 = vector.broadcast %29 : vector<1x8x512xf32> to vector<8x8x512xf32>
    %32 = arith.subf %30, %31 : vector<8x8x512xf32>
    %33 = arith.mulf %32, %32 : vector<8x8x512xf32>
    %34 = arith.addf %19, %33 : vector<8x8x512xf32>
    %cst_13 = arith.constant 0.000000e+00 : f32
    %35 = arith.subf %cst_13, %1 : f32
    %36 = math.sqrt %27 : vector<8x512xf32>
    %37 = vector.broadcast %35 : f32 to vector<8x512xf32>
    %38 = arith.mulf %37, %36 : vector<8x512xf32>
    %39 = math.exp %38 : vector<8x512xf32>
    %40 = vector.broadcast %0 : f32 to vector<8x512xf32>
    %41 = arith.mulf %40, %39 : vector<8x512xf32>
    %42 = tpu.iota {dimensions = array<i32: 0>} : vector<8x512xi32>
    %43 = vector.shape_cast %42 : vector<8x512xi32> to vector<8x1x512xi32>
    %44 = vector.shape_cast %42 : vector<8x512xi32> to vector<1x8x512xi32>
    %45 = vector.broadcast %43 : vector<8x1x512xi32> to vector<8x8x512xi32>
    %46 = vector.broadcast %44 : vector<1x8x512xi32> to vector<8x8x512xi32>
    %47 = arith.cmpi eq, %45, %46 : vector<8x8x512xi32>
    %cst_14 = arith.constant 1.000000e+00 : f32
    %48 = arith.addf %cst_14, %2 : f32
    %49 = arith.mulf %0, %48 : f32
    %cst_15 = arith.constant 0.000000e+00 : f32
    %50 = arith.subf %cst_15, %1 : f32
    %51 = math.sqrt %34 : vector<8x8x512xf32>
    %52 = vector.broadcast %50 : f32 to vector<8x8x512xf32>
    %53 = arith.mulf %52, %51 : vector<8x8x512xf32>
    %54 = math.exp %53 : vector<8x8x512xf32>
    %55 = vector.broadcast %0 : f32 to vector<8x8x512xf32>
    %56 = arith.mulf %55, %54 : vector<8x8x512xf32>
    %57 = vector.broadcast %49 : f32 to vector<8x8x512xf32>
    %58 = arith.select %47, %57, %56 : vector<8x8x512xi1>, vector<8x8x512xf32>
    %c0_16 = arith.constant 0 : index
    %c0_17 = arith.constant 0 : index
    %59 = vector.load %arg4[%c0_16, %c0_17] : memref<8x512xf32, #tpu.memory_space<vmem>>, vector<8x512xf32>
    %c0_18 = arith.constant 0 : index
    %c0_19 = arith.constant 0 : index
    %60 = vector.load %arg5[%c0_18, %c0_19] : memref<8x512xf32, #tpu.memory_space<vmem>>, vector<8x512xf32>
    %cst_20 = arith.constant 0.000000e+00 : f32
    %61 = vector.broadcast %cst_20 : f32 to vector<1x512xf32>
    %cst_21 = arith.constant 0.000000e+00 : f32
    %62 = vector.broadcast %cst_21 : f32 to vector<1x512xf32>
    %cst_22 = arith.constant 0.000000e+00 : f32
    %63 = vector.broadcast %cst_22 : f32 to vector<1x512xf32>
    %64 = vector.extract_strided_slice %58 {offsets = [0, 0, 0], sizes = [1, 8, 512], strides = [1, 1, 1]} : vector<8x8x512xf32> to vector<1x8x512xf32>
    %65 = vector.shape_cast %64 : vector<1x8x512xf32> to vector<8x512xf32>
    %66 = vector.extract_strided_slice %65 {offsets = [0, 0], sizes = [1, 512], strides = [1, 1]} : vector<8x512xf32> to vector<1x512xf32>
    %67 = tpu.reciprocal %66 {approx = true} : vector<1x512xf32> -> vector<1x512xf32>
    %68 = arith.mulf %66, %67 : vector<1x512xf32>
    %cst_23 = arith.constant 2.000000e+00 : f32
    %69 = vector.broadcast %cst_23 : f32 to vector<1x512xf32>
    %70 = arith.subf %69, %68 : vector<1x512xf32>
    %71 = arith.mulf %67, %70 : vector<1x512xf32>
    %72 = vector.extract_strided_slice %41 {offsets = [0, 0], sizes = [1, 512], strides = [1, 1]} : vector<8x512xf32> to vector<1x512xf32>
    %73 = vector.extract_strided_slice %59 {offsets = [0, 0], sizes = [1, 512], strides = [1, 1]} : vector<8x512xf32> to vector<1x512xf32>
    %74 = vector.extract_strided_slice %60 {offsets = [0, 0], sizes = [1, 512], strides = [1, 1]} : vector<8x512xf32> to vector<1x512xf32>
    %75 = arith.mulf %72, %71 : vector<1x512xf32>
    %76 = arith.mulf %72, %75 : vector<1x512xf32>
    %77 = arith.addf %61, %76 : vector<1x512xf32>
    %78 = arith.mulf %73, %75 : vector<1x512xf32>
    %79 = arith.addf %62, %78 : vector<1x512xf32>
    %80 = arith.mulf %74, %75 : vector<1x512xf32>
    %81 = arith.addf %63, %80 : vector<1x512xf32>
    %82 = vector.extract_strided_slice %65 {offsets = [1, 0], sizes = [7, 512], strides = [1, 1]} : vector<8x512xf32> to vector<7x512xf32>
    %83 = vector.broadcast %71 : vector<1x512xf32> to vector<7x512xf32>
    %84 = arith.mulf %82, %83 : vector<7x512xf32>
    %85 = vector.extract_strided_slice %58 {offsets = [1, 0, 0], sizes = [7, 8, 512], strides = [1, 1, 1]} : vector<8x8x512xf32> to vector<7x8x512xf32>
    %86 = vector.shape_cast %84 : vector<7x512xf32> to vector<7x1x512xf32>
    %87 = vector.shape_cast %65 : vector<8x512xf32> to vector<1x8x512xf32>
    %88 = vector.broadcast %86 : vector<7x1x512xf32> to vector<7x8x512xf32>
    %89 = vector.broadcast %87 : vector<1x8x512xf32> to vector<7x8x512xf32>
    %90 = arith.mulf %88, %89 : vector<7x8x512xf32>
    %91 = arith.subf %85, %90 : vector<7x8x512xf32>
    %92 = vector.extract_strided_slice %41 {offsets = [1, 0], sizes = [7, 512], strides = [1, 1]} : vector<8x512xf32> to vector<7x512xf32>
    %93 = vector.broadcast %72 : vector<1x512xf32> to vector<7x512xf32>
    %94 = arith.mulf %84, %93 : vector<7x512xf32>
    %95 = arith.subf %92, %94 : vector<7x512xf32>
    %96 = vector.extract_strided_slice %59 {offsets = [1, 0], sizes = [7, 512], strides = [1, 1]} : vector<8x512xf32> to vector<7x512xf32>
    %97 = vector.broadcast %73 : vector<1x512xf32> to vector<7x512xf32>
    %98 = arith.mulf %84, %97 : vector<7x512xf32>
    %99 = arith.subf %96, %98 : vector<7x512xf32>
    %100 = vector.extract_strided_slice %60 {offsets = [1, 0], sizes = [7, 512], strides = [1, 1]} : vector<8x512xf32> to vector<7x512xf32>
    %101 = vector.broadcast %74 : vector<1x512xf32> to vector<7x512xf32>
    %102 = arith.mulf %84, %101 : vector<7x512xf32>
    %103 = arith.subf %100, %102 : vector<7x512xf32>
    %104 = vector.extract_strided_slice %91 {offsets = [0, 0, 0], sizes = [1, 8, 512], strides = [1, 1, 1]} : vector<7x8x512xf32> to vector<1x8x512xf32>
    %105 = vector.shape_cast %104 : vector<1x8x512xf32> to vector<8x512xf32>
    %106 = vector.extract_strided_slice %105 {offsets = [1, 0], sizes = [1, 512], strides = [1, 1]} : vector<8x512xf32> to vector<1x512xf32>
    %107 = tpu.reciprocal %106 {approx = true} : vector<1x512xf32> -> vector<1x512xf32>
    %108 = arith.mulf %106, %107 : vector<1x512xf32>
    %cst_24 = arith.constant 2.000000e+00 : f32
    %109 = vector.broadcast %cst_24 : f32 to vector<1x512xf32>
    %110 = arith.subf %109, %108 : vector<1x512xf32>
    %111 = arith.mulf %107, %110 : vector<1x512xf32>
    %112 = vector.extract_strided_slice %95 {offsets = [0, 0], sizes = [1, 512], strides = [1, 1]} : vector<7x512xf32> to vector<1x512xf32>
    %113 = vector.extract_strided_slice %99 {offsets = [0, 0], sizes = [1, 512], strides = [1, 1]} : vector<7x512xf32> to vector<1x512xf32>
    %114 = vector.extract_strided_slice %103 {offsets = [0, 0], sizes = [1, 512], strides = [1, 1]} : vector<7x512xf32> to vector<1x512xf32>
    %115 = arith.mulf %112, %111 : vector<1x512xf32>
    %116 = arith.mulf %112, %115 : vector<1x512xf32>
    %117 = arith.addf %77, %116 : vector<1x512xf32>
    %118 = arith.mulf %113, %115 : vector<1x512xf32>
    %119 = arith.addf %79, %118 : vector<1x512xf32>
    %120 = arith.mulf %114, %115 : vector<1x512xf32>
    %121 = arith.addf %81, %120 : vector<1x512xf32>
    %122 = vector.extract_strided_slice %105 {offsets = [2, 0], sizes = [6, 512], strides = [1, 1]} : vector<8x512xf32> to vector<6x512xf32>
    %123 = vector.broadcast %111 : vector<1x512xf32> to vector<6x512xf32>
    %124 = arith.mulf %122, %123 : vector<6x512xf32>
    %125 = vector.extract_strided_slice %91 {offsets = [1, 0, 0], sizes = [6, 8, 512], strides = [1, 1, 1]} : vector<7x8x512xf32> to vector<6x8x512xf32>
    %126 = vector.shape_cast %124 : vector<6x512xf32> to vector<6x1x512xf32>
    %127 = vector.shape_cast %105 : vector<8x512xf32> to vector<1x8x512xf32>
    %128 = vector.broadcast %126 : vector<6x1x512xf32> to vector<6x8x512xf32>
    %129 = vector.broadcast %127 : vector<1x8x512xf32> to vector<6x8x512xf32>
    %130 = arith.mulf %128, %129 : vector<6x8x512xf32>
    %131 = arith.subf %125, %130 : vector<6x8x512xf32>
    %132 = vector.extract_strided_slice %95 {offsets = [1, 0], sizes = [6, 512], strides = [1, 1]} : vector<7x512xf32> to vector<6x512xf32>
    %133 = vector.broadcast %112 : vector<1x512xf32> to vector<6x512xf32>
    %134 = arith.mulf %124, %133 : vector<6x512xf32>
    %135 = arith.subf %132, %134 : vector<6x512xf32>
    %136 = vector.extract_strided_slice %99 {offsets = [1, 0], sizes = [6, 512], strides = [1, 1]} : vector<7x512xf32> to vector<6x512xf32>
    %137 = vector.broadcast %113 : vector<1x512xf32> to vector<6x512xf32>
    %138 = arith.mulf %124, %137 : vector<6x512xf32>
    %139 = arith.subf %136, %138 : vector<6x512xf32>
    %140 = vector.extract_strided_slice %103 {offsets = [1, 0], sizes = [6, 512], strides = [1, 1]} : vector<7x512xf32> to vector<6x512xf32>
    %141 = vector.broadcast %114 : vector<1x512xf32> to vector<6x512xf32>
    %142 = arith.mulf %124, %141 : vector<6x512xf32>
    %143 = arith.subf %140, %142 : vector<6x512xf32>
    %144 = vector.extract_strided_slice %131 {offsets = [0, 0, 0], sizes = [1, 8, 512], strides = [1, 1, 1]} : vector<6x8x512xf32> to vector<1x8x512xf32>
    %145 = vector.shape_cast %144 : vector<1x8x512xf32> to vector<8x512xf32>
    %146 = vector.extract_strided_slice %145 {offsets = [2, 0], sizes = [1, 512], strides = [1, 1]} : vector<8x512xf32> to vector<1x512xf32>
    %147 = tpu.reciprocal %146 {approx = true} : vector<1x512xf32> -> vector<1x512xf32>
    %148 = arith.mulf %146, %147 : vector<1x512xf32>
    %cst_25 = arith.constant 2.000000e+00 : f32
    %149 = vector.broadcast %cst_25 : f32 to vector<1x512xf32>
    %150 = arith.subf %149, %148 : vector<1x512xf32>
    %151 = arith.mulf %147, %150 : vector<1x512xf32>
    %152 = vector.extract_strided_slice %135 {offsets = [0, 0], sizes = [1, 512], strides = [1, 1]} : vector<6x512xf32> to vector<1x512xf32>
    %153 = vector.extract_strided_slice %139 {offsets = [0, 0], sizes = [1, 512], strides = [1, 1]} : vector<6x512xf32> to vector<1x512xf32>
    %154 = vector.extract_strided_slice %143 {offsets = [0, 0], sizes = [1, 512], strides = [1, 1]} : vector<6x512xf32> to vector<1x512xf32>
    %155 = arith.mulf %152, %151 : vector<1x512xf32>
    %156 = arith.mulf %152, %155 : vector<1x512xf32>
    %157 = arith.addf %117, %156 : vector<1x512xf32>
    %158 = arith.mulf %153, %155 : vector<1x512xf32>
    %159 = arith.addf %119, %158 : vector<1x512xf32>
    %160 = arith.mulf %154, %155 : vector<1x512xf32>
    %161 = arith.addf %121, %160 : vector<1x512xf32>
    %162 = vector.extract_strided_slice %145 {offsets = [3, 0], sizes = [5, 512], strides = [1, 1]} : vector<8x512xf32> to vector<5x512xf32>
    %163 = vector.broadcast %151 : vector<1x512xf32> to vector<5x512xf32>
    %164 = arith.mulf %162, %163 : vector<5x512xf32>
    %165 = vector.extract_strided_slice %131 {offsets = [1, 0, 0], sizes = [5, 8, 512], strides = [1, 1, 1]} : vector<6x8x512xf32> to vector<5x8x512xf32>
    %166 = vector.shape_cast %164 : vector<5x512xf32> to vector<5x1x512xf32>
    %167 = vector.shape_cast %145 : vector<8x512xf32> to vector<1x8x512xf32>
    %168 = vector.broadcast %166 : vector<5x1x512xf32> to vector<5x8x512xf32>
    %169 = vector.broadcast %167 : vector<1x8x512xf32> to vector<5x8x512xf32>
    %170 = arith.mulf %168, %169 : vector<5x8x512xf32>
    %171 = arith.subf %165, %170 : vector<5x8x512xf32>
    %172 = vector.extract_strided_slice %135 {offsets = [1, 0], sizes = [5, 512], strides = [1, 1]} : vector<6x512xf32> to vector<5x512xf32>
    %173 = vector.broadcast %152 : vector<1x512xf32> to vector<5x512xf32>
    %174 = arith.mulf %164, %173 : vector<5x512xf32>
    %175 = arith.subf %172, %174 : vector<5x512xf32>
    %176 = vector.extract_strided_slice %139 {offsets = [1, 0], sizes = [5, 512], strides = [1, 1]} : vector<6x512xf32> to vector<5x512xf32>
    %177 = vector.broadcast %153 : vector<1x512xf32> to vector<5x512xf32>
    %178 = arith.mulf %164, %177 : vector<5x512xf32>
    %179 = arith.subf %176, %178 : vector<5x512xf32>
    %180 = vector.extract_strided_slice %143 {offsets = [1, 0], sizes = [5, 512], strides = [1, 1]} : vector<6x512xf32> to vector<5x512xf32>
    %181 = vector.broadcast %154 : vector<1x512xf32> to vector<5x512xf32>
    %182 = arith.mulf %164, %181 : vector<5x512xf32>
    %183 = arith.subf %180, %182 : vector<5x512xf32>
    %184 = vector.extract_strided_slice %171 {offsets = [0, 0, 0], sizes = [1, 8, 512], strides = [1, 1, 1]} : vector<5x8x512xf32> to vector<1x8x512xf32>
    %185 = vector.shape_cast %184 : vector<1x8x512xf32> to vector<8x512xf32>
    %186 = vector.extract_strided_slice %185 {offsets = [3, 0], sizes = [1, 512], strides = [1, 1]} : vector<8x512xf32> to vector<1x512xf32>
    %187 = tpu.reciprocal %186 {approx = true} : vector<1x512xf32> -> vector<1x512xf32>
    %188 = arith.mulf %186, %187 : vector<1x512xf32>
    %cst_26 = arith.constant 2.000000e+00 : f32
    %189 = vector.broadcast %cst_26 : f32 to vector<1x512xf32>
    %190 = arith.subf %189, %188 : vector<1x512xf32>
    %191 = arith.mulf %187, %190 : vector<1x512xf32>
    %192 = vector.extract_strided_slice %175 {offsets = [0, 0], sizes = [1, 512], strides = [1, 1]} : vector<5x512xf32> to vector<1x512xf32>
    %193 = vector.extract_strided_slice %179 {offsets = [0, 0], sizes = [1, 512], strides = [1, 1]} : vector<5x512xf32> to vector<1x512xf32>
    %194 = vector.extract_strided_slice %183 {offsets = [0, 0], sizes = [1, 512], strides = [1, 1]} : vector<5x512xf32> to vector<1x512xf32>
    %195 = arith.mulf %192, %191 : vector<1x512xf32>
    %196 = arith.mulf %192, %195 : vector<1x512xf32>
    %197 = arith.addf %157, %196 : vector<1x512xf32>
    %198 = arith.mulf %193, %195 : vector<1x512xf32>
    %199 = arith.addf %159, %198 : vector<1x512xf32>
    %200 = arith.mulf %194, %195 : vector<1x512xf32>
    %201 = arith.addf %161, %200 : vector<1x512xf32>
    %202 = vector.extract_strided_slice %185 {offsets = [4, 0], sizes = [4, 512], strides = [1, 1]} : vector<8x512xf32> to vector<4x512xf32>
    %203 = vector.broadcast %191 : vector<1x512xf32> to vector<4x512xf32>
    %204 = arith.mulf %202, %203 : vector<4x512xf32>
    %205 = vector.extract_strided_slice %171 {offsets = [1, 0, 0], sizes = [4, 8, 512], strides = [1, 1, 1]} : vector<5x8x512xf32> to vector<4x8x512xf32>
    %206 = vector.shape_cast %204 : vector<4x512xf32> to vector<4x1x512xf32>
    %207 = vector.shape_cast %185 : vector<8x512xf32> to vector<1x8x512xf32>
    %208 = vector.broadcast %206 : vector<4x1x512xf32> to vector<4x8x512xf32>
    %209 = vector.broadcast %207 : vector<1x8x512xf32> to vector<4x8x512xf32>
    %210 = arith.mulf %208, %209 : vector<4x8x512xf32>
    %211 = arith.subf %205, %210 : vector<4x8x512xf32>
    %212 = vector.extract_strided_slice %175 {offsets = [1, 0], sizes = [4, 512], strides = [1, 1]} : vector<5x512xf32> to vector<4x512xf32>
    %213 = vector.broadcast %192 : vector<1x512xf32> to vector<4x512xf32>
    %214 = arith.mulf %204, %213 : vector<4x512xf32>
    %215 = arith.subf %212, %214 : vector<4x512xf32>
    %216 = vector.extract_strided_slice %179 {offsets = [1, 0], sizes = [4, 512], strides = [1, 1]} : vector<5x512xf32> to vector<4x512xf32>
    %217 = vector.broadcast %193 : vector<1x512xf32> to vector<4x512xf32>
    %218 = arith.mulf %204, %217 : vector<4x512xf32>
    %219 = arith.subf %216, %218 : vector<4x512xf32>
    %220 = vector.extract_strided_slice %183 {offsets = [1, 0], sizes = [4, 512], strides = [1, 1]} : vector<5x512xf32> to vector<4x512xf32>
    %221 = vector.broadcast %194 : vector<1x512xf32> to vector<4x512xf32>
    %222 = arith.mulf %204, %221 : vector<4x512xf32>
    %223 = arith.subf %220, %222 : vector<4x512xf32>
    %224 = vector.extract_strided_slice %211 {offsets = [0, 0, 0], sizes = [1, 8, 512], strides = [1, 1, 1]} : vector<4x8x512xf32> to vector<1x8x512xf32>
    %225 = vector.shape_cast %224 : vector<1x8x512xf32> to vector<8x512xf32>
    %226 = vector.extract_strided_slice %225 {offsets = [4, 0], sizes = [1, 512], strides = [1, 1]} : vector<8x512xf32> to vector<1x512xf32>
    %227 = tpu.reciprocal %226 {approx = true} : vector<1x512xf32> -> vector<1x512xf32>
    %228 = arith.mulf %226, %227 : vector<1x512xf32>
    %cst_27 = arith.constant 2.000000e+00 : f32
    %229 = vector.broadcast %cst_27 : f32 to vector<1x512xf32>
    %230 = arith.subf %229, %228 : vector<1x512xf32>
    %231 = arith.mulf %227, %230 : vector<1x512xf32>
    %232 = vector.extract_strided_slice %215 {offsets = [0, 0], sizes = [1, 512], strides = [1, 1]} : vector<4x512xf32> to vector<1x512xf32>
    %233 = vector.extract_strided_slice %219 {offsets = [0, 0], sizes = [1, 512], strides = [1, 1]} : vector<4x512xf32> to vector<1x512xf32>
    %234 = vector.extract_strided_slice %223 {offsets = [0, 0], sizes = [1, 512], strides = [1, 1]} : vector<4x512xf32> to vector<1x512xf32>
    %235 = arith.mulf %232, %231 : vector<1x512xf32>
    %236 = arith.mulf %232, %235 : vector<1x512xf32>
    %237 = arith.addf %197, %236 : vector<1x512xf32>
    %238 = arith.mulf %233, %235 : vector<1x512xf32>
    %239 = arith.addf %199, %238 : vector<1x512xf32>
    %240 = arith.mulf %234, %235 : vector<1x512xf32>
    %241 = arith.addf %201, %240 : vector<1x512xf32>
    %242 = vector.extract_strided_slice %225 {offsets = [5, 0], sizes = [3, 512], strides = [1, 1]} : vector<8x512xf32> to vector<3x512xf32>
    %243 = vector.broadcast %231 : vector<1x512xf32> to vector<3x512xf32>
    %244 = arith.mulf %242, %243 : vector<3x512xf32>
    %245 = vector.extract_strided_slice %211 {offsets = [1, 0, 0], sizes = [3, 8, 512], strides = [1, 1, 1]} : vector<4x8x512xf32> to vector<3x8x512xf32>
    %246 = vector.shape_cast %244 : vector<3x512xf32> to vector<3x1x512xf32>
    %247 = vector.shape_cast %225 : vector<8x512xf32> to vector<1x8x512xf32>
    %248 = vector.broadcast %246 : vector<3x1x512xf32> to vector<3x8x512xf32>
    %249 = vector.broadcast %247 : vector<1x8x512xf32> to vector<3x8x512xf32>
    %250 = arith.mulf %248, %249 : vector<3x8x512xf32>
    %251 = arith.subf %245, %250 : vector<3x8x512xf32>
    %252 = vector.extract_strided_slice %215 {offsets = [1, 0], sizes = [3, 512], strides = [1, 1]} : vector<4x512xf32> to vector<3x512xf32>
    %253 = vector.broadcast %232 : vector<1x512xf32> to vector<3x512xf32>
    %254 = arith.mulf %244, %253 : vector<3x512xf32>
    %255 = arith.subf %252, %254 : vector<3x512xf32>
    %256 = vector.extract_strided_slice %219 {offsets = [1, 0], sizes = [3, 512], strides = [1, 1]} : vector<4x512xf32> to vector<3x512xf32>
    %257 = vector.broadcast %233 : vector<1x512xf32> to vector<3x512xf32>
    %258 = arith.mulf %244, %257 : vector<3x512xf32>
    %259 = arith.subf %256, %258 : vector<3x512xf32>
    %260 = vector.extract_strided_slice %223 {offsets = [1, 0], sizes = [3, 512], strides = [1, 1]} : vector<4x512xf32> to vector<3x512xf32>
    %261 = vector.broadcast %234 : vector<1x512xf32> to vector<3x512xf32>
    %262 = arith.mulf %244, %261 : vector<3x512xf32>
    %263 = arith.subf %260, %262 : vector<3x512xf32>
    %264 = vector.extract_strided_slice %251 {offsets = [0, 0, 0], sizes = [1, 8, 512], strides = [1, 1, 1]} : vector<3x8x512xf32> to vector<1x8x512xf32>
    %265 = vector.shape_cast %264 : vector<1x8x512xf32> to vector<8x512xf32>
    %266 = vector.extract_strided_slice %265 {offsets = [5, 0], sizes = [1, 512], strides = [1, 1]} : vector<8x512xf32> to vector<1x512xf32>
    %267 = tpu.reciprocal %266 {approx = true} : vector<1x512xf32> -> vector<1x512xf32>
    %268 = arith.mulf %266, %267 : vector<1x512xf32>
    %cst_28 = arith.constant 2.000000e+00 : f32
    %269 = vector.broadcast %cst_28 : f32 to vector<1x512xf32>
    %270 = arith.subf %269, %268 : vector<1x512xf32>
    %271 = arith.mulf %267, %270 : vector<1x512xf32>
    %272 = vector.extract_strided_slice %255 {offsets = [0, 0], sizes = [1, 512], strides = [1, 1]} : vector<3x512xf32> to vector<1x512xf32>
    %273 = vector.extract_strided_slice %259 {offsets = [0, 0], sizes = [1, 512], strides = [1, 1]} : vector<3x512xf32> to vector<1x512xf32>
    %274 = vector.extract_strided_slice %263 {offsets = [0, 0], sizes = [1, 512], strides = [1, 1]} : vector<3x512xf32> to vector<1x512xf32>
    %275 = arith.mulf %272, %271 : vector<1x512xf32>
    %276 = arith.mulf %272, %275 : vector<1x512xf32>
    %277 = arith.addf %237, %276 : vector<1x512xf32>
    %278 = arith.mulf %273, %275 : vector<1x512xf32>
    %279 = arith.addf %239, %278 : vector<1x512xf32>
    %280 = arith.mulf %274, %275 : vector<1x512xf32>
    %281 = arith.addf %241, %280 : vector<1x512xf32>
    %282 = vector.extract_strided_slice %265 {offsets = [6, 0], sizes = [2, 512], strides = [1, 1]} : vector<8x512xf32> to vector<2x512xf32>
    %283 = vector.broadcast %271 : vector<1x512xf32> to vector<2x512xf32>
    %284 = arith.mulf %282, %283 : vector<2x512xf32>
    %285 = vector.extract_strided_slice %251 {offsets = [1, 0, 0], sizes = [2, 8, 512], strides = [1, 1, 1]} : vector<3x8x512xf32> to vector<2x8x512xf32>
    %286 = vector.shape_cast %284 : vector<2x512xf32> to vector<2x1x512xf32>
    %287 = vector.shape_cast %265 : vector<8x512xf32> to vector<1x8x512xf32>
    %288 = vector.broadcast %286 : vector<2x1x512xf32> to vector<2x8x512xf32>
    %289 = vector.broadcast %287 : vector<1x8x512xf32> to vector<2x8x512xf32>
    %290 = arith.mulf %288, %289 : vector<2x8x512xf32>
    %291 = arith.subf %285, %290 : vector<2x8x512xf32>
    %292 = vector.extract_strided_slice %255 {offsets = [1, 0], sizes = [2, 512], strides = [1, 1]} : vector<3x512xf32> to vector<2x512xf32>
    %293 = vector.broadcast %272 : vector<1x512xf32> to vector<2x512xf32>
    %294 = arith.mulf %284, %293 : vector<2x512xf32>
    %295 = arith.subf %292, %294 : vector<2x512xf32>
    %296 = vector.extract_strided_slice %259 {offsets = [1, 0], sizes = [2, 512], strides = [1, 1]} : vector<3x512xf32> to vector<2x512xf32>
    %297 = vector.broadcast %273 : vector<1x512xf32> to vector<2x512xf32>
    %298 = arith.mulf %284, %297 : vector<2x512xf32>
    %299 = arith.subf %296, %298 : vector<2x512xf32>
    %300 = vector.extract_strided_slice %263 {offsets = [1, 0], sizes = [2, 512], strides = [1, 1]} : vector<3x512xf32> to vector<2x512xf32>
    %301 = vector.broadcast %274 : vector<1x512xf32> to vector<2x512xf32>
    %302 = arith.mulf %284, %301 : vector<2x512xf32>
    %303 = arith.subf %300, %302 : vector<2x512xf32>
    %304 = vector.extract_strided_slice %291 {offsets = [0, 0, 0], sizes = [1, 8, 512], strides = [1, 1, 1]} : vector<2x8x512xf32> to vector<1x8x512xf32>
    %305 = vector.shape_cast %304 : vector<1x8x512xf32> to vector<8x512xf32>
    %306 = vector.extract_strided_slice %305 {offsets = [6, 0], sizes = [1, 512], strides = [1, 1]} : vector<8x512xf32> to vector<1x512xf32>
    %307 = tpu.reciprocal %306 {approx = true} : vector<1x512xf32> -> vector<1x512xf32>
    %308 = arith.mulf %306, %307 : vector<1x512xf32>
    %cst_29 = arith.constant 2.000000e+00 : f32
    %309 = vector.broadcast %cst_29 : f32 to vector<1x512xf32>
    %310 = arith.subf %309, %308 : vector<1x512xf32>
    %311 = arith.mulf %307, %310 : vector<1x512xf32>
    %312 = vector.extract_strided_slice %295 {offsets = [0, 0], sizes = [1, 512], strides = [1, 1]} : vector<2x512xf32> to vector<1x512xf32>
    %313 = vector.extract_strided_slice %299 {offsets = [0, 0], sizes = [1, 512], strides = [1, 1]} : vector<2x512xf32> to vector<1x512xf32>
    %314 = vector.extract_strided_slice %303 {offsets = [0, 0], sizes = [1, 512], strides = [1, 1]} : vector<2x512xf32> to vector<1x512xf32>
    %315 = arith.mulf %312, %311 : vector<1x512xf32>
    %316 = arith.mulf %312, %315 : vector<1x512xf32>
    %317 = arith.addf %277, %316 : vector<1x512xf32>
    %318 = arith.mulf %313, %315 : vector<1x512xf32>
    %319 = arith.addf %279, %318 : vector<1x512xf32>
    %320 = arith.mulf %314, %315 : vector<1x512xf32>
    %321 = arith.addf %281, %320 : vector<1x512xf32>
    %322 = vector.extract_strided_slice %305 {offsets = [7, 0], sizes = [1, 512], strides = [1, 1]} : vector<8x512xf32> to vector<1x512xf32>
    %323 = arith.mulf %322, %311 : vector<1x512xf32>
    %324 = vector.extract_strided_slice %291 {offsets = [1, 0, 0], sizes = [1, 8, 512], strides = [1, 1, 1]} : vector<2x8x512xf32> to vector<1x8x512xf32>
    %325 = vector.shape_cast %323 : vector<1x512xf32> to vector<1x1x512xf32>
    %326 = vector.shape_cast %305 : vector<8x512xf32> to vector<1x8x512xf32>
    %327 = vector.broadcast %325 : vector<1x1x512xf32> to vector<1x8x512xf32>
    %328 = arith.mulf %327, %326 : vector<1x8x512xf32>
    %329 = arith.subf %324, %328 : vector<1x8x512xf32>
    %330 = vector.extract_strided_slice %295 {offsets = [1, 0], sizes = [1, 512], strides = [1, 1]} : vector<2x512xf32> to vector<1x512xf32>
    %331 = arith.mulf %323, %312 : vector<1x512xf32>
    %332 = arith.subf %330, %331 : vector<1x512xf32>
    %333 = vector.extract_strided_slice %299 {offsets = [1, 0], sizes = [1, 512], strides = [1, 1]} : vector<2x512xf32> to vector<1x512xf32>
    %334 = arith.mulf %323, %313 : vector<1x512xf32>
    %335 = arith.subf %333, %334 : vector<1x512xf32>
    %336 = vector.extract_strided_slice %303 {offsets = [1, 0], sizes = [1, 512], strides = [1, 1]} : vector<2x512xf32> to vector<1x512xf32>
    %337 = arith.mulf %323, %314 : vector<1x512xf32>
    %338 = arith.subf %336, %337 : vector<1x512xf32>
    %339 = vector.shape_cast %329 : vector<1x8x512xf32> to vector<8x512xf32>
    %340 = vector.extract_strided_slice %339 {offsets = [7, 0], sizes = [1, 512], strides = [1, 1]} : vector<8x512xf32> to vector<1x512xf32>
    %341 = tpu.reciprocal %340 {approx = true} : vector<1x512xf32> -> vector<1x512xf32>
    %342 = arith.mulf %340, %341 : vector<1x512xf32>
    %cst_30 = arith.constant 2.000000e+00 : f32
    %343 = vector.broadcast %cst_30 : f32 to vector<1x512xf32>
    %344 = arith.subf %343, %342 : vector<1x512xf32>
    %345 = arith.mulf %341, %344 : vector<1x512xf32>
    %346 = arith.mulf %332, %345 : vector<1x512xf32>
    %347 = arith.mulf %332, %346 : vector<1x512xf32>
    %348 = arith.addf %317, %347 : vector<1x512xf32>
    %349 = arith.mulf %335, %346 : vector<1x512xf32>
    %350 = arith.addf %319, %349 : vector<1x512xf32>
    %351 = arith.mulf %338, %346 : vector<1x512xf32>
    %352 = arith.addf %321, %351 : vector<1x512xf32>
    %cst_31 = arith.constant 1.000000e+00 : f32
    %353 = arith.addf %cst_31, %2 : f32
    %354 = arith.mulf %0, %353 : f32
    %355 = vector.broadcast %354 : f32 to vector<1x512xf32>
    %356 = arith.subf %355, %348 : vector<1x512xf32>
    %357 = math.rsqrt %356 : vector<1x512xf32>
    %c0_32 = arith.constant 0 : index
    %c0_33 = arith.constant 0 : index
    %358 = vector.load %arg6[%c0_32, %c0_33] : memref<1x512xf32, #tpu.memory_space<vmem>>, vector<1x512xf32>
    %359 = arith.subf %358, %350 : vector<1x512xf32>
    %360 = arith.mulf %359, %357 : vector<1x512xf32>
    %c0_34 = arith.constant 0 : index
    %c0_35 = arith.constant 0 : index
    %361 = vector.load %arg7[%c0_34, %c0_35] : memref<1x512xf32, #tpu.memory_space<vmem>>, vector<1x512xf32>
    %362 = arith.subf %361, %352 : vector<1x512xf32>
    %363 = arith.mulf %362, %357 : vector<1x512xf32>
    %364 = tpu.concatenate %360, %363 in 0 : vector<1x512xf32>, vector<1x512xf32> -> vector<2x512xf32>
    %c0_36 = arith.constant 0 : index
    %c0_37 = arith.constant 0 : index
    %365 = vector.load %arg8[%c0_36, %c0_37] : memref<2x512xf32, #tpu.memory_space<vmem>>, vector<2x512xf32>
    tpu.vector_store %arg8[%c0_36, %c0_37], %364 {strides = array<i32>} : memref<2x512xf32, #tpu.memory_space<vmem>>, vector<2x512xf32>,
    return
  }
  func.func @transform_0(%arg0: i32) -> i32 {
    %c0_i32 = arith.constant 0 : i32
    %c0_i32_0 = arith.constant 0 : i32
    return %c0_i32 : i32
  }
  func.func @transform_1(%arg0: i32) -> (i32, i32, i32) {
    %c0_i32 = arith.constant 0 : i32
    %c0_i32_0 = arith.constant 0 : i32
    %c0_i32_1 = arith.constant 0 : i32
    return %c0_i32, %c0_i32_0, %arg0 : i32, i32, i32
  }
  func.func @transform_2(%arg0: i32) -> (i32, i32, i32) {
    %c0_i32 = arith.constant 0 : i32
    %c0_i32_0 = arith.constant 0 : i32
    %c0_i32_1 = arith.constant 0 : i32
    return %c0_i32, %c0_i32_0, %arg0 : i32, i32, i32
  }
  func.func @transform_3(%arg0: i32) -> (i32, i32) {
    %c0_i32 = arith.constant 0 : i32
    %c0_i32_0 = arith.constant 0 : i32
    return %c0_i32, %arg0 : i32, i32
  }
  func.func @transform_4(%arg0: i32) -> (i32, i32) {
    %c0_i32 = arith.constant 0 : i32
    %c0_i32_0 = arith.constant 0 : i32
    return %c0_i32, %arg0 : i32, i32
  }
  func.func @transform_5(%arg0: i32) -> (i32, i32) {
    %c0_i32 = arith.constant 0 : i32
    %c0_i32_0 = arith.constant 0 : i32
    return %c0_i32, %arg0 : i32, i32
  }
  func.func @transform_6(%arg0: i32) -> (i32, i32) {
    %c0_i32 = arith.constant 0 : i32
    %c0_i32_0 = arith.constant 0 : i32
    return %c0_i32, %arg0 : i32, i32
  }
  func.func @transform_7(%arg0: i32) -> (i32, i32) {
    %c0_i32 = arith.constant 0 : i32
    %c0_i32_0 = arith.constant 0 : i32
    return %c0_i32, %arg0 : i32, i32
  }
}

</mosaic_0001>

<llo_original>
// kernel: nngls_forward.2
$region0: #{nngls_forward.2}
  #allocation0 [shape = 'u32[]', space=smem, size = 0x4, offset = 0x4, fixed_abs, tag = 'smem constant byte address 0x4 - core index']
  #allocation1 [shape = 'u32[72,128]{1,0:T(1,128)}', space=vmem, size = 0x9000, scoped, tag = 'internal scratch']
  #allocation2 [shape = 'f32[1,1]{1,0:T(1,128)S(1)}', space=vmem, size = 0x200, scoped, tag = 'scoped memory for nngls_forward.2']
  %s0 = inlined_call_operand.hbm [shape: f32[4,2048], index: 0, kind: input, shape index: {}]
  %s1 = inlined_call_operand.vmem [shape: f32[16,4], index: 1, kind: input, shape index: {}]
  %s2 = inlined_call_operand.vmem [shape: f32[16,1], index: 2, kind: input, shape index: {}]
  %s3 = inlined_call_operand.vmem [shape: f32[16,1], index: 3, kind: input, shape index: {}]
  %s4 = inlined_call_operand.<no memory space> [shape: f32[1,1], index: 4, kind: input, shape index: {}]
  %s5 = inlined_call_operand.vmem [shape: f32[1,2048], index: 5, kind: output, shape index: {}]
  %s6 = sld [smem:[#allocation0]]
  $region57: #{nngls_forward.2} parent=0
    _
  %s8 = ssub.s32 1, %s6
  %s9 = scalar_select 0, %s8, %s6
  %v10 = vstv %s4
  %11 = vst [vmem:[#allocation2] sm:$0x1] %v10
  $region1: #{nngls_forward.2} parent=0
    #allocation3 [shape = 'u8[16384]{0}', space=vmem, size = 0x4000, scoped, tag = 'input window, operand 0']
    #allocation4 [shape = 's32[2]{0}', space=sflag, size = 0x8, scoped, tag = 'scoped memory for nngls_forward.2']
    %12 = vsyncpa [#allocation4], 0
    %s13 = scalar_lea.sflag [#allocation4], 1
    %14 = vsyncpa %s13, 0
    loop: start=0, step=1, limit=6
    $region2: #{nngls_forward.2} parent=1 // loop_pre_header
      _
    $region3: #{nngls_forward.2} parent=1 // loop_header
      %s16 = sphi 0, %s20
      %p17 = scmp.ge.s32.totalorder %s16, 6
      %s26 = sphi 0, %s28
      %s29 = sphi 0, %s26
      %s30 = sphi 0, %s29
      %s46 = sphi 0, %s30
      %s50 = sphi 0, %s50
      %s52 = sphi 0, %s50
      %s53 = sphi 0, %s52
      %s67 = sphi 0, %s53
      %s71 = sphi 0, %s71
      %s73 = sphi 0, %s71
      %s74 = sphi 0, %s73
      %s88 = sphi 0, %s74
      %s92 = sphi 0, %s92
      %s94 = sphi 0, %s92
      %s95 = sphi 0, %s94
      %s109 = sphi 0, %s95
      %s113 = sphi 0, %s113
      %s115 = sphi 0, %s113
      %s116 = sphi 0, %s115
      %s130 = sphi 0, %s116
      %s136 = sphi 0, %s138
      %s139 = sphi 0, %s136
      %s140 = sphi 0, %s139
      %s156 = sphi 0, %s140
    $region4: #{nngls_forward.2} parent=1 // loop_header_branch
      %19 = sbr.rel (%p17) target = $region8
    $region5: #{nngls_forward.2} parent=1 // loop_body
      %s21 = ssub.s32 %s16, 1
      %s22 = ssub.s32 %s16, 2
      %s23 = sadd.s32 %s16, 1
      %s24 = ssub.s32 %s16, %s23
      %p25 = scmp.eq.s32.totalorder %s24, 0
      %s27 = sadd.s32 %s26, 1
      %s28 = scalar_select %p25, %s26, %s27
      %p31 = pneg %p25
      %p32 = scmp.eq.s32.totalorder %s16, 3
      %p33 = por %p31, %p32
      %p34 = scmp.ne.s32.totalorder %s26, %s29
      %p35 = scmp.eq.s32.totalorder %s16, 0
      %p36 = por %p34, %p35
      %p37 = scmp.ne.s32.totalorder %s26, %s29
      %p38 = scmp.eq.s32.totalorder %s21, 3
      %p39 = por %p37, %p38
      %p40 = scmp.ne.s32.totalorder %s29, %s30
      %p41 = scmp.eq.s32.totalorder %s21, 0
      %p42 = por %p40, %p41
      %p43 = scmp.ne.s32.totalorder %s29, %s30
      %p44 = scmp.eq.s32.totalorder %s22, 3
      %p45 = por %p43, %p44
      %p47 = scmp.ne.s32.totalorder %s30, %s46
      %p48 = scmp.eq.s32.totalorder %s22, 0
      %p49 = por %p47, %p48
      %s51 = sadd.s32 %s50, 1
      %p54 = scmp.eq.s32.totalorder %s16, 3
      %p55 = scmp.ne.s32.totalorder %s50, %s52
      %p56 = scmp.eq.s32.totalorder %s16, 0
      %p57 = por %p55, %p56
      %p58 = scmp.ne.s32.totalorder %s50, %s52
      %p59 = scmp.eq.s32.totalorder %s21, 3
      %p60 = por %p58, %p59
      %p61 = scmp.ne.s32.totalorder %s52, %s53
      %p62 = scmp.eq.s32.totalorder %s21, 0
      %p63 = por %p61, %p62
      %p64 = scmp.ne.s32.totalorder %s52, %s53
      %p65 = scmp.eq.s32.totalorder %s22, 3
      %p66 = por %p64, %p65
      %p68 = scmp.ne.s32.totalorder %s53, %s67
      %p69 = scmp.eq.s32.totalorder %s22, 0
      %p70 = por %p68, %p69
      %s72 = sadd.s32 %s71, 1
      %p75 = scmp.eq.s32.totalorder %s16, 3
      %p76 = scmp.ne.s32.totalorder %s71, %s73
      %p77 = scmp.eq.s32.totalorder %s16, 0
      %p78 = por %p76, %p77
      %p79 = scmp.ne.s32.totalorder %s71, %s73
      %p80 = scmp.eq.s32.totalorder %s21, 3
      %p81 = por %p79, %p80
      %p82 = scmp.ne.s32.totalorder %s73, %s74
      %p83 = scmp.eq.s32.totalorder %s21, 0
      %p84 = por %p82, %p83
      %p85 = scmp.ne.s32.totalorder %s73, %s74
      %p86 = scmp.eq.s32.totalorder %s22, 3
      %p87 = por %p85, %p86
      %p89 = scmp.ne.s32.totalorder %s74, %s88
      %p90 = scmp.eq.s32.totalorder %s22, 0
      %p91 = por %p89, %p90
      %s93 = sadd.s32 %s92, 1
      %p96 = scmp.eq.s32.totalorder %s16, 3
      %p97 = scmp.ne.s32.totalorder %s92, %s94
      %p98 = scmp.eq.s32.totalorder %s16, 0
      %p99 = por %p97, %p98
      %p100 = scmp.ne.s32.totalorder %s92, %s94
      %p101 = scmp.eq.s32.totalorder %s21, 3
      %p102 = por %p100, %p101
      %p103 = scmp.ne.s32.totalorder %s94, %s95
      %p104 = scmp.eq.s32.totalorder %s21, 0
      %p105 = por %p103, %p104
      %p106 = scmp.ne.s32.totalorder %s94, %s95
      %p107 = scmp.eq.s32.totalorder %s22, 3
      %p108 = por %p106, %p107
      %p110 = scmp.ne.s32.totalorder %s95, %s109
      %p111 = scmp.eq.s32.totalorder %s22, 0
      %p112 = por %p110, %p111
      %s114 = sadd.s32 %s113, 1
      %p117 = scmp.eq.s32.totalorder %s16, 3
      %p118 = scmp.ne.s32.totalorder %s113, %s115
      %p119 = scmp.eq.s32.totalorder %s16, 0
      %p120 = por %p118, %p119
      %p121 = scmp.ne.s32.totalorder %s113, %s115
      %p122 = scmp.eq.s32.totalorder %s21, 3
      %p123 = por %p121, %p122
      %p124 = scmp.ne.s32.totalorder %s115, %s116
      %p125 = scmp.eq.s32.totalorder %s21, 0
      %p126 = por %p124, %p125
      %p127 = scmp.ne.s32.totalorder %s115, %s116
      %p128 = scmp.eq.s32.totalorder %s22, 3
      %p129 = por %p127, %p128
      %p131 = scmp.ne.s32.totalorder %s116, %s130
      %p132 = scmp.eq.s32.totalorder %s22, 0
      %p133 = por %p131, %p132
      %s134 = ssub.s32 %s16, %s23
      %p135 = scmp.eq.s32.totalorder %s134, 0
      %s137 = sadd.s32 %s136, 1
      %s138 = scalar_select %p135, %s136, %s137
      %p141 = pneg %p135
      %p142 = scmp.eq.s32.totalorder %s16, 3
      %p143 = por %p141, %p142
      %p144 = scmp.ne.s32.totalorder %s136, %s139
      %p145 = scmp.eq.s32.totalorder %s16, 0
      %p146 = por %p144, %p145
      %p147 = scmp.ne.s32.totalorder %s136, %s139
      %p148 = scmp.eq.s32.totalorder %s21, 3
      %p149 = por %p147, %p148
      %p150 = scmp.ne.s32.totalorder %s139, %s140
      %p151 = scmp.eq.s32.totalorder %s21, 0
      %p152 = por %p150, %p151
      %p153 = scmp.ne.s32.totalorder %s139, %s140
      %p154 = scmp.eq.s32.totalorder %s22, 3
      %p155 = por %p153, %p154
      %p157 = scmp.ne.s32.totalorder %s140, %s156
      %p158 = scmp.eq.s32.totalorder %s22, 0
      %p159 = por %p157, %p158
      %p160 = scmp.le.s32.totalorder 1, %s16
      %p161 = scmp.lt.s32.totalorder %s16, 5
      %p162 = pnand %p160, %p161
      %p163 = pneg %p162
      // Predicated region
      $region9: #{nngls_forward.2} parent=5 // pred_check
        _
      $region10: #{nngls_forward.2} parent=5 // pred_check_branch
        %165 = sbr.rel (%p162) target = $region12
      $region11: #{nngls_forward.2} parent=5 // pred_region
        %s166 = ssub.s32 %s16, 1
        // Predicated region
        $region13: #{nngls_forward.2} parent=11 // pred_check
          %p167 = pneg %p63
        $region14: #{nngls_forward.2} parent=11 // pred_check_branch
          %169 = sbr.rel (%p167) target = $region16
        $region15: #{nngls_forward.2} parent=11 // pred_region
          _
        $region16: #{nngls_forward.2} parent=11 // pred_fallthru
          _
        // Predicated region
        $region17: #{nngls_forward.2} parent=11 // pred_check
          %p170 = pneg %p84
        $region18: #{nngls_forward.2} parent=11 // pred_check_branch
          %172 = sbr.rel (%p170) target = $region20
        $region19: #{nngls_forward.2} parent=11 // pred_region
          _
        $region20: #{nngls_forward.2} parent=11 // pred_fallthru
          _
        // Predicated region
        $region21: #{nngls_forward.2} parent=11 // pred_check
          %p173 = pneg %p105
        $region22: #{nngls_forward.2} parent=11 // pred_check_branch
          %175 = sbr.rel (%p173) target = $region24
        $region23: #{nngls_forward.2} parent=11 // pred_region
          _
        $region24: #{nngls_forward.2} parent=11 // pred_fallthru
          _
        // Predicated region
        $region25: #{nngls_forward.2} parent=11 // pred_check
          %p176 = pneg %p126
        $region26: #{nngls_forward.2} parent=11 // pred_check_branch
          %178 = sbr.rel (%p176) target = $region28
        $region27: #{nngls_forward.2} parent=11 // pred_region
          _
        $region28: #{nngls_forward.2} parent=11 // pred_fallthru
          _
      $region12: #{nngls_forward.2} parent=5 // pred_fallthru
        _
      %p179 = scmp.lt.s32.totalorder %s16, 4
      // Predicated region
      $region29: #{nngls_forward.2} parent=5 // pred_check
        %p180 = pneg %p179
      $region30: #{nngls_forward.2} parent=5 // pred_check_branch
        %182 = sbr.rel (%p180) target = $region32
      $region31: #{nngls_forward.2} parent=5 // pred_region
        // Predicated region
        $region33: #{nngls_forward.2} parent=31 // pred_check
          %p183 = pneg %p36
        $region34: #{nngls_forward.2} parent=31 // pred_check_branch
          %185 = sbr.rel (%p183) target = $region36
        $region35: #{nngls_forward.2} parent=31 // pred_region
          %s186 = sand.u32 %s26, 1
          %s187 = scalar_lea.sflag [#allocation4], %s186
          %s188 = sand.u32 %s26, 1
          %s189 = smul.addr %s188, 16
          %s190 = scalar_lea.vmem [#allocation3], %s189
          %s191 = smul.u32 4, %s16
          %193 = vsyncadd %s187, 0
          %s194 = smul.addr %s191, 4
          %s195 = scalar_lea.hbm %s0, %s194
          %s197 = sshll.u32 %s195, 4
          %s198 = int_to_ptr.hbm [resolvable:$true] %s197
          %s199 = sshll.u32 %s190, 4
          %s200 = int_to_ptr.vmem [resolvable:$true] %s199
          %202 = dma.hbm_to_vmem [thread:$0]  %s198, 256, %s200, %s187
        $region36: #{nngls_forward.2} parent=31 // pred_fallthru
          _
      $region32: #{nngls_forward.2} parent=5 // pred_fallthru
        _
      %p203 = scmp.le.s32.totalorder 1, %s16
      %p204 = scmp.lt.s32.totalorder %s16, 5
      %p205 = pnand %p203, %p204
      %p206 = pneg %p205
      // Predicated region
      $region37: #{nngls_forward.2} parent=5 // pred_check
        _
      $region38: #{nngls_forward.2} parent=5 // pred_check_branch
        %208 = sbr.rel (%p205) target = $region40
      $region39: #{nngls_forward.2} parent=5 // pred_region
        %s209 = ssub.s32 %s16, 1
        %s210 = sand.u32 %s29, 1
        %s211 = scalar_lea.sflag [#allocation4], %s210
        %s212 = sand.u32 %s29, 1
        %s213 = smul.addr %s212, 16
        %s214 = scalar_lea.vmem [#allocation3], %s213
        // Predicated region
        $region41: #{nngls_forward.2} parent=39 // pred_check
          %p215 = pneg %p42
        $region42: #{nngls_forward.2} parent=39 // pred_check_branch
          %217 = sbr.rel (%p215) target = $region44
        $region43: #{nngls_forward.2} parent=39 // pred_region
          %219 = dma.done %s211, 256
        $region44: #{nngls_forward.2} parent=39 // pred_fallthru
          _
        %s220 = sand.u32 %s29, 1
        %s221 = scalar_lea.sflag [#allocation4], %s220
        %s222 = sand.u32 %s29, 1
        %s223 = smul.addr %s222, 16
        %s224 = scalar_lea.vmem [#allocation3], %s223
        %p225 = pneg %p42
        %p226 = pneg %p39
        %p227 = pneg %p63
        %p228 = pneg %p60
        %p229 = pneg %p84
        %p230 = pneg %p81
        %p231 = pneg %p105
        %p232 = pneg %p102
        %p233 = pneg %p126
        %p234 = pneg %p123
        %p235 = pneg %p152
        %p236 = pneg %p149
        %s237 = smul.u32 4, %s21
        %p238 = scmp.lt.s32.totalorder %s237, 15
        %s239 = scalar_select %p238, %s237, 15
        %s240 = scalar_lea.vmem %s5, %s239
        %s241 = smul.u32 4, %s21
        %s242 = smul.u32 4, %s21
        %p243 = scmp.lt.s32.totalorder %s242, 15
        %s244 = scalar_select %p243, %s242, 15
        %s245 = scalar_lea.vmem %s5, %s244
        %s246 = smul.u32 4, %s21
        %v247 = vld [vmem:[%s1] sm:$0xff]
        %v248 = vld [vmem:[%s1 + $0x8] sm:$0xff]
        %v249 = vld [vmem:[%s214] sm:$0xff]
        %v250 = vld [vmem:[%s214 + $0x8] sm:$0xff]
        %v251 = vld [vmem:[%s2] sm:$0xff]
        %v252 = vld [vmem:[%s2 + $0x8] sm:$0xff]
        %254 = vset.pattern.permute.xlu0 0
        %255 = vperm.xlu0 %254, %v251
        %v256 = vpop.permute.xlu0 %255
        %259 = vset.pattern.permute.xlu0 0
        %260 = vperm.xlu0 %259, %v252
        %v261 = vpop.permute.xlu0 %260
        %265 = vst [vmem:[#allocation1] ss:$2 sm:$0xff] %v249
        %s266 = scalar_lea.vmem [#allocation1], 16
        %267 = vst [vmem:[%s266] ss:$2 sm:$0xff] %v250
        %v268 = vld.sshfl [vmem:[#allocation1] sm:$0xff pattern:$0x75316420]
        %v269 = vld.sshfl [vmem:[#allocation1 + $0x8] sm:$0xff pattern:$0x75316420]
        %v270 = vld.sshfl [vmem:[#allocation1 + $0x10] sm:$0xff pattern:$0x75316420]
        %v271 = vld.sshfl [vmem:[#allocation1 + $0x18] sm:$0xff pattern:$0x75316420]
        %vm272 = vcmask 31744
        %v274 = vsel %vm272, %v247, 0
        %v277 = vsel %vm272, %v248, 0
        %vm279 = vcmask 1043456
        %v280 = vsel %vm279, %v268, 0
        %v282 = vsel %vm279, %v269, 0
        %v284 = vsel %vm279, %v270, 0
        %v286 = vsel %vm279, %v271, 0
        %288 = vmatpush.msra.mxu0 0.0
        %289 = vmatpush.msra.mxu0 0.0
        %290 = vmatpush.msra.mxu0 0.0
        %291 = vmatpush.msra.mxu0 0.0
        %292 = vmatpush.msra.mxu0 0.0
        %293 = vmatpush.msra.mxu0 0.0
        %294 = vmatpush.msra.mxu0 0.0
        %295 = vmatpush.msra.mxu0 0.0
        %296 = vmatpush.msra.mxu0 0.0
        %297 = vmatpush.msra.mxu0 0.0
        %298 = vmatpush.msra.mxu0 0.0
        %299 = vmatpush.msra.mxu0 0.0
        %300 = vmatpush.msra.mxu0 0.0
        %301 = vmatpush.msra.mxu0 0.0
        %302 = vmatpush.msra.mxu0 0.0
        %303 = vmatpush.msra.mxu0 %v280
        %304 = vmatmul.f32.gmra.mxu0 %v274
        %v305 = vpop.f32.mrf.mxu0
        %v306 = vadd.f32 %v256, %v305
        %307 = vmatmul.f32.gmra.mxu0 %v277
        %v308 = vpop.f32.mrf.mxu0
        %v309 = vadd.f32 %v261, %v308
        %310 = vdwg.mxu0
        %311 = vmatpush.msra.mxu0 0.0
        %312 = vmatpush.msra.mxu0 0.0
        %313 = vmatpush.msra.mxu0 0.0
        %314 = vmatpush.msra.mxu0 0.0
        %315 = vmatpush.msra.mxu0 0.0
        %316 = vmatpush.msra.mxu0 0.0
        %317 = vmatpush.msra.mxu0 0.0
        %318 = vmatpush.msra.mxu0 0.0
        %319 = vmatpush.msra.mxu0 0.0
        %320 = vmatpush.msra.mxu0 0.0
        %321 = vmatpush.msra.mxu0 0.0
        %322 = vmatpush.msra.mxu0 0.0
        %323 = vmatpush.msra.mxu0 0.0
        %324 = vmatpush.msra.mxu0 0.0
        %325 = vmatpush.msra.mxu0 0.0
        %326 = vmatpush.msra.mxu0 %v282
        %327 = vmatmul.f32.gmra.mxu0 %v274
        %v328 = vpop.f32.mrf.mxu0
        %v329 = vadd.f32 %v256, %v328
        %330 = vmatmul.f32.gmra.mxu0 %v277
        %v331 = vpop.f32.mrf.mxu0
        %v332 = vadd.f32 %v261, %v331
        %333 = vdwg.mxu0
        %334 = vmatpush.msra.mxu0 0.0
        %335 = vmatpush.msra.mxu0 0.0
        %336 = vmatpush.msra.mxu0 0.0
        %337 = vmatpush.msra.mxu0 0.0
        %338 = vmatpush.msra.mxu0 0.0
        %339 = vmatpush.msra.mxu0 0.0
        %340 = vmatpush.msra.mxu0 0.0
        %341 = vmatpush.msra.mxu0 0.0
        %342 = vmatpush.msra.mxu0 0.0
        %343 = vmatpush.msra.mxu0 0.0
        %344 = vmatpush.msra.mxu0 0.0
        %345 = vmatpush.msra.mxu0 0.0
        %346 = vmatpush.msra.mxu0 0.0
        %347 = vmatpush.msra.mxu0 0.0
        %348 = vmatpush.msra.mxu0 0.0
        %349 = vmatpush.msra.mxu0 %v284
        %350 = vmatmul.f32.gmra.mxu0 %v274
        %v351 = vpop.f32.mrf.mxu0
        %v352 = vadd.f32 %v256, %v351
        %353 = vmatmul.f32.gmra.mxu0 %v277
        %v354 = vpop.f32.mrf.mxu0
        %v355 = vadd.f32 %v261, %v354
        %356 = vdwg.mxu0
        %357 = vmatpush.msra.mxu0 0.0
        %358 = vmatpush.msra.mxu0 0.0
        %359 = vmatpush.msra.mxu0 0.0
        %360 = vmatpush.msra.mxu0 0.0
        %361 = vmatpush.msra.mxu0 0.0
        %362 = vmatpush.msra.mxu0 0.0
        %363 = vmatpush.msra.mxu0 0.0
        %364 = vmatpush.msra.mxu0 0.0
        %365 = vmatpush.msra.mxu0 0.0
        %366 = vmatpush.msra.mxu0 0.0
        %367 = vmatpush.msra.mxu0 0.0
        %368 = vmatpush.msra.mxu0 0.0
        %369 = vmatpush.msra.mxu0 0.0
        %370 = vmatpush.msra.mxu0 0.0
        %371 = vmatpush.msra.mxu0 0.0
        %372 = vmatpush.msra.mxu0 %v286
        %373 = vmatmul.f32.gmra.mxu0 %v274
        %v374 = vpop.f32.mrf.mxu0
        %v375 = vadd.f32 %v256, %v374
        %376 = vmatmul.f32.gmra.mxu0 %v277
        %v377 = vpop.f32.mrf.mxu0
        %v378 = vadd.f32 %v261, %v377
        %379 = vdwg.mxu0
        %v380 = vmax.f32 %v306, 0.0
        %v381 = vmax.f32 %v329, 0.0
        %v382 = vmax.f32 %v352, 0.0
        %v383 = vmax.f32 %v375, 0.0
        %v384 = vmax.f32 %v309, 0.0
        %v385 = vmax.f32 %v332, 0.0
        %v386 = vmax.f32 %v355, 0.0
        %v387 = vmax.f32 %v378, 0.0
        %v388 = vld [vmem:[%s3] sm:$0xff]
        %v389 = vld [vmem:[%s3 + $0x8] sm:$0xff]
        %391 = vset.pattern.permute.xlu0 0
        %392 = vperm.xlu0 %391, %v388
        %v393 = vpop.permute.xlu0 %392
        %396 = vset.pattern.permute.xlu0 0
        %397 = vperm.xlu0 %396, %v389
        %v398 = vpop.permute.xlu0 %397
        %v400 = vmul.f32 %v380, %v393
        %v401 = vmul.f32 %v381, %v393
        %v402 = vmul.f32 %v382, %v393
        %v403 = vmul.f32 %v383, %v393
        %v404 = vmul.f32 %v384, %v398
        %v405 = vmul.f32 %v385, %v398
        %v406 = vmul.f32 %v386, %v398
        %v407 = vmul.f32 %v387, %v398
        %v408 = vadd.f32 %v400, %v404
        %v409 = vrot.slane %v408, 4
        %v410 = vadd.f32 %v408, %v409
        %v411 = vrot.slane %v410, 2
        %v412 = vadd.f32 %v410, %v411
        %v413 = vrot.slane %v412, 1
        %v414 = vadd.f32 %v412, %v413
        %v415 = vadd.f32 %v401, %v405
        %v416 = vrot.slane %v415, 4
        %v417 = vadd.f32 %v415, %v416
        %v418 = vrot.slane %v417, 2
        %v419 = vadd.f32 %v417, %v418
        %v420 = vrot.slane %v419, 1
        %v421 = vadd.f32 %v419, %v420
        %v422 = vadd.f32 %v402, %v406
        %v423 = vrot.slane %v422, 4
        %v424 = vadd.f32 %v422, %v423
        %v425 = vrot.slane %v424, 2
        %v426 = vadd.f32 %v424, %v425
        %v427 = vrot.slane %v426, 1
        %v428 = vadd.f32 %v426, %v427
        %v429 = vadd.f32 %v403, %v407
        %v430 = vrot.slane %v429, 4
        %v431 = vadd.f32 %v429, %v430
        %v432 = vrot.slane %v431, 2
        %v433 = vadd.f32 %v431, %v432
        %v434 = vrot.slane %v433, 1
        %v435 = vadd.f32 %v433, %v434
        %v436 = vld [vmem:[#allocation2] sm:$0x1]
        %438 = vset.pattern.permute.xlu0 0
        %439 = vperm.xlu0 %438, %v436
        %v440 = vpop.permute.xlu0 %439
        %v442 = vperm.slane %v440, 0
        %v443 = vadd.f32 %v414, %v442
        %v444 = vadd.f32 %v421, %v442
        %v445 = vadd.f32 %v428, %v442
        %v446 = vadd.f32 %v435, %v442
        %v451 = vrot.slane %v444, 7
        %v452 = vrot.slane %v445, 6
        %v453 = vrot.slane %v446, 5
        %vm454 = vcmask 1040384
        %v455 = vsel %vm454, %v443, %v451
        %vm456 = vcmask 1042434
        %v457 = vsel %vm456, %v452, %v453
        %vm458 = vcmask 1041408
        %v459 = vsel %vm458, %v455, %v457
        %v461 = vlaneseq
        %vm462 = vcmp.ge.s32.totalorder %v461, 0
        %vm463 = vcmp.lt.s32.totalorder %v461, 512
        %vm464 = vmand %vm462, %vm463
        %465 = vst.msk [vmem:[%s245] sm:$0xf] %vm464, %v459
        %s466 = smul.u32 4, %s21
        %p467 = scmp.lt.s32.totalorder %s466, 15
        %s468 = scalar_select %p467, %s466, 15
        %s469 = scalar_lea.vmem %s5, %s468
        // Predicated region
        $region45: #{nngls_forward.2} parent=39 // pred_check
          %p470 = pneg %p149
        $region46: #{nngls_forward.2} parent=39 // pred_check_branch
          %472 = sbr.rel (%p470) target = $region48
        $region47: #{nngls_forward.2} parent=39 // pred_region
          %s473 = smul.u32 4, %s21
        $region48: #{nngls_forward.2} parent=39 // pred_fallthru
          _
      $region40: #{nngls_forward.2} parent=5 // pred_fallthru
        _
      %p474 = scmp.le.s32.totalorder 2, %s16
      // Predicated region
      $region49: #{nngls_forward.2} parent=5 // pred_check
        %p475 = pneg %p474
      $region50: #{nngls_forward.2} parent=5 // pred_check_branch
        %477 = sbr.rel (%p475) target = $region52
      $region51: #{nngls_forward.2} parent=5 // pred_region
        %s478 = ssub.s32 %s16, 2
        // Predicated region
        $region53: #{nngls_forward.2} parent=51 // pred_check
          %p479 = pneg %p155
        $region54: #{nngls_forward.2} parent=51 // pred_check_branch
          %481 = sbr.rel (%p479) target = $region56
        $region55: #{nngls_forward.2} parent=51 // pred_region
          %s482 = smul.u32 4, %s22
          %p483 = scmp.lt.s32.totalorder %s482, 15
          %s484 = scalar_select %p483, %s482, 15
          %s485 = scalar_lea.vmem %s5, %s484
        $region56: #{nngls_forward.2} parent=51 // pred_fallthru
          _
      $region52: #{nngls_forward.2} parent=5 // pred_fallthru
        _
    $region6: #{nngls_forward.2} parent=1 // loop_footer
      %s20 = sadd.s32 1, %s16
    $region7: #{nngls_forward.2} parent=1 // loop_footer_branch
      %15 = sbr.rel target = $region3
    $region8: #{nngls_forward.2} parent=1 // loop_exit
      _
    %486 = vsyncpa [#allocation4], 1
    %s487 = scalar_lea.sflag [#allocation4], 1
    %488 = vsyncpa %s487, 1

// kernel: nngls_forward.3
$region0: #{nngls_forward.3}
  #allocation0 [shape = 'u32[]', space=smem, size = 0x4, offset = 0x4, fixed_abs, tag = 'smem constant byte address 0x4 - core index']
  #allocation1 [shape = 'u32[72,128]{1,0:T(1,128)}', space=vmem, size = 0x9000, scoped, tag = 'internal scratch']
  %s0 = inlined_call_operand.vmem [shape: f32[3], index: 0, kind: input, shape index: {}]
  %s1 = inlined_call_operand.vmem [shape: f32[2,8,2048], index: 1, kind: input, shape index: {}]
  %s2 = inlined_call_operand.vmem [shape: f32[2,1,2048], index: 2, kind: input, shape index: {}]
  %s3 = inlined_call_operand.vmem [shape: f32[8,2048], index: 3, kind: input, shape index: {}]
  %s4 = inlined_call_operand.vmem [shape: f32[8,2048], index: 4, kind: input, shape index: {}]
  %s5 = inlined_call_operand.vmem [shape: f32[1,2048], index: 5, kind: input, shape index: {}]
  %s6 = inlined_call_operand.vmem [shape: f32[1,2048], index: 6, kind: input, shape index: {}]
  %s7 = inlined_call_operand.vmem [shape: f32[2,2048], index: 7, kind: output, shape index: {}]
  %s8 = sld [smem:[#allocation0]]
  $region129: #{nngls_forward.3} parent=0
    _
  %s10 = ssub.s32 1, %s8
  %s11 = scalar_select 0, %s10, %s8
  $region1: #{nngls_forward.3} parent=0
    #allocation2 [shape = 'u8[512]{0}', space=smem, size = 0x200, scoped, tag = 'input window, operand 0, single buffered']
    #allocation3 [shape = 's32[2]{0}', space=sflag, size = 0x8, scoped, tag = 'scoped memory for nngls_forward.3']
    #allocation4 [shape = 'u8[65536]{0}', space=vmem, size = 0x10000, scoped, tag = 'input window, operand 1']
    #allocation5 [shape = 'u8[8192]{0}', space=vmem, size = 0x2000, scoped, tag = 'input window, operand 2']
    %12 = vsyncpa [#allocation3], 0
    loop: start=0, step=1, limit=6
    $region2: #{nngls_forward.3} parent=1 // loop_pre_header
      _
    $region3: #{nngls_forward.3} parent=1 // loop_header
      %s14 = sphi 0, %s18
      %p15 = scmp.ge.s32.totalorder %s14, 6
      %s22 = sphi 0, %s22
      %s24 = sphi 0, %s22
      %s25 = sphi 0, %s24
      %s39 = sphi 0, %s25
      %s45 = sphi 0, %s47
      %s48 = sphi 0, %s45
      %s49 = sphi 0, %s48
      %s65 = sphi 0, %s49
      %s71 = sphi 0, %s73
      %s74 = sphi 0, %s71
      %s75 = sphi 0, %s74
      %s91 = sphi 0, %s75
      %s97 = sphi 0, %s99
      %s100 = sphi 0, %s97
      %s101 = sphi 0, %s100
      %s117 = sphi 0, %s101
      %s123 = sphi 0, %s125
      %s126 = sphi 0, %s123
      %s127 = sphi 0, %s126
      %s143 = sphi 0, %s127
      %s149 = sphi 0, %s151
      %s152 = sphi 0, %s149
      %s153 = sphi 0, %s152
      %s169 = sphi 0, %s153
      %s175 = sphi 0, %s177
      %s178 = sphi 0, %s175
      %s179 = sphi 0, %s178
      %s195 = sphi 0, %s179
      %s201 = sphi 0, %s203
      %s204 = sphi 0, %s201
      %s205 = sphi 0, %s204
      %s221 = sphi 0, %s205
    $region4: #{nngls_forward.3} parent=1 // loop_header_branch
      %17 = sbr.rel (%p15) target = $region8
    $region5: #{nngls_forward.3} parent=1 // loop_body
      %s19 = ssub.s32 %s14, 1
      %s20 = ssub.s32 %s14, 2
      %s21 = sadd.s32 %s14, 1
      %s23 = sadd.s32 %s22, 1
      %p26 = scmp.eq.s32.totalorder %s14, 3
      %p27 = scmp.ne.s32.totalorder %s22, %s24
      %p28 = scmp.eq.s32.totalorder %s14, 0
      %p29 = por %p27, %p28
      %p30 = scmp.ne.s32.totalorder %s22, %s24
      %p31 = scmp.eq.s32.totalorder %s19, 3
      %p32 = por %p30, %p31
      %p33 = scmp.ne.s32.totalorder %s24, %s25
      %p34 = scmp.eq.s32.totalorder %s19, 0
      %p35 = por %p33, %p34
      %p36 = scmp.ne.s32.totalorder %s24, %s25
      %p37 = scmp.eq.s32.totalorder %s20, 3
      %p38 = por %p36, %p37
      %p40 = scmp.ne.s32.totalorder %s25, %s39
      %p41 = scmp.eq.s32.totalorder %s20, 0
      %p42 = por %p40, %p41
      %s43 = ssub.s32 %s14, %s21
      %p44 = scmp.eq.s32.totalorder %s43, 0
      %s46 = sadd.s32 %s45, 1
      %s47 = scalar_select %p44, %s45, %s46
      %p50 = pneg %p44
      %p51 = scmp.eq.s32.totalorder %s14, 3
      %p52 = por %p50, %p51
      %p53 = scmp.ne.s32.totalorder %s45, %s48
      %p54 = scmp.eq.s32.totalorder %s14, 0
      %p55 = por %p53, %p54
      %p56 = scmp.ne.s32.totalorder %s45, %s48
      %p57 = scmp.eq.s32.totalorder %s19, 3
      %p58 = por %p56, %p57
      %p59 = scmp.ne.s32.totalorder %s48, %s49
      %p60 = scmp.eq.s32.totalorder %s19, 0
      %p61 = por %p59, %p60
      %p62 = scmp.ne.s32.totalorder %s48, %s49
      %p63 = scmp.eq.s32.totalorder %s20, 3
      %p64 = por %p62, %p63
      %p66 = scmp.ne.s32.totalorder %s49, %s65
      %p67 = scmp.eq.s32.totalorder %s20, 0
      %p68 = por %p66, %p67
      %s69 = ssub.s32 %s14, %s21
      %p70 = scmp.eq.s32.totalorder %s69, 0
      %s72 = sadd.s32 %s71, 1
      %s73 = scalar_select %p70, %s71, %s72
      %p76 = pneg %p70
      %p77 = scmp.eq.s32.totalorder %s14, 3
      %p78 = por %p76, %p77
      %p79 = scmp.ne.s32.totalorder %s71, %s74
      %p80 = scmp.eq.s32.totalorder %s14, 0
      %p81 = por %p79, %p80
      %p82 = scmp.ne.s32.totalorder %s71, %s74
      %p83 = scmp.eq.s32.totalorder %s19, 3
      %p84 = por %p82, %p83
      %p85 = scmp.ne.s32.totalorder %s74, %s75
      %p86 = scmp.eq.s32.totalorder %s19, 0
      %p87 = por %p85, %p86
      %p88 = scmp.ne.s32.totalorder %s74, %s75
      %p89 = scmp.eq.s32.totalorder %s20, 3
      %p90 = por %p88, %p89
      %p92 = scmp.ne.s32.totalorder %s75, %s91
      %p93 = scmp.eq.s32.totalorder %s20, 0
      %p94 = por %p92, %p93
      %s95 = ssub.s32 %s14, %s21
      %p96 = scmp.eq.s32.totalorder %s95, 0
      %s98 = sadd.s32 %s97, 1
      %s99 = scalar_select %p96, %s97, %s98
      %p102 = pneg %p96
      %p103 = scmp.eq.s32.totalorder %s14, 3
      %p104 = por %p102, %p103
      %p105 = scmp.ne.s32.totalorder %s97, %s100
      %p106 = scmp.eq.s32.totalorder %s14, 0
      %p107 = por %p105, %p106
      %p108 = scmp.ne.s32.totalorder %s97, %s100
      %p109 = scmp.eq.s32.totalorder %s19, 3
      %p110 = por %p108, %p109
      %p111 = scmp.ne.s32.totalorder %s100, %s101
      %p112 = scmp.eq.s32.totalorder %s19, 0
      %p113 = por %p111, %p112
      %p114 = scmp.ne.s32.totalorder %s100, %s101
      %p115 = scmp.eq.s32.totalorder %s20, 3
      %p116 = por %p114, %p115
      %p118 = scmp.ne.s32.totalorder %s101, %s117
      %p119 = scmp.eq.s32.totalorder %s20, 0
      %p120 = por %p118, %p119
      %s121 = ssub.s32 %s14, %s21
      %p122 = scmp.eq.s32.totalorder %s121, 0
      %s124 = sadd.s32 %s123, 1
      %s125 = scalar_select %p122, %s123, %s124
      %p128 = pneg %p122
      %p129 = scmp.eq.s32.totalorder %s14, 3
      %p130 = por %p128, %p129
      %p131 = scmp.ne.s32.totalorder %s123, %s126
      %p132 = scmp.eq.s32.totalorder %s14, 0
      %p133 = por %p131, %p132
      %p134 = scmp.ne.s32.totalorder %s123, %s126
      %p135 = scmp.eq.s32.totalorder %s19, 3
      %p136 = por %p134, %p135
      %p137 = scmp.ne.s32.totalorder %s126, %s127
      %p138 = scmp.eq.s32.totalorder %s19, 0
      %p139 = por %p137, %p138
      %p140 = scmp.ne.s32.totalorder %s126, %s127
      %p141 = scmp.eq.s32.totalorder %s20, 3
      %p142 = por %p140, %p141
      %p144 = scmp.ne.s32.totalorder %s127, %s143
      %p145 = scmp.eq.s32.totalorder %s20, 0
      %p146 = por %p144, %p145
      %s147 = ssub.s32 %s14, %s21
      %p148 = scmp.eq.s32.totalorder %s147, 0
      %s150 = sadd.s32 %s149, 1
      %s151 = scalar_select %p148, %s149, %s150
      %p154 = pneg %p148
      %p155 = scmp.eq.s32.totalorder %s14, 3
      %p156 = por %p154, %p155
      %p157 = scmp.ne.s32.totalorder %s149, %s152
      %p158 = scmp.eq.s32.totalorder %s14, 0
      %p159 = por %p157, %p158
      %p160 = scmp.ne.s32.totalorder %s149, %s152
      %p161 = scmp.eq.s32.totalorder %s19, 3
      %p162 = por %p160, %p161
      %p163 = scmp.ne.s32.totalorder %s152, %s153
      %p164 = scmp.eq.s32.totalorder %s19, 0
      %p165 = por %p163, %p164
      %p166 = scmp.ne.s32.totalorder %s152, %s153
      %p167 = scmp.eq.s32.totalorder %s20, 3
      %p168 = por %p166, %p167
      %p170 = scmp.ne.s32.totalorder %s153, %s169
      %p171 = scmp.eq.s32.totalorder %s20, 0
      %p172 = por %p170, %p171
      %s173 = ssub.s32 %s14, %s21
      %p174 = scmp.eq.s32.totalorder %s173, 0
      %s176 = sadd.s32 %s175, 1
      %s177 = scalar_select %p174, %s175, %s176
      %p180 = pneg %p174
      %p181 = scmp.eq.s32.totalorder %s14, 3
      %p182 = por %p180, %p181
      %p183 = scmp.ne.s32.totalorder %s175, %s178
      %p184 = scmp.eq.s32.totalorder %s14, 0
      %p185 = por %p183, %p184
      %p186 = scmp.ne.s32.totalorder %s175, %s178
      %p187 = scmp.eq.s32.totalorder %s19, 3
      %p188 = por %p186, %p187
      %p189 = scmp.ne.s32.totalorder %s178, %s179
      %p190 = scmp.eq.s32.totalorder %s19, 0
      %p191 = por %p189, %p190
      %p192 = scmp.ne.s32.totalorder %s178, %s179
      %p193 = scmp.eq.s32.totalorder %s20, 3
      %p194 = por %p192, %p193
      %p196 = scmp.ne.s32.totalorder %s179, %s195
      %p197 = scmp.eq.s32.totalorder %s20, 0
      %p198 = por %p196, %p197
      %s199 = ssub.s32 %s14, %s21
      %p200 = scmp.eq.s32.totalorder %s199, 0
      %s202 = sadd.s32 %s201, 1
      %s203 = scalar_select %p200, %s201, %s202
      %p206 = pneg %p200
      %p207 = scmp.eq.s32.totalorder %s14, 3
      %p208 = por %p206, %p207
      %p209 = scmp.ne.s32.totalorder %s201, %s204
      %p210 = scmp.eq.s32.totalorder %s14, 0
      %p211 = por %p209, %p210
      %p212 = scmp.ne.s32.totalorder %s201, %s204
      %p213 = scmp.eq.s32.totalorder %s19, 3
      %p214 = por %p212, %p213
      %p215 = scmp.ne.s32.totalorder %s204, %s205
      %p216 = scmp.eq.s32.totalorder %s19, 0
      %p217 = por %p215, %p216
      %p218 = scmp.ne.s32.totalorder %s204, %s205
      %p219 = scmp.eq.s32.totalorder %s20, 3
      %p220 = por %p218, %p219
      %p222 = scmp.ne.s32.totalorder %s205, %s221
      %p223 = scmp.eq.s32.totalorder %s20, 0
      %p224 = por %p222, %p223
      %p225 = scmp.le.s32.totalorder 1, %s14
      %p226 = scmp.lt.s32.totalorder %s14, 5
      %p227 = pnand %p225, %p226
      %p228 = pneg %p227
      // Predicated region
      $region9: #{nngls_forward.3} parent=5 // pred_check
        _
      $region10: #{nngls_forward.3} parent=5 // pred_check_branch
        %230 = sbr.rel (%p227) target = $region12
      $region11: #{nngls_forward.3} parent=5 // pred_region
        %s231 = ssub.s32 %s14, 1
        // Predicated region
        $region13: #{nngls_forward.3} parent=11 // pred_check
          %p232 = pneg %p35
        $region14: #{nngls_forward.3} parent=11 // pred_check_branch
          %234 = sbr.rel (%p232) target = $region16
        $region15: #{nngls_forward.3} parent=11 // pred_region
          %236 = vsyncadd [#allocation3], 0
          %s238 = sshll.u32 %s0, 4
          %s239 = int_to_ptr.vmem [resolvable:$true] %s238
          %241 = dma.vmem_to_smem %s239, 16, [#allocation2], [#allocation3]
        $region16: #{nngls_forward.3} parent=11 // pred_fallthru
          _
      $region12: #{nngls_forward.3} parent=5 // pred_fallthru
        _
      %p242 = scmp.lt.s32.totalorder %s14, 4
      // Predicated region
      $region17: #{nngls_forward.3} parent=5 // pred_check
        %p243 = pneg %p242
      $region18: #{nngls_forward.3} parent=5 // pred_check_branch
        %245 = sbr.rel (%p243) target = $region20
      $region19: #{nngls_forward.3} parent=5 // pred_region
        // Predicated region
        $region21: #{nngls_forward.3} parent=19 // pred_check
          %p246 = pneg %p55
        $region22: #{nngls_forward.3} parent=19 // pred_check_branch
          %248 = sbr.rel (%p246) target = $region24
        $region23: #{nngls_forward.3} parent=19 // pred_region
          %s249 = sand.u32 %s45, 1
          %s250 = sand.u32 %s45, 1
          %s251 = smul.addr %s250, 64
          %s252 = scalar_lea.vmem [#allocation4], %s251
          %s253 = smul.u32 4, %s14
          %s254 = smul.addr %s253, 8
          %s255 = scalar_lea.vmem %s1, %s254
          // Predicated region
          $region25: #{nngls_forward.3} parent=23 // pred_check
            _
          $region26: #{nngls_forward.3} parent=23 // pred_check_branch
            %257 = sbr.rel (0) target = $region28
          $region27: #{nngls_forward.3} parent=23 // pred_region
            // Predicated region
            $region29: #{nngls_forward.3} parent=27 // pred_check
              _
            $region30: #{nngls_forward.3} parent=27 // pred_check_branch
              %259 = sbr.rel (0) target = $region32
            $region31: #{nngls_forward.3} parent=27 // pred_region
              loop: start=0, step=1, limit=1
              $region33: #{nngls_forward.3} parent=31 // loop_pre_header
                _
              $region34: #{nngls_forward.3} parent=31 // loop_header
                %s261 = sphi 0, %s265
                %p262 = scmp.ge.s32.totalorder %s261, 1
                %s266 = sphi %s255, %s255
                %s267 = sphi %s252, %s252
              $region35: #{nngls_forward.3} parent=31 // loop_header_branch
                %264 = sbr.rel (%p262) target = $region39
              $region36: #{nngls_forward.3} parent=31 // loop_body
                %v268 = vld [vmem:[%s266] sm:$0xff]
                %269 = vst [vmem:[%s267] sm:$0xff] %v268
                %v270 = vld [vmem:[%s266 + $0x8] sm:$0xff]
                %271 = vst [vmem:[%s267 + $0x8] sm:$0xff] %v270
                %v272 = vld [vmem:[%s266 + $0x10] sm:$0xff]
                %273 = vst [vmem:[%s267 + $0x10] sm:$0xff] %v272
                %v274 = vld [vmem:[%s266 + $0x18] sm:$0xff]
                %275 = vst [vmem:[%s267 + $0x18] sm:$0xff] %v274
                %v276 = vld [vmem:[%s266 + $0x80] sm:$0xff]
                %277 = vst [vmem:[%s267 + $0x20] sm:$0xff] %v276
                %v278 = vld [vmem:[%s266 + $0x88] sm:$0xff]
                %279 = vst [vmem:[%s267 + $0x28] sm:$0xff] %v278
                %v280 = vld [vmem:[%s266 + $0x90] sm:$0xff]
                %281 = vst [vmem:[%s267 + $0x30] sm:$0xff] %v280
                %v282 = vld [vmem:[%s266 + $0x98] sm:$0xff]
                %283 = vst [vmem:[%s267 + $0x38] sm:$0xff] %v282
              $region37: #{nngls_forward.3} parent=31 // loop_footer
                %s265 = sadd.s32 1, %s261
              $region38: #{nngls_forward.3} parent=31 // loop_footer_branch
                %260 = sbr.rel target = $region34
              $region39: #{nngls_forward.3} parent=31 // loop_exit
                _
            $region32: #{nngls_forward.3} parent=27 // pred_fallthru
              _
            // Predicated region
            $region40: #{nngls_forward.3} parent=27 // pred_check
              _
            $region41: #{nngls_forward.3} parent=27 // pred_check_branch
              %285 = sbr.rel target = $region43
            $region42: #{nngls_forward.3} parent=27 // pred_region
              _
            $region43: #{nngls_forward.3} parent=27 // pred_fallthru
              _
          $region28: #{nngls_forward.3} parent=23 // pred_fallthru
            _
          %286 = vnop
        $region24: #{nngls_forward.3} parent=19 // pred_fallthru
          _
        // Predicated region
        $region44: #{nngls_forward.3} parent=19 // pred_check
          %p287 = pneg %p81
        $region45: #{nngls_forward.3} parent=19 // pred_check_branch
          %289 = sbr.rel (%p287) target = $region47
        $region46: #{nngls_forward.3} parent=19 // pred_region
          %s290 = sand.u32 %s71, 1
          %s291 = sand.u32 %s71, 1
          %s292 = smul.addr %s291, 8
          %s293 = scalar_lea.vmem [#allocation5], %s292
          %s294 = smul.u32 4, %s14
          %s295 = scalar_lea.vmem %s2, %s294
          // Predicated region
          $region48: #{nngls_forward.3} parent=46 // pred_check
            _
          $region49: #{nngls_forward.3} parent=46 // pred_check_branch
            %297 = sbr.rel (0) target = $region51
          $region50: #{nngls_forward.3} parent=46 // pred_region
            // Predicated region
            $region52: #{nngls_forward.3} parent=50 // pred_check
              _
            $region53: #{nngls_forward.3} parent=50 // pred_check_branch
              %299 = sbr.rel target = $region55
            $region54: #{nngls_forward.3} parent=50 // pred_region
              // Predicated region
              $region67: #{nngls_forward.3} parent=54 // pred_check
                _
              $region68: #{nngls_forward.3} parent=54 // pred_check_branch
                %317 = sbr.rel (0) target = $region70
              $region69: #{nngls_forward.3} parent=54 // pred_region
                loop: start=0, step=1, limit=1
                $region71: #{nngls_forward.3} parent=69 // loop_pre_header
                  _
                $region72: #{nngls_forward.3} parent=69 // loop_header
                  %s319 = sphi 0, %s323
                  %p320 = scmp.ge.s32.totalorder %s319, 1
                  %s324 = sphi %s295, %s295
                  %s325 = sphi %s293, %s293
                $region73: #{nngls_forward.3} parent=69 // loop_header_branch
                  %322 = sbr.rel (%p320) target = $region77
                $region74: #{nngls_forward.3} parent=69 // loop_body
                  _
                $region75: #{nngls_forward.3} parent=69 // loop_footer
                  %s323 = sadd.s32 1, %s319
                $region76: #{nngls_forward.3} parent=69 // loop_footer_branch
                  %318 = sbr.rel target = $region72
                $region77: #{nngls_forward.3} parent=69 // loop_exit
                  _
                %s327 = ssub.s32 16, 1
                loop: start=0, step=1, limit=1
                $region78: #{nngls_forward.3} parent=69 // loop_pre_header
                  _
                $region79: #{nngls_forward.3} parent=69 // loop_header
                  %s329 = sphi 0, %s333
                  %p330 = scmp.ge.s32.totalorder %s329, 1
                  %s334 = sphi %s295, %s295
                  %s335 = sphi %s293, %s293
                $region80: #{nngls_forward.3} parent=69 // loop_header_branch
                  %332 = sbr.rel (%p330) target = $region84
                $region81: #{nngls_forward.3} parent=69 // loop_body
                  %v336 = vld [vmem:[%s334] sm:%s327]
                  %337 = vst [vmem:[%s335] sm:%s327] %v336
                  %v338 = vld [vmem:[%s334 + $0x10] sm:%s327]
                  %339 = vst [vmem:[%s335 + $0x4] sm:%s327] %v338
                $region82: #{nngls_forward.3} parent=69 // loop_footer
                  %s333 = sadd.s32 1, %s329
                $region83: #{nngls_forward.3} parent=69 // loop_footer_branch
                  %328 = sbr.rel target = $region79
                $region84: #{nngls_forward.3} parent=69 // loop_exit
                  _
              $region70: #{nngls_forward.3} parent=54 // pred_fallthru
                _
            $region55: #{nngls_forward.3} parent=50 // pred_fallthru
              _
            // Predicated region
            $region56: #{nngls_forward.3} parent=50 // pred_check
              _
            $region57: #{nngls_forward.3} parent=50 // pred_check_branch
              %301 = sbr.rel (0) target = $region59
            $region58: #{nngls_forward.3} parent=50 // pred_region
              %s303 = ssub.s32 16, 1
              loop: start=0, step=1, limit=1
              $region60: #{nngls_forward.3} parent=58 // loop_pre_header
                _
              $region61: #{nngls_forward.3} parent=58 // loop_header
                %s305 = sphi 0, %s309
                %p306 = scmp.ge.s32.totalorder %s305, 1
                %s310 = sphi %s295, %s295
                %s311 = sphi %s293, %s293
              $region62: #{nngls_forward.3} parent=58 // loop_header_branch
                %308 = sbr.rel (%p306) target = $region66
              $region63: #{nngls_forward.3} parent=58 // loop_body
                %v312 = vld [vmem:[%s310] sm:%s303]
                %313 = vst [vmem:[%s311] sm:%s303] %v312
                %v314 = vld [vmem:[%s310 + $0x10] sm:%s303]
                %315 = vst [vmem:[%s311 + $0x4] sm:%s303] %v314
              $region64: #{nngls_forward.3} parent=58 // loop_footer
                %s309 = sadd.s32 1, %s305
              $region65: #{nngls_forward.3} parent=58 // loop_footer_branch
                %304 = sbr.rel target = $region61
              $region66: #{nngls_forward.3} parent=58 // loop_exit
                _
            $region59: #{nngls_forward.3} parent=50 // pred_fallthru
              _
          $region51: #{nngls_forward.3} parent=46 // pred_fallthru
            _
          %340 = vnop
        $region47: #{nngls_forward.3} parent=19 // pred_fallthru
          _
        // Predicated region
        $region85: #{nngls_forward.3} parent=19 // pred_check
          %p341 = pneg %p107
        $region86: #{nngls_forward.3} parent=19 // pred_check_branch
          %343 = sbr.rel (%p341) target = $region88
        $region87: #{nngls_forward.3} parent=19 // pred_region
          %s344 = smul.u32 4, %s14
          %p345 = scmp.lt.s32.totalorder %s344, 15
          %s346 = scalar_select %p345, %s344, 15
          %s347 = smul.addr %s346, 8
          %s348 = scalar_lea.vmem %s3, %s347
          %s349 = smul.u32 4, %s14
        $region88: #{nngls_forward.3} parent=19 // pred_fallthru
          _
        // Predicated region
        $region89: #{nngls_forward.3} parent=19 // pred_check
          %p350 = pneg %p133
        $region90: #{nngls_forward.3} parent=19 // pred_check_branch
          %352 = sbr.rel (%p350) target = $region92
        $region91: #{nngls_forward.3} parent=19 // pred_region
          %s353 = smul.u32 4, %s14
          %p354 = scmp.lt.s32.totalorder %s353, 15
          %s355 = scalar_select %p354, %s353, 15
          %s356 = smul.addr %s355, 8
          %s357 = scalar_lea.vmem %s4, %s356
          %s358 = smul.u32 4, %s14
        $region92: #{nngls_forward.3} parent=19 // pred_fallthru
          _
        // Predicated region
        $region93: #{nngls_forward.3} parent=19 // pred_check
          %p359 = pneg %p159
        $region94: #{nngls_forward.3} parent=19 // pred_check_branch
          %361 = sbr.rel (%p359) target = $region96
        $region95: #{nngls_forward.3} parent=19 // pred_region
          %s362 = smul.u32 4, %s14
          %p363 = scmp.lt.s32.totalorder %s362, 15
          %s364 = scalar_select %p363, %s362, 15
          %s365 = scalar_lea.vmem %s5, %s364
          %s366 = smul.u32 4, %s14
        $region96: #{nngls_forward.3} parent=19 // pred_fallthru
          _
        // Predicated region
        $region97: #{nngls_forward.3} parent=19 // pred_check
          %p367 = pneg %p185
        $region98: #{nngls_forward.3} parent=19 // pred_check_branch
          %369 = sbr.rel (%p367) target = $region100
        $region99: #{nngls_forward.3} parent=19 // pred_region
          %s370 = smul.u32 4, %s14
          %p371 = scmp.lt.s32.totalorder %s370, 15
          %s372 = scalar_select %p371, %s370, 15
          %s373 = scalar_lea.vmem %s6, %s372
          %s374 = smul.u32 4, %s14
        $region100: #{nngls_forward.3} parent=19 // pred_fallthru
          _
      $region20: #{nngls_forward.3} parent=5 // pred_fallthru
        _
      %p375 = scmp.le.s32.totalorder 1, %s14
      %p376 = scmp.lt.s32.totalorder %s14, 5
      %p377 = pnand %p375, %p376
      %p378 = pneg %p377
      // Predicated region
      $region101: #{nngls_forward.3} parent=5 // pred_check
        _
      $region102: #{nngls_forward.3} parent=5 // pred_check_branch
        %380 = sbr.rel (%p377) target = $region104
      $region103: #{nngls_forward.3} parent=5 // pred_region
        %s381 = ssub.s32 %s14, 1
        // Predicated region
        $region105: #{nngls_forward.3} parent=103 // pred_check
          %p382 = pneg %p35
        $region106: #{nngls_forward.3} parent=103 // pred_check_branch
          %384 = sbr.rel (%p382) target = $region108
        $region107: #{nngls_forward.3} parent=103 // pred_region
          %386 = dma.done [#allocation3], 16
        $region108: #{nngls_forward.3} parent=103 // pred_fallthru
          _
        %s387 = sand.u32 %s48, 1
        %s388 = sand.u32 %s48, 1
        %s389 = smul.addr %s388, 64
        %s390 = scalar_lea.vmem [#allocation4], %s389
        // Predicated region
        $region109: #{nngls_forward.3} parent=103 // pred_check
          %p391 = pneg %p61
        $region110: #{nngls_forward.3} parent=103 // pred_check_branch
          %393 = sbr.rel (%p391) target = $region112
        $region111: #{nngls_forward.3} parent=103 // pred_region
          _
        $region112: #{nngls_forward.3} parent=103 // pred_fallthru
          _
        %s394 = sand.u32 %s74, 1
        %s395 = sand.u32 %s74, 1
        %s396 = smul.addr %s395, 8
        %s397 = scalar_lea.vmem [#allocation5], %s396
        // Predicated region
        $region113: #{nngls_forward.3} parent=103 // pred_check
          %p398 = pneg %p87
        $region114: #{nngls_forward.3} parent=103 // pred_check_branch
          %400 = sbr.rel (%p398) target = $region116
        $region115: #{nngls_forward.3} parent=103 // pred_region
          _
        $region116: #{nngls_forward.3} parent=103 // pred_fallthru
          _
        %401 = sfence
        %p402 = pneg %p35
        %p403 = pneg %p32
        %s404 = sand.u32 %s48, 1
        %s405 = sand.u32 %s48, 1
        %s406 = smul.addr %s405, 64
        %s407 = scalar_lea.vmem [#allocation4], %s406
        %p408 = pneg %p61
        %p409 = pneg %p58
        %s410 = sand.u32 %s74, 1
        %s411 = sand.u32 %s74, 1
        %s412 = smul.addr %s411, 8
        %s413 = scalar_lea.vmem [#allocation5], %s412
        %p414 = pneg %p87
        %p415 = pneg %p84
        %s416 = smul.u32 4, %s19
        %p417 = scmp.lt.s32.totalorder %s416, 15
        %s418 = scalar_select %p417, %s416, 15
        %s419 = smul.addr %s418, 8
        %s420 = scalar_lea.vmem %s3, %s419
        %p421 = pneg %p113
        %p422 = pneg %p110
        %s423 = smul.u32 4, %s19
        %p424 = scmp.lt.s32.totalorder %s423, 15
        %s425 = scalar_select %p424, %s423, 15
        %s426 = smul.addr %s425, 8
        %s427 = scalar_lea.vmem %s4, %s426
        %p428 = pneg %p139
        %p429 = pneg %p136
        %s430 = smul.u32 4, %s19
        %p431 = scmp.lt.s32.totalorder %s430, 15
        %s432 = scalar_select %p431, %s430, 15
        %s433 = scalar_lea.vmem %s5, %s432
        %p434 = pneg %p165
        %p435 = pneg %p162
        %s436 = smul.u32 4, %s19
        %p437 = scmp.lt.s32.totalorder %s436, 15
        %s438 = scalar_select %p437, %s436, 15
        %s439 = scalar_lea.vmem %s6, %s438
        %p440 = pneg %p191
        %p441 = pneg %p188
        %p442 = pneg %p217
        %p443 = pneg %p214
        %s444 = smul.u32 4, %s19
        %p445 = scmp.lt.s32.totalorder %s444, 15
        %s446 = scalar_select %p445, %s444, 15
        %s447 = smul.addr %s446, 2
        %s448 = scalar_lea.vmem %s7, %s447
        %s449 = smul.u32 4, %s19
        %s450 = smul.u32 4, %s19
        %s451 = smul.u32 4, %s19
        %p452 = scmp.lt.s32.totalorder %s451, 15
        %s453 = scalar_select %p452, %s451, 15
        %s454 = smul.addr %s453, 8
        %s455 = scalar_lea.vmem %s3, %s454
        %s456 = smul.u32 4, %s19
        %s457 = smul.u32 4, %s19
        %p458 = scmp.lt.s32.totalorder %s457, 15
        %s459 = scalar_select %p458, %s457, 15
        %s460 = smul.addr %s459, 8
        %s461 = scalar_lea.vmem %s4, %s460
        %s462 = smul.u32 4, %s19
        %s463 = smul.u32 4, %s19
        %p464 = scmp.lt.s32.totalorder %s463, 15
        %s465 = scalar_select %p464, %s463, 15
        %s466 = scalar_lea.vmem %s5, %s465
        %s467 = smul.u32 4, %s19
        %s468 = smul.u32 4, %s19
        %p469 = scmp.lt.s32.totalorder %s468, 15
        %s470 = scalar_select %p469, %s468, 15
        %s471 = scalar_lea.vmem %s6, %s470
        %s472 = smul.u32 4, %s19
        %s473 = smul.u32 4, %s19
        %p474 = scmp.lt.s32.totalorder %s473, 15
        %s475 = scalar_select %p474, %s473, 15
        %s476 = smul.addr %s475, 2
        %s477 = scalar_lea.vmem %s7, %s476
        %s478 = smul.u32 4, %s19
        %s479 = sld [smem:[#allocation2]]
        %s480 = sld [smem:[#allocation2 + $0x1]]
        %s481 = sld [smem:[#allocation2 + $0x2]]
        %v482 = vld [vmem:[%s390] sm:$0xff]
        %v483 = vld [vmem:[%s390 + $0x8] sm:$0xff]
        %v484 = vld [vmem:[%s390 + $0x10] sm:$0xff]
        %v485 = vld [vmem:[%s390 + $0x18] sm:$0xff]
        %v486 = vld [vmem:[%s397] sm:$0xf]
        %v488 = vperm.slane %v486, 0
        %v489 = vperm.slane %v486, 1
        %v490 = vperm.slane %v486, 2
        %v491 = vperm.slane %v486, 3
        %v496 = vsub.f32 %v482, %v488
        %v497 = vsub.f32 %v483, %v489
        %v498 = vsub.f32 %v484, %v490
        %v499 = vsub.f32 %v485, %v491
        %v500 = vmul.f32 %v496, %v496
        %v501 = vmul.f32 %v497, %v497
        %v502 = vmul.f32 %v498, %v498
        %v503 = vmul.f32 %v499, %v499
        %v504 = vadd.f32 %v500, 0.0
        %v505 = vadd.f32 %v501, 0.0
        %v506 = vadd.f32 %v502, 0.0
        %v507 = vadd.f32 %v503, 0.0
        %v512 = vrot.slane %v483, 7
        %v513 = vrot.slane %v484, 6
        %v514 = vrot.slane %v485, 5
        %vm515 = vcmask 1040384
        %v516 = vsel %vm515, %v482, %v512
        %vm517 = vcmask 1042434
        %v518 = vsel %vm517, %v513, %v514
        %vm519 = vcmask 1041408
        %v520 = vsel %vm519, %v516, %v518
        %vm521 = vcmask 1041409
        %v522 = vsel %vm521, %v482, %v512
        %vm523 = vcmask 1043459
        %v524 = vsel %vm523, %v513, %v514
        %vm525 = vcmask 1042433
        %v526 = vsel %vm525, %v522, %v524
        %v527 = vrot.slane %v526, 1
        %v528 = vsel %vm517, %v482, %v512
        %vm529 = vcmask 1044484
        %v530 = vsel %vm529, %v513, %v514
        %vm531 = vcmask 1043458
        %v532 = vsel %vm531, %v528, %v530
        %v533 = vrot.slane %v532, 2
        %v534 = vsel %vm523, %v482, %v512
        %vm535 = vcmask 1045509
        %v536 = vsel %vm535, %v513, %v514
        %vm537 = vcmask 1044483
        %v538 = vsel %vm537, %v534, %v536
        %v539 = vrot.slane %v538, 3
        %v540 = vsel %vm529, %v482, %v512
        %vm541 = vcmask 1046534
        %v542 = vsel %vm541, %v513, %v514
        %vm543 = vcmask 1045508
        %v544 = vsel %vm543, %v540, %v542
        %v545 = vrot.slane %v544, 4
        %v546 = vsel %vm535, %v482, %v512
        %vm547 = vcmask 1046528
        %v548 = vsel %vm547, %v514, %v513
        %vm549 = vcmask 1046533
        %v550 = vsel %vm549, %v546, %v548
        %v551 = vrot.slane %v550, 5
        %v552 = vsel %vm541, %v482, %v512
        %v553 = vsel %vm515, %v513, %v514
        %vm554 = vcmask 1045504
        %v555 = vsel %vm554, %v553, %v552
        %v556 = vrot.slane %v555, 6
        %v557 = vsel %vm547, %v512, %v482
        %v558 = vsel %vm521, %v513, %v514
        %vm559 = vcmask 1046529
        %v560 = vsel %vm559, %v558, %v557
        %v561 = vrot.slane %v560, 7
        %v562 = vperm.slane %v520, 0
        %v563 = vperm.slane %v520, 1
        %v564 = vperm.slane %v520, 2
        %v565 = vperm.slane %v520, 3
        %v566 = vperm.slane %v527, 0
        %v567 = vperm.slane %v527, 1
        %v568 = vperm.slane %v527, 2
        %v569 = vperm.slane %v527, 3
        %v570 = vperm.slane %v533, 0
        %v571 = vperm.slane %v533, 1
        %v572 = vperm.slane %v533, 2
        %v573 = vperm.slane %v533, 3
        %v574 = vperm.slane %v539, 0
        %v575 = vperm.slane %v539, 1
        %v576 = vperm.slane %v539, 2
        %v577 = vperm.slane %v539, 3
        %v578 = vperm.slane %v545, 0
        %v579 = vperm.slane %v545, 1
        %v580 = vperm.slane %v545, 2
        %v581 = vperm.slane %v545, 3
        %v582 = vperm.slane %v551, 0
        %v583 = vperm.slane %v551, 1
        %v584 = vperm.slane %v551, 2
        %v585 = vperm.slane %v551, 3
        %v586 = vperm.slane %v556, 0
        %v587 = vperm.slane %v556, 1
        %v588 = vperm.slane %v556, 2
        %v589 = vperm.slane %v556, 3
        %v590 = vperm.slane %v561, 0
        %v591 = vperm.slane %v561, 1
        %v592 = vperm.slane %v561, 2
        %v593 = vperm.slane %v561, 3
        %v626 = vsub.f32 %v562, %v482
        %v627 = vsub.f32 %v563, %v483
        %v628 = vsub.f32 %v564, %v484
        %v629 = vsub.f32 %v565, %v485
        %v630 = vsub.f32 %v566, %v482
        %v631 = vsub.f32 %v567, %v483
        %v632 = vsub.f32 %v568, %v484
        %v633 = vsub.f32 %v569, %v485
        %v634 = vsub.f32 %v570, %v482
        %v635 = vsub.f32 %v571, %v483
        %v636 = vsub.f32 %v572, %v484
        %v637 = vsub.f32 %v573, %v485
        %v638 = vsub.f32 %v574, %v482
        %v639 = vsub.f32 %v575, %v483
        %v640 = vsub.f32 %v576, %v484
        %v641 = vsub.f32 %v577, %v485
        %v642 = vsub.f32 %v578, %v482
        %v643 = vsub.f32 %v579, %v483
        %v644 = vsub.f32 %v580, %v484
        %v645 = vsub.f32 %v581, %v485
        %v646 = vsub.f32 %v582, %v482
        %v647 = vsub.f32 %v583, %v483
        %v648 = vsub.f32 %v584, %v484
        %v649 = vsub.f32 %v585, %v485
        %v650 = vsub.f32 %v586, %v482
        %v651 = vsub.f32 %v587, %v483
        %v652 = vsub.f32 %v588, %v484
        %v653 = vsub.f32 %v589, %v485
        %v654 = vsub.f32 %v590, %v482
        %v655 = vsub.f32 %v591, %v483
        %v656 = vsub.f32 %v592, %v484
        %v657 = vsub.f32 %v593, %v485
        %v658 = vmul.f32 %v626, %v626
        %v659 = vmul.f32 %v627, %v627
        %v660 = vmul.f32 %v628, %v628
        %v661 = vmul.f32 %v629, %v629
        %v662 = vmul.f32 %v630, %v630
        %v663 = vmul.f32 %v631, %v631
        %v664 = vmul.f32 %v632, %v632
        %v665 = vmul.f32 %v633, %v633
        %v666 = vmul.f32 %v634, %v634
        %v667 = vmul.f32 %v635, %v635
        %v668 = vmul.f32 %v636, %v636
        %v669 = vmul.f32 %v637, %v637
        %v670 = vmul.f32 %v638, %v638
        %v671 = vmul.f32 %v639, %v639
        %v672 = vmul.f32 %v640, %v640
        %v673 = vmul.f32 %v641, %v641
        %v674 = vmul.f32 %v642, %v642
        %v675 = vmul.f32 %v643, %v643
        %v676 = vmul.f32 %v644, %v644
        %v677 = vmul.f32 %v645, %v645
        %v678 = vmul.f32 %v646, %v646
        %v679 = vmul.f32 %v647, %v647
        %v680 = vmul.f32 %v648, %v648
        %v681 = vmul.f32 %v649, %v649
        %v682 = vmul.f32 %v650, %v650
        %v683 = vmul.f32 %v651, %v651
        %v684 = vmul.f32 %v652, %v652
        %v685 = vmul.f32 %v653, %v653
        %v686 = vmul.f32 %v654, %v654
        %v687 = vmul.f32 %v655, %v655
        %v688 = vmul.f32 %v656, %v656
        %v689 = vmul.f32 %v657, %v657
        %v690 = vadd.f32 %v658, 0.0
        %v691 = vadd.f32 %v659, 0.0
        %v692 = vadd.f32 %v660, 0.0
        %v693 = vadd.f32 %v661, 0.0
        %v694 = vadd.f32 %v662, 0.0
        %v695 = vadd.f32 %v663, 0.0
        %v696 = vadd.f32 %v664, 0.0
        %v697 = vadd.f32 %v665, 0.0
        %v698 = vadd.f32 %v666, 0.0
        %v699 = vadd.f32 %v667, 0.0
        %v700 = vadd.f32 %v668, 0.0
        %v701 = vadd.f32 %v669, 0.0
        %v702 = vadd.f32 %v670, 0.0
        %v703 = vadd.f32 %v671, 0.0
        %v704 = vadd.f32 %v672, 0.0
        %v705 = vadd.f32 %v673, 0.0
        %v706 = vadd.f32 %v674, 0.0
        %v707 = vadd.f32 %v675, 0.0
        %v708 = vadd.f32 %v676, 0.0
        %v709 = vadd.f32 %v677, 0.0
        %v710 = vadd.f32 %v678, 0.0
        %v711 = vadd.f32 %v679, 0.0
        %v712 = vadd.f32 %v680, 0.0
        %v713 = vadd.f32 %v681, 0.0
        %v714 = vadd.f32 %v682, 0.0
        %v715 = vadd.f32 %v683, 0.0
        %v716 = vadd.f32 %v684, 0.0
        %v717 = vadd.f32 %v685, 0.0
        %v718 = vadd.f32 %v686, 0.0
        %v719 = vadd.f32 %v687, 0.0
        %v720 = vadd.f32 %v688, 0.0
        %v721 = vadd.f32 %v689, 0.0
        %s722 = scalar_lea.vmem %s390, 32 [#allocation4]
        %v723 = vld [vmem:[%s722] sm:$0xff]
        %v724 = vld [vmem:[%s722 + $0x8] sm:$0xff]
        %v725 = vld [vmem:[%s722 + $0x10] sm:$0xff]
        %v726 = vld [vmem:[%s722 + $0x18] sm:$0xff]
        %s727 = scalar_lea.vmem %s397, 4 [#allocation5]
        %v728 = vld [vmem:[%s727] sm:$0xf]
        %v730 = vperm.slane %v728, 0
        %v731 = vperm.slane %v728, 1
        %v732 = vperm.slane %v728, 2
        %v733 = vperm.slane %v728, 3
        %v738 = vsub.f32 %v723, %v730
        %v739 = vsub.f32 %v724, %v731
        %v740 = vsub.f32 %v725, %v732
        %v741 = vsub.f32 %v726, %v733
        %v742 = vmul.f32 %v738, %v738
        %v743 = vmul.f32 %v739, %v739
        %v744 = vmul.f32 %v740, %v740
        %v745 = vmul.f32 %v741, %v741
        %v746 = vadd.f32 %v504, %v742
        %v747 = vadd.f32 %v505, %v743
        %v748 = vadd.f32 %v506, %v744
        %v749 = vadd.f32 %v507, %v745
        %v754 = vrot.slane %v724, 7
        %v755 = vrot.slane %v725, 6
        %v756 = vrot.slane %v726, 5
        %v757 = vsel %vm515, %v723, %v754
        %v758 = vsel %vm517, %v755, %v756
        %v759 = vsel %vm519, %v757, %v758
        %v760 = vsel %vm521, %v723, %v754
        %v761 = vsel %vm523, %v755, %v756
        %v762 = vsel %vm525, %v760, %v761
        %v763 = vrot.slane %v762, 1
        %v764 = vsel %vm517, %v723, %v754
        %v765 = vsel %vm529, %v755, %v756
        %v766 = vsel %vm531, %v764, %v765
        %v767 = vrot.slane %v766, 2
        %v768 = vsel %vm523, %v723, %v754
        %v769 = vsel %vm535, %v755, %v756
        %v770 = vsel %vm537, %v768, %v769
        %v771 = vrot.slane %v770, 3
        %v772 = vsel %vm529, %v723, %v754
        %v773 = vsel %vm541, %v755, %v756
        %v774 = vsel %vm543, %v772, %v773
        %v775 = vrot.slane %v774, 4
        %v776 = vsel %vm535, %v723, %v754
        %v777 = vsel %vm547, %v756, %v755
        %v778 = vsel %vm549, %v776, %v777
        %v779 = vrot.slane %v778, 5
        %v780 = vsel %vm541, %v723, %v754
        %v781 = vsel %vm515, %v755, %v756
        %v782 = vsel %vm554, %v781, %v780
        %v783 = vrot.slane %v782, 6
        %v784 = vsel %vm547, %v754, %v723
        %v785 = vsel %vm521, %v755, %v756
        %v786 = vsel %vm559, %v785, %v784
        %v787 = vrot.slane %v786, 7
        %v788 = vperm.slane %v759, 0
        %v789 = vperm.slane %v759, 1
        %v790 = vperm.slane %v759, 2
        %v791 = vperm.slane %v759, 3
        %v792 = vperm.slane %v763, 0
        %v793 = vperm.slane %v763, 1
        %v794 = vperm.slane %v763, 2
        %v795 = vperm.slane %v763, 3
        %v796 = vperm.slane %v767, 0
        %v797 = vperm.slane %v767, 1
        %v798 = vperm.slane %v767, 2
        %v799 = vperm.slane %v767, 3
        %v800 = vperm.slane %v771, 0
        %v801 = vperm.slane %v771, 1
        %v802 = vperm.slane %v771, 2
        %v803 = vperm.slane %v771, 3
        %v804 = vperm.slane %v775, 0
        %v805 = vperm.slane %v775, 1
        %v806 = vperm.slane %v775, 2
        %v807 = vperm.slane %v775, 3
        %v808 = vperm.slane %v779, 0
        %v809 = vperm.slane %v779, 1
        %v810 = vperm.slane %v779, 2
        %v811 = vperm.slane %v779, 3
        %v812 = vperm.slane %v783, 0
        %v813 = vperm.slane %v783, 1
        %v814 = vperm.slane %v783, 2
        %v815 = vperm.slane %v783, 3
        %v816 = vperm.slane %v787, 0
        %v817 = vperm.slane %v787, 1
        %v818 = vperm.slane %v787, 2
        %v819 = vperm.slane %v787, 3
        %v852 = vsub.f32 %v788, %v723
        %v853 = vsub.f32 %v789, %v724
        %v854 = vsub.f32 %v790, %v725
        %v855 = vsub.f32 %v791, %v726
        %v856 = vsub.f32 %v792, %v723
        %v857 = vsub.f32 %v793, %v724
        %v858 = vsub.f32 %v794, %v725
        %v859 = vsub.f32 %v795, %v726
        %v860 = vsub.f32 %v796, %v723
        %v861 = vsub.f32 %v797, %v724
        %v862 = vsub.f32 %v798, %v725
        %v863 = vsub.f32 %v799, %v726
        %v864 = vsub.f32 %v800, %v723
        %v865 = vsub.f32 %v801, %v724
        %v866 = vsub.f32 %v802, %v725
        %v867 = vsub.f32 %v803, %v726
        %v868 = vsub.f32 %v804, %v723
        %v869 = vsub.f32 %v805, %v724
        %v870 = vsub.f32 %v806, %v725
        %v871 = vsub.f32 %v807, %v726
        %v872 = vsub.f32 %v808, %v723
        %v873 = vsub.f32 %v809, %v724
        %v874 = vsub.f32 %v810, %v725
        %v875 = vsub.f32 %v811, %v726
        %v876 = vsub.f32 %v812, %v723
        %v877 = vsub.f32 %v813, %v724
        %v878 = vsub.f32 %v814, %v725
        %v879 = vsub.f32 %v815, %v726
        %v880 = vsub.f32 %v816, %v723
        %v881 = vsub.f32 %v817, %v724
        %v882 = vsub.f32 %v818, %v725
        %v883 = vsub.f32 %v819, %v726
        %v884 = vmul.f32 %v852, %v852
        %v885 = vmul.f32 %v853, %v853
        %v886 = vmul.f32 %v854, %v854
        %v887 = vmul.f32 %v855, %v855
        %v888 = vmul.f32 %v856, %v856
        %v889 = vmul.f32 %v857, %v857
        %v890 = vmul.f32 %v858, %v858
        %v891 = vmul.f32 %v859, %v859
        %v892 = vmul.f32 %v860, %v860
        %v893 = vmul.f32 %v861, %v861
        %v894 = vmul.f32 %v862, %v862
        %v895 = vmul.f32 %v863, %v863
        %v896 = vmul.f32 %v864, %v864
        %v897 = vmul.f32 %v865, %v865
        %v898 = vmul.f32 %v866, %v866
        %v899 = vmul.f32 %v867, %v867
        %v900 = vmul.f32 %v868, %v868
        %v901 = vmul.f32 %v869, %v869
        %v902 = vmul.f32 %v870, %v870
        %v903 = vmul.f32 %v871, %v871
        %v904 = vmul.f32 %v872, %v872
        %v905 = vmul.f32 %v873, %v873
        %v906 = vmul.f32 %v874, %v874
        %v907 = vmul.f32 %v875, %v875
        %v908 = vmul.f32 %v876, %v876
        %v909 = vmul.f32 %v877, %v877
        %v910 = vmul.f32 %v878, %v878
        %v911 = vmul.f32 %v879, %v879
        %v912 = vmul.f32 %v880, %v880
        %v913 = vmul.f32 %v881, %v881
        %v914 = vmul.f32 %v882, %v882
        %v915 = vmul.f32 %v883, %v883
        %v916 = vadd.f32 %v690, %v884
        %v917 = vadd.f32 %v691, %v885
        %v918 = vadd.f32 %v692, %v886
        %v919 = vadd.f32 %v693, %v887
        %v920 = vadd.f32 %v694, %v888
        %v921 = vadd.f32 %v695, %v889
        %v922 = vadd.f32 %v696, %v890
        %v923 = vadd.f32 %v697, %v891
        %v924 = vadd.f32 %v698, %v892
        %v925 = vadd.f32 %v699, %v893
        %v926 = vadd.f32 %v700, %v894
        %v927 = vadd.f32 %v701, %v895
        %v928 = vadd.f32 %v702, %v896
        %v929 = vadd.f32 %v703, %v897
        %v930 = vadd.f32 %v704, %v898
        %v931 = vadd.f32 %v705, %v899
        %v932 = vadd.f32 %v706, %v900
        %v933 = vadd.f32 %v707, %v901
        %v934 = vadd.f32 %v708, %v902
        %v935 = vadd.f32 %v709, %v903
        %v936 = vadd.f32 %v710, %v904
        %v937 = vadd.f32 %v711, %v905
        %v938 = vadd.f32 %v712, %v906
        %v939 = vadd.f32 %v713, %v907
        %v940 = vadd.f32 %v714, %v908
        %v941 = vadd.f32 %v715, %v909
        %v942 = vadd.f32 %v716, %v910
        %v943 = vadd.f32 %v717, %v911
        %v944 = vadd.f32 %v718, %v912
        %v945 = vadd.f32 %v719, %v913
        %v946 = vadd.f32 %v720, %v914
        %v947 = vadd.f32 %v721, %v915
        %s948 = ssub.f32 0.0, %s480
        %v949 = vrsqrt.pop %v746
        %v950 = vmul.f32 %v949, %v746
        %v951 = vmul.f32 %v950, %v949
        %v952 = vmul.f32 0.5, %v951
        %v953 = vsub.f32 1.5, %v952
        %v954 = vmul.f32 %v949, %v953
        %v955 = vmul.f32 %v746, %v954
        %vm956 = vcmp.eq.f32.partialorder %v746, inf
        %v957 = vsel %vm956, %v746, %v955
        %vm958 = vcmp.eq.f32.partialorder %v746, 0.0
        %v959 = vand.u32 %v746, 2147483648
        %v960 = vsel %vm958, %v959, %v957
        %v961 = vrsqrt.pop %v747
        %v962 = vmul.f32 %v961, %v747
        %v963 = vmul.f32 %v962, %v961
        %v964 = vmul.f32 0.5, %v963
        %v965 = vsub.f32 1.5, %v964
        %v966 = vmul.f32 %v961, %v965
        %v967 = vmul.f32 %v747, %v966
        %vm968 = vcmp.eq.f32.partialorder %v747, inf
        %v969 = vsel %vm968, %v747, %v967
        %vm970 = vcmp.eq.f32.partialorder %v747, 0.0
        %v971 = vand.u32 %v747, 2147483648
        %v972 = vsel %vm970, %v971, %v969
        %v973 = vrsqrt.pop %v748
        %v974 = vmul.f32 %v973, %v748
        %v975 = vmul.f32 %v974, %v973
        %v976 = vmul.f32 0.5, %v975
        %v977 = vsub.f32 1.5, %v976
        %v978 = vmul.f32 %v973, %v977
        %v979 = vmul.f32 %v748, %v978
        %vm980 = vcmp.eq.f32.partialorder %v748, inf
        %v981 = vsel %vm980, %v748, %v979
        %vm982 = vcmp.eq.f32.partialorder %v748, 0.0
        %v983 = vand.u32 %v748, 2147483648
        %v984 = vsel %vm982, %v983, %v981
        %v985 = vrsqrt.pop %v749
        %v986 = vmul.f32 %v985, %v749
        %v987 = vmul.f32 %v986, %v985
        %v988 = vmul.f32 0.5, %v987
        %v989 = vsub.f32 1.5, %v988
        %v990 = vmul.f32 %v985, %v989
        %v991 = vmul.f32 %v749, %v990
        %vm992 = vcmp.eq.f32.partialorder %v749, inf
        %v993 = vsel %vm992, %v749, %v991
        %vm994 = vcmp.eq.f32.partialorder %v749, 0.0
        %v995 = vand.u32 %v749, 2147483648
        %v996 = vsel %vm994, %v995, %v993
        %v997 = vstv %s948
        %v998 = vmul.f32 %v997, %v960
        %v999 = vmul.f32 %v997, %v972
        %v1000 = vmul.f32 %v997, %v984
        %v1001 = vmul.f32 %v997, %v996
        %v1002 = vmul.f32 %v998, 1.442695
        %v1003 = vpow.pop %v1002
        %v1004 = vmul.f32 %v999, 1.442695
        %v1005 = vpow.pop %v1004
        %v1006 = vmul.f32 %v1000, 1.442695
        %v1007 = vpow.pop %v1006
        %v1008 = vmul.f32 %v1001, 1.442695
        %v1009 = vpow.pop %v1008
        %v1010 = vstv %s479
        %v1011 = vmul.f32 %v1010, %v1003
        %v1012 = vmul.f32 %v1010, %v1005
        %v1013 = vmul.f32 %v1010, %v1007
        %v1014 = vmul.f32 %v1010, %v1009
        %v1015 = vlaneseq
        %v1016 = vshrl.u32 %v1015, 7
        %v1017 = vperm.slane %v1016, 0
        %v1018 = vperm.slane %v1016, 1
        %v1019 = vperm.slane %v1016, 2
        %v1020 = vperm.slane %v1016, 3
        %v1021 = vperm.slane %v1016, 4
        %v1022 = vperm.slane %v1016, 5
        %v1023 = vperm.slane %v1016, 6
        %v1024 = vperm.slane %v1016, 7
        %vm1025 = vcmp.eq.s32.totalorder %v1017, %v1016
        %vm1026 = vcmp.eq.s32.totalorder %v1018, %v1016
        %vm1027 = vcmp.eq.s32.totalorder %v1019, %v1016
        %vm1028 = vcmp.eq.s32.totalorder %v1020, %v1016
        %vm1029 = vcmp.eq.s32.totalorder %v1021, %v1016
        %vm1030 = vcmp.eq.s32.totalorder %v1022, %v1016
        %vm1031 = vcmp.eq.s32.totalorder %v1023, %v1016
        %vm1032 = vcmp.eq.s32.totalorder %v1024, %v1016
        %s1033 = sadd.f32 %s481, 1.0
        %s1034 = smul.f32 %s479, %s1033
        %v1035 = vrsqrt.pop %v916
        %v1036 = vmul.f32 %v1035, %v916
        %v1037 = vmul.f32 %v1036, %v1035
        %v1038 = vmul.f32 0.5, %v1037
        %v1039 = vsub.f32 1.5, %v1038
        %v1040 = vmul.f32 %v1035, %v1039
        %v1041 = vmul.f32 %v916, %v1040
        %vm1042 = vcmp.eq.f32.partialorder %v916, inf
        %v1043 = vsel %vm1042, %v916, %v1041
        %vm1044 = vcmp.eq.f32.partialorder %v916, 0.0
        %v1045 = vand.u32 %v916, 2147483648
        %v1046 = vsel %vm1044, %v1045, %v1043
        %v1047 = vrsqrt.pop %v917
        %v1048 = vmul.f32 %v1047, %v917
        %v1049 = vmul.f32 %v1048, %v1047
        %v1050 = vmul.f32 0.5, %v1049
        %v1051 = vsub.f32 1.5, %v1050
        %v1052 = vmul.f32 %v1047, %v1051
        %v1053 = vmul.f32 %v917, %v1052
        %vm1054 = vcmp.eq.f32.partialorder %v917, inf
        %v1055 = vsel %vm1054, %v917, %v1053
        %vm1056 = vcmp.eq.f32.partialorder %v917, 0.0
        %v1057 = vand.u32 %v917, 2147483648
        %v1058 = vsel %vm1056, %v1057, %v1055
        %v1059 = vrsqrt.pop %v918
        %v1060 = vmul.f32 %v1059, %v918
        %v1061 = vmul.f32 %v1060, %v1059
        %v1062 = vmul.f32 0.5, %v1061
        %v1063 = vsub.f32 1.5, %v1062
        %v1064 = vmul.f32 %v1059, %v1063
        %v1065 = vmul.f32 %v918, %v1064
        %vm1066 = vcmp.eq.f32.partialorder %v918, inf
        %v1067 = vsel %vm1066, %v918, %v1065
        %vm1068 = vcmp.eq.f32.partialorder %v918, 0.0
        %v1069 = vand.u32 %v918, 2147483648
        %v1070 = vsel %vm1068, %v1069, %v1067
        %v1071 = vrsqrt.pop %v919
        %v1072 = vmul.f32 %v1071, %v919
        %v1073 = vmul.f32 %v1072, %v1071
        %v1074 = vmul.f32 0.5, %v1073
        %v1075 = vsub.f32 1.5, %v1074
        %v1076 = vmul.f32 %v1071, %v1075
        %v1077 = vmul.f32 %v919, %v1076
        %vm1078 = vcmp.eq.f32.partialorder %v919, inf
        %v1079 = vsel %vm1078, %v919, %v1077
        %vm1080 = vcmp.eq.f32.partialorder %v919, 0.0
        %v1081 = vand.u32 %v919, 2147483648
        %v1082 = vsel %vm1080, %v1081, %v1079
        %v1083 = vrsqrt.pop %v920
        %v1084 = vmul.f32 %v1083, %v920
        %v1085 = vmul.f32 %v1084, %v1083
        %v1086 = vmul.f32 0.5, %v1085
        %v1087 = vsub.f32 1.5, %v1086
        %v1088 = vmul.f32 %v1083, %v1087
        %v1089 = vmul.f32 %v920, %v1088
        %vm1090 = vcmp.eq.f32.partialorder %v920, inf
        %v1091 = vsel %vm1090, %v920, %v1089
        %vm1092 = vcmp.eq.f32.partialorder %v920, 0.0
        %v1093 = vand.u32 %v920, 2147483648
        %v1094 = vsel %vm1092, %v1093, %v1091
        %v1095 = vrsqrt.pop %v921
        %v1096 = vmul.f32 %v1095, %v921
        %v1097 = vmul.f32 %v1096, %v1095
        %v1098 = vmul.f32 0.5, %v1097
        %v1099 = vsub.f32 1.5, %v1098
        %v1100 = vmul.f32 %v1095, %v1099
        %v1101 = vmul.f32 %v921, %v1100
        %vm1102 = vcmp.eq.f32.partialorder %v921, inf
        %v1103 = vsel %vm1102, %v921, %v1101
        %vm1104 = vcmp.eq.f32.partialorder %v921, 0.0
        %v1105 = vand.u32 %v921, 2147483648
        %v1106 = vsel %vm1104, %v1105, %v1103
        %v1107 = vrsqrt.pop %v922
        %v1108 = vmul.f32 %v1107, %v922
        %v1109 = vmul.f32 %v1108, %v1107
        %v1110 = vmul.f32 0.5, %v1109
        %v1111 = vsub.f32 1.5, %v1110
        %v1112 = vmul.f32 %v1107, %v1111
        %v1113 = vmul.f32 %v922, %v1112
        %vm1114 = vcmp.eq.f32.partialorder %v922, inf
        %v1115 = vsel %vm1114, %v922, %v1113
        %vm1116 = vcmp.eq.f32.partialorder %v922, 0.0
        %v1117 = vand.u32 %v922, 2147483648
        %v1118 = vsel %vm1116, %v1117, %v1115
        %v1119 = vrsqrt.pop %v923
        %v1120 = vmul.f32 %v1119, %v923
        %v1121 = vmul.f32 %v1120, %v1119
        %v1122 = vmul.f32 0.5, %v1121
        %v1123 = vsub.f32 1.5, %v1122
        %v1124 = vmul.f32 %v1119, %v1123
        %v1125 = vmul.f32 %v923, %v1124
        %vm1126 = vcmp.eq.f32.partialorder %v923, inf
        %v1127 = vsel %vm1126, %v923, %v1125
        %vm1128 = vcmp.eq.f32.partialorder %v923, 0.0
        %v1129 = vand.u32 %v923, 2147483648
        %v1130 = vsel %vm1128, %v1129, %v1127
        %v1131 = vrsqrt.pop %v924
        %v1132 = vmul.f32 %v1131, %v924
        %v1133 = vmul.f32 %v1132, %v1131
        %v1134 = vmul.f32 0.5, %v1133
        %v1135 = vsub.f32 1.5, %v1134
        %v1136 = vmul.f32 %v1131, %v1135
        %v1137 = vmul.f32 %v924, %v1136
        %vm1138 = vcmp.eq.f32.partialorder %v924, inf
        %v1139 = vsel %vm1138, %v924, %v1137
        %vm1140 = vcmp.eq.f32.partialorder %v924, 0.0
        %v1141 = vand.u32 %v924, 2147483648
        %v1142 = vsel %vm1140, %v1141, %v1139
        %v1143 = vrsqrt.pop %v925
        %v1144 = vmul.f32 %v1143, %v925
        %v1145 = vmul.f32 %v1144, %v1143
        %v1146 = vmul.f32 0.5, %v1145
        %v1147 = vsub.f32 1.5, %v1146
        %v1148 = vmul.f32 %v1143, %v1147
        %v1149 = vmul.f32 %v925, %v1148
        %vm1150 = vcmp.eq.f32.partialorder %v925, inf
        %v1151 = vsel %vm1150, %v925, %v1149
        %vm1152 = vcmp.eq.f32.partialorder %v925, 0.0
        %v1153 = vand.u32 %v925, 2147483648
        %v1154 = vsel %vm1152, %v1153, %v1151
        %v1155 = vrsqrt.pop %v926
        %v1156 = vmul.f32 %v1155, %v926
        %v1157 = vmul.f32 %v1156, %v1155
        %v1158 = vmul.f32 0.5, %v1157
        %v1159 = vsub.f32 1.5, %v1158
        %v1160 = vmul.f32 %v1155, %v1159
        %v1161 = vmul.f32 %v926, %v1160
        %vm1162 = vcmp.eq.f32.partialorder %v926, inf
        %v1163 = vsel %vm1162, %v926, %v1161
        %vm1164 = vcmp.eq.f32.partialorder %v926, 0.0
        %v1165 = vand.u32 %v926, 2147483648
        %v1166 = vsel %vm1164, %v1165, %v1163
        %v1167 = vrsqrt.pop %v927
        %v1168 = vmul.f32 %v1167, %v927
        %v1169 = vmul.f32 %v1168, %v1167
        %v1170 = vmul.f32 0.5, %v1169
        %v1171 = vsub.f32 1.5, %v1170
        %v1172 = vmul.f32 %v1167, %v1171
        %v1173 = vmul.f32 %v927, %v1172
        %vm1174 = vcmp.eq.f32.partialorder %v927, inf
        %v1175 = vsel %vm1174, %v927, %v1173
        %vm1176 = vcmp.eq.f32.partialorder %v927, 0.0
        %v1177 = vand.u32 %v927, 2147483648
        %v1178 = vsel %vm1176, %v1177, %v1175
        %v1179 = vrsqrt.pop %v928
        %v1180 = vmul.f32 %v1179, %v928
        %v1181 = vmul.f32 %v1180, %v1179
        %v1182 = vmul.f32 0.5, %v1181
        %v1183 = vsub.f32 1.5, %v1182
        %v1184 = vmul.f32 %v1179, %v1183
        %v1185 = vmul.f32 %v928, %v1184
        %vm1186 = vcmp.eq.f32.partialorder %v928, inf
        %v1187 = vsel %vm1186, %v928, %v1185
        %vm1188 = vcmp.eq.f32.partialorder %v928, 0.0
        %v1189 = vand.u32 %v928, 2147483648
        %v1190 = vsel %vm1188, %v1189, %v1187
        %v1191 = vrsqrt.pop %v929
        %v1192 = vmul.f32 %v1191, %v929
        %v1193 = vmul.f32 %v1192, %v1191
        %v1194 = vmul.f32 0.5, %v1193
        %v1195 = vsub.f32 1.5, %v1194
        %v1196 = vmul.f32 %v1191, %v1195
        %v1197 = vmul.f32 %v929, %v1196
        %vm1198 = vcmp.eq.f32.partialorder %v929, inf
        %v1199 = vsel %vm1198, %v929, %v1197
        %vm1200 = vcmp.eq.f32.partialorder %v929, 0.0
        %v1201 = vand.u32 %v929, 2147483648
        %v1202 = vsel %vm1200, %v1201, %v1199
        %v1203 = vrsqrt.pop %v930
        %v1204 = vmul.f32 %v1203, %v930
        %v1205 = vmul.f32 %v1204, %v1203
        %v1206 = vmul.f32 0.5, %v1205
        %v1207 = vsub.f32 1.5, %v1206
        %v1208 = vmul.f32 %v1203, %v1207
        %v1209 = vmul.f32 %v930, %v1208
        %vm1210 = vcmp.eq.f32.partialorder %v930, inf
        %v1211 = vsel %vm1210, %v930, %v1209
        %vm1212 = vcmp.eq.f32.partialorder %v930, 0.0
        %v1213 = vand.u32 %v930, 2147483648
        %v1214 = vsel %vm1212, %v1213, %v1211
        %v1215 = vrsqrt.pop %v931
        %v1216 = vmul.f32 %v1215, %v931
        %v1217 = vmul.f32 %v1216, %v1215
        %v1218 = vmul.f32 0.5, %v1217
        %v1219 = vsub.f32 1.5, %v1218
        %v1220 = vmul.f32 %v1215, %v1219
        %v1221 = vmul.f32 %v931, %v1220
        %vm1222 = vcmp.eq.f32.partialorder %v931, inf
        %v1223 = vsel %vm1222, %v931, %v1221
        %vm1224 = vcmp.eq.f32.partialorder %v931, 0.0
        %v1225 = vand.u32 %v931, 2147483648
        %v1226 = vsel %vm1224, %v1225, %v1223
        %v1227 = vrsqrt.pop %v932
        %v1228 = vmul.f32 %v1227, %v932
        %v1229 = vmul.f32 %v1228, %v1227
        %v1230 = vmul.f32 0.5, %v1229
        %v1231 = vsub.f32 1.5, %v1230
        %v1232 = vmul.f32 %v1227, %v1231
        %v1233 = vmul.f32 %v932, %v1232
        %vm1234 = vcmp.eq.f32.partialorder %v932, inf
        %v1235 = vsel %vm1234, %v932, %v1233
        %vm1236 = vcmp.eq.f32.partialorder %v932, 0.0
        %v1237 = vand.u32 %v932, 2147483648
        %v1238 = vsel %vm1236, %v1237, %v1235
        %v1239 = vrsqrt.pop %v933
        %v1240 = vmul.f32 %v1239, %v933
        %v1241 = vmul.f32 %v1240, %v1239
        %v1242 = vmul.f32 0.5, %v1241
        %v1243 = vsub.f32 1.5, %v1242
        %v1244 = vmul.f32 %v1239, %v1243
        %v1245 = vmul.f32 %v933, %v1244
        %vm1246 = vcmp.eq.f32.partialorder %v933, inf
        %v1247 = vsel %vm1246, %v933, %v1245
        %vm1248 = vcmp.eq.f32.partialorder %v933, 0.0
        %v1249 = vand.u32 %v933, 2147483648
        %v1250 = vsel %vm1248, %v1249, %v1247
        %v1251 = vrsqrt.pop %v934
        %v1252 = vmul.f32 %v1251, %v934
        %v1253 = vmul.f32 %v1252, %v1251
        %v1254 = vmul.f32 0.5, %v1253
        %v1255 = vsub.f32 1.5, %v1254
        %v1256 = vmul.f32 %v1251, %v1255
        %v1257 = vmul.f32 %v934, %v1256
        %vm1258 = vcmp.eq.f32.partialorder %v934, inf
        %v1259 = vsel %vm1258, %v934, %v1257
        %vm1260 = vcmp.eq.f32.partialorder %v934, 0.0
        %v1261 = vand.u32 %v934, 2147483648
        %v1262 = vsel %vm1260, %v1261, %v1259
        %v1263 = vrsqrt.pop %v935
        %v1264 = vmul.f32 %v1263, %v935
        %v1265 = vmul.f32 %v1264, %v1263
        %v1266 = vmul.f32 0.5, %v1265
        %v1267 = vsub.f32 1.5, %v1266
        %v1268 = vmul.f32 %v1263, %v1267
        %v1269 = vmul.f32 %v935, %v1268
        %vm1270 = vcmp.eq.f32.partialorder %v935, inf
        %v1271 = vsel %vm1270, %v935, %v1269
        %vm1272 = vcmp.eq.f32.partialorder %v935, 0.0
        %v1273 = vand.u32 %v935, 2147483648
        %v1274 = vsel %vm1272, %v1273, %v1271
        %v1275 = vrsqrt.pop %v936
        %v1276 = vmul.f32 %v1275, %v936
        %v1277 = vmul.f32 %v1276, %v1275
        %v1278 = vmul.f32 0.5, %v1277
        %v1279 = vsub.f32 1.5, %v1278
        %v1280 = vmul.f32 %v1275, %v1279
        %v1281 = vmul.f32 %v936, %v1280
        %vm1282 = vcmp.eq.f32.partialorder %v936, inf
        %v1283 = vsel %vm1282, %v936, %v1281
        %vm1284 = vcmp.eq.f32.partialorder %v936, 0.0
        %v1285 = vand.u32 %v936, 2147483648
        %v1286 = vsel %vm1284, %v1285, %v1283
        %v1287 = vrsqrt.pop %v937
        %v1288 = vmul.f32 %v1287, %v937
        %v1289 = vmul.f32 %v1288, %v1287
        %v1290 = vmul.f32 0.5, %v1289
        %v1291 = vsub.f32 1.5, %v1290
        %v1292 = vmul.f32 %v1287, %v1291
        %v1293 = vmul.f32 %v937, %v1292
        %vm1294 = vcmp.eq.f32.partialorder %v937, inf
        %v1295 = vsel %vm1294, %v937, %v1293
        %vm1296 = vcmp.eq.f32.partialorder %v937, 0.0
        %v1297 = vand.u32 %v937, 2147483648
        %v1298 = vsel %vm1296, %v1297, %v1295
        %v1299 = vrsqrt.pop %v938
        %v1300 = vmul.f32 %v1299, %v938
        %v1301 = vmul.f32 %v1300, %v1299
        %v1302 = vmul.f32 0.5, %v1301
        %v1303 = vsub.f32 1.5, %v1302
        %v1304 = vmul.f32 %v1299, %v1303
        %v1305 = vmul.f32 %v938, %v1304
        %vm1306 = vcmp.eq.f32.partialorder %v938, inf
        %v1307 = vsel %vm1306, %v938, %v1305
        %vm1308 = vcmp.eq.f32.partialorder %v938, 0.0
        %v1309 = vand.u32 %v938, 2147483648
        %v1310 = vsel %vm1308, %v1309, %v1307
        %v1311 = vrsqrt.pop %v939
        %v1312 = vmul.f32 %v1311, %v939
        %v1313 = vmul.f32 %v1312, %v1311
        %v1314 = vmul.f32 0.5, %v1313
        %v1315 = vsub.f32 1.5, %v1314
        %v1316 = vmul.f32 %v1311, %v1315
        %v1317 = vmul.f32 %v939, %v1316
        %vm1318 = vcmp.eq.f32.partialorder %v939, inf
        %v1319 = vsel %vm1318, %v939, %v1317
        %vm1320 = vcmp.eq.f32.partialorder %v939, 0.0
        %v1321 = vand.u32 %v939, 2147483648
        %v1322 = vsel %vm1320, %v1321, %v1319
        %v1323 = vrsqrt.pop %v940
        %v1324 = vmul.f32 %v1323, %v940
        %v1325 = vmul.f32 %v1324, %v1323
        %v1326 = vmul.f32 0.5, %v1325
        %v1327 = vsub.f32 1.5, %v1326
        %v1328 = vmul.f32 %v1323, %v1327
        %v1329 = vmul.f32 %v940, %v1328
        %vm1330 = vcmp.eq.f32.partialorder %v940, inf
        %v1331 = vsel %vm1330, %v940, %v1329
        %vm1332 = vcmp.eq.f32.partialorder %v940, 0.0
        %v1333 = vand.u32 %v940, 2147483648
        %v1334 = vsel %vm1332, %v1333, %v1331
        %v1335 = vrsqrt.pop %v941
        %v1336 = vmul.f32 %v1335, %v941
        %v1337 = vmul.f32 %v1336, %v1335
        %v1338 = vmul.f32 0.5, %v1337
        %v1339 = vsub.f32 1.5, %v1338
        %v1340 = vmul.f32 %v1335, %v1339
        %v1341 = vmul.f32 %v941, %v1340
        %vm1342 = vcmp.eq.f32.partialorder %v941, inf
        %v1343 = vsel %vm1342, %v941, %v1341
        %vm1344 = vcmp.eq.f32.partialorder %v941, 0.0
        %v1345 = vand.u32 %v941, 2147483648
        %v1346 = vsel %vm1344, %v1345, %v1343
        %v1347 = vrsqrt.pop %v942
        %v1348 = vmul.f32 %v1347, %v942
        %v1349 = vmul.f32 %v1348, %v1347
        %v1350 = vmul.f32 0.5, %v1349
        %v1351 = vsub.f32 1.5, %v1350
        %v1352 = vmul.f32 %v1347, %v1351
        %v1353 = vmul.f32 %v942, %v1352
        %vm1354 = vcmp.eq.f32.partialorder %v942, inf
        %v1355 = vsel %vm1354, %v942, %v1353
        %vm1356 = vcmp.eq.f32.partialorder %v942, 0.0
        %v1357 = vand.u32 %v942, 2147483648
        %v1358 = vsel %vm1356, %v1357, %v1355
        %v1359 = vrsqrt.pop %v943
        %v1360 = vmul.f32 %v1359, %v943
        %v1361 = vmul.f32 %v1360, %v1359
        %v1362 = vmul.f32 0.5, %v1361
        %v1363 = vsub.f32 1.5, %v1362
        %v1364 = vmul.f32 %v1359, %v1363
        %v1365 = vmul.f32 %v943, %v1364
        %vm1366 = vcmp.eq.f32.partialorder %v943, inf
        %v1367 = vsel %vm1366, %v943, %v1365
        %vm1368 = vcmp.eq.f32.partialorder %v943, 0.0
        %v1369 = vand.u32 %v943, 2147483648
        %v1370 = vsel %vm1368, %v1369, %v1367
        %v1371 = vrsqrt.pop %v944
        %v1372 = vmul.f32 %v1371, %v944
        %v1373 = vmul.f32 %v1372, %v1371
        %v1374 = vmul.f32 0.5, %v1373
        %v1375 = vsub.f32 1.5, %v1374
        %v1376 = vmul.f32 %v1371, %v1375
        %v1377 = vmul.f32 %v944, %v1376
        %vm1378 = vcmp.eq.f32.partialorder %v944, inf
        %v1379 = vsel %vm1378, %v944, %v1377
        %vm1380 = vcmp.eq.f32.partialorder %v944, 0.0
        %v1381 = vand.u32 %v944, 2147483648
        %v1382 = vsel %vm1380, %v1381, %v1379
        %v1383 = vrsqrt.pop %v945
        %v1384 = vmul.f32 %v1383, %v945
        %v1385 = vmul.f32 %v1384, %v1383
        %v1386 = vmul.f32 0.5, %v1385
        %v1387 = vsub.f32 1.5, %v1386
        %v1388 = vmul.f32 %v1383, %v1387
        %v1389 = vmul.f32 %v945, %v1388
        %vm1390 = vcmp.eq.f32.partialorder %v945, inf
        %v1391 = vsel %vm1390, %v945, %v1389
        %vm1392 = vcmp.eq.f32.partialorder %v945, 0.0
        %v1393 = vand.u32 %v945, 2147483648
        %v1394 = vsel %vm1392, %v1393, %v1391
        %v1395 = vrsqrt.pop %v946
        %v1396 = vmul.f32 %v1395, %v946
        %v1397 = vmul.f32 %v1396, %v1395
        %v1398 = vmul.f32 0.5, %v1397
        %v1399 = vsub.f32 1.5, %v1398
        %v1400 = vmul.f32 %v1395, %v1399
        %v1401 = vmul.f32 %v946, %v1400
        %vm1402 = vcmp.eq.f32.partialorder %v946, inf
        %v1403 = vsel %vm1402, %v946, %v1401
        %vm1404 = vcmp.eq.f32.partialorder %v946, 0.0
        %v1405 = vand.u32 %v946, 2147483648
        %v1406 = vsel %vm1404, %v1405, %v1403
        %v1407 = vrsqrt.pop %v947
        %v1408 = vmul.f32 %v1407, %v947
        %v1409 = vmul.f32 %v1408, %v1407
        %v1410 = vmul.f32 0.5, %v1409
        %v1411 = vsub.f32 1.5, %v1410
        %v1412 = vmul.f32 %v1407, %v1411
        %v1413 = vmul.f32 %v947, %v1412
        %vm1414 = vcmp.eq.f32.partialorder %v947, inf
        %v1415 = vsel %vm1414, %v947, %v1413
        %vm1416 = vcmp.eq.f32.partialorder %v947, 0.0
        %v1417 = vand.u32 %v947, 2147483648
        %v1418 = vsel %vm1416, %v1417, %v1415
        %v1419 = vmul.f32 %v997, %v1046
        %v1420 = vmul.f32 %v997, %v1058
        %v1421 = vmul.f32 %v997, %v1070
        %v1422 = vmul.f32 %v997, %v1082
        %v1423 = vmul.f32 %v997, %v1094
        %v1424 = vmul.f32 %v997, %v1106
        %v1425 = vmul.f32 %v997, %v1118
        %v1426 = vmul.f32 %v997, %v1130
        %v1427 = vmul.f32 %v997, %v1142
        %v1428 = vmul.f32 %v997, %v1154
        %v1429 = vmul.f32 %v997, %v1166
        %v1430 = vmul.f32 %v997, %v1178
        %v1431 = vmul.f32 %v997, %v1190
        %v1432 = vmul.f32 %v997, %v1202
        %v1433 = vmul.f32 %v997, %v1214
        %v1434 = vmul.f32 %v997, %v1226
        %v1435 = vmul.f32 %v997, %v1238
        %v1436 = vmul.f32 %v997, %v1250
        %v1437 = vmul.f32 %v997, %v1262
        %v1438 = vmul.f32 %v997, %v1274
        %v1439 = vmul.f32 %v997, %v1286
        %v1440 = vmul.f32 %v997, %v1298
        %v1441 = vmul.f32 %v997, %v1310
        %v1442 = vmul.f32 %v997, %v1322
        %v1443 = vmul.f32 %v997, %v1334
        %v1444 = vmul.f32 %v997, %v1346
        %v1445 = vmul.f32 %v997, %v1358
        %v1446 = vmul.f32 %v997, %v1370
        %v1447 = vmul.f32 %v997, %v1382
        %v1448 = vmul.f32 %v997, %v1394
        %v1449 = vmul.f32 %v997, %v1406
        %v1450 = vmul.f32 %v997, %v1418
        %v1451 = vmul.f32 %v1419, 1.442695
        %v1452 = vpow.pop %v1451
        %v1453 = vmul.f32 %v1420, 1.442695
        %v1454 = vpow.pop %v1453
        %v1455 = vmul.f32 %v1421, 1.442695
        %v1456 = vpow.pop %v1455
        %v1457 = vmul.f32 %v1422, 1.442695
        %v1458 = vpow.pop %v1457
        %v1459 = vmul.f32 %v1423, 1.442695
        %v1460 = vpow.pop %v1459
        %v1461 = vmul.f32 %v1424, 1.442695
        %v1462 = vpow.pop %v1461
        %v1463 = vmul.f32 %v1425, 1.442695
        %v1464 = vpow.pop %v1463
        %v1465 = vmul.f32 %v1426, 1.442695
        %v1466 = vpow.pop %v1465
        %v1467 = vmul.f32 %v1427, 1.442695
        %v1468 = vpow.pop %v1467
        %v1469 = vmul.f32 %v1428, 1.442695
        %v1470 = vpow.pop %v1469
        %v1471 = vmul.f32 %v1429, 1.442695
        %v1472 = vpow.pop %v1471
        %v1473 = vmul.f32 %v1430, 1.442695
        %v1474 = vpow.pop %v1473
        %v1475 = vmul.f32 %v1431, 1.442695
        %v1476 = vpow.pop %v1475
        %v1477 = vmul.f32 %v1432, 1.442695
        %v1478 = vpow.pop %v1477
        %v1479 = vmul.f32 %v1433, 1.442695
        %v1480 = vpow.pop %v1479
        %v1481 = vmul.f32 %v1434, 1.442695
        %v1482 = vpow.pop %v1481
        %v1483 = vmul.f32 %v1435, 1.442695
        %v1484 = vpow.pop %v1483
        %v1485 = vmul.f32 %v1436, 1.442695
        %v1486 = vpow.pop %v1485
        %v1487 = vmul.f32 %v1437, 1.442695
        %v1488 = vpow.pop %v1487
        %v1489 = vmul.f32 %v1438, 1.442695
        %v1490 = vpow.pop %v1489
        %v1491 = vmul.f32 %v1439, 1.442695
        %v1492 = vpow.pop %v1491
        %v1493 = vmul.f32 %v1440, 1.442695
        %v1494 = vpow.pop %v1493
        %v1495 = vmul.f32 %v1441, 1.442695
        %v1496 = vpow.pop %v1495
        %v1497 = vmul.f32 %v1442, 1.442695
        %v1498 = vpow.pop %v1497
        %v1499 = vmul.f32 %v1443, 1.442695
        %v1500 = vpow.pop %v1499
        %v1501 = vmul.f32 %v1444, 1.442695
        %v1502 = vpow.pop %v1501
        %v1503 = vmul.f32 %v1445, 1.442695
        %v1504 = vpow.pop %v1503
        %v1505 = vmul.f32 %v1446, 1.442695
        %v1506 = vpow.pop %v1505
        %v1507 = vmul.f32 %v1447, 1.442695
        %v1508 = vpow.pop %v1507
        %v1509 = vmul.f32 %v1448, 1.442695
        %v1510 = vpow.pop %v1509
        %v1511 = vmul.f32 %v1449, 1.442695
        %v1512 = vpow.pop %v1511
        %v1513 = vmul.f32 %v1450, 1.442695
        %v1514 = vpow.pop %v1513
        %v1515 = vmul.f32 %v1010, %v1452
        %v1516 = vmul.f32 %v1010, %v1454
        %v1517 = vmul.f32 %v1010, %v1456
        %v1518 = vmul.f32 %v1010, %v1458
        %v1519 = vmul.f32 %v1010, %v1460
        %v1520 = vmul.f32 %v1010, %v1462
        %v1521 = vmul.f32 %v1010, %v1464
        %v1522 = vmul.f32 %v1010, %v1466
        %v1523 = vmul.f32 %v1010, %v1468
        %v1524 = vmul.f32 %v1010, %v1470
        %v1525 = vmul.f32 %v1010, %v1472
        %v1526 = vmul.f32 %v1010, %v1474
        %v1527 = vmul.f32 %v1010, %v1476
        %v1528 = vmul.f32 %v1010, %v1478
        %v1529 = vmul.f32 %v1010, %v1480
        %v1530 = vmul.f32 %v1010, %v1482
        %v1531 = vmul.f32 %v1010, %v1484
        %v1532 = vmul.f32 %v1010, %v1486
        %v1533 = vmul.f32 %v1010, %v1488
        %v1534 = vmul.f32 %v1010, %v1490
        %v1535 = vmul.f32 %v1010, %v1492
        %v1536 = vmul.f32 %v1010, %v1494
        %v1537 = vmul.f32 %v1010, %v1496
        %v1538 = vmul.f32 %v1010, %v1498
        %v1539 = vmul.f32 %v1010, %v1500
        %v1540 = vmul.f32 %v1010, %v1502
        %v1541 = vmul.f32 %v1010, %v1504
        %v1542 = vmul.f32 %v1010, %v1506
        %v1543 = vmul.f32 %v1010, %v1508
        %v1544 = vmul.f32 %v1010, %v1510
        %v1545 = vmul.f32 %v1010, %v1512
        %v1546 = vmul.f32 %v1010, %v1514
        %v1547 = vstv %s1034
        %v1548 = vsel %vm1025, %v1547, %v1515
        %v1549 = vsel %vm1025, %v1547, %v1516
        %v1550 = vsel %vm1025, %v1547, %v1517
        %v1551 = vsel %vm1025, %v1547, %v1518
        %v1552 = vsel %vm1026, %v1547, %v1519
        %v1553 = vsel %vm1026, %v1547, %v1520
        %v1554 = vsel %vm1026, %v1547, %v1521
        %v1555 = vsel %vm1026, %v1547, %v1522
        %v1556 = vsel %vm1027, %v1547, %v1523
        %v1557 = vsel %vm1027, %v1547, %v1524
        %v1558 = vsel %vm1027, %v1547, %v1525
        %v1559 = vsel %vm1027, %v1547, %v1526
        %v1560 = vsel %vm1028, %v1547, %v1527
        %v1561 = vsel %vm1028, %v1547, %v1528
        %v1562 = vsel %vm1028, %v1547, %v1529
        %v1563 = vsel %vm1028, %v1547, %v1530
        %v1564 = vsel %vm1029, %v1547, %v1531
        %v1565 = vsel %vm1029, %v1547, %v1532
        %v1566 = vsel %vm1029, %v1547, %v1533
        %v1567 = vsel %vm1029, %v1547, %v1534
        %v1568 = vsel %vm1030, %v1547, %v1535
        %v1569 = vsel %vm1030, %v1547, %v1536
        %v1570 = vsel %vm1030, %v1547, %v1537
        %v1571 = vsel %vm1030, %v1547, %v1538
        %v1572 = vsel %vm1031, %v1547, %v1539
        %v1573 = vsel %vm1031, %v1547, %v1540
        %v1574 = vsel %vm1031, %v1547, %v1541
        %v1575 = vsel %vm1031, %v1547, %v1542
        %v1576 = vsel %vm1032, %v1547, %v1543
        %v1577 = vsel %vm1032, %v1547, %v1544
        %v1578 = vsel %vm1032, %v1547, %v1545
        %v1579 = vsel %vm1032, %v1547, %v1546
        %v1580 = vld [vmem:[%s455] sm:$0xff]
        %v1581 = vld [vmem:[%s455 + $0x8] sm:$0xff]
        %v1582 = vld [vmem:[%s455 + $0x10] sm:$0xff]
        %v1583 = vld [vmem:[%s455 + $0x18] sm:$0xff]
        %v1584 = vld [vmem:[%s461] sm:$0xff]
        %v1585 = vld [vmem:[%s461 + $0x8] sm:$0xff]
        %v1586 = vld [vmem:[%s461 + $0x10] sm:$0xff]
        %v1587 = vld [vmem:[%s461 + $0x18] sm:$0xff]
        %v1588 = vrcp.pop %v1548
        %v1589 = vrcp.pop %v1549
        %v1590 = vrcp.pop %v1550
        %v1591 = vrcp.pop %v1551
        %v1592 = vmul.f32 %v1548, %v1588
        %v1593 = vmul.f32 %v1549, %v1589
        %v1594 = vmul.f32 %v1550, %v1590
        %v1595 = vmul.f32 %v1551, %v1591
        %v1596 = vsub.f32 2.0, %v1592
        %v1597 = vsub.f32 2.0, %v1593
        %v1598 = vsub.f32 2.0, %v1594
        %v1599 = vsub.f32 2.0, %v1595
        %v1600 = vmul.f32 %v1588, %v1596
        %v1601 = vmul.f32 %v1589, %v1597
        %v1602 = vmul.f32 %v1590, %v1598
        %v1603 = vmul.f32 %v1591, %v1599
        %v1604 = vmul.f32 %v1011, %v1600
        %v1605 = vmul.f32 %v1012, %v1601
        %v1606 = vmul.f32 %v1013, %v1602
        %v1607 = vmul.f32 %v1014, %v1603
        %v1608 = vmul.f32 %v1011, %v1604
        %v1609 = vmul.f32 %v1012, %v1605
        %v1610 = vmul.f32 %v1013, %v1606
        %v1611 = vmul.f32 %v1014, %v1607
        %v1612 = vadd.f32 %v1608, 0.0
        %v1613 = vadd.f32 %v1609, 0.0
        %v1614 = vadd.f32 %v1610, 0.0
        %v1615 = vadd.f32 %v1611, 0.0
        %v1616 = vmul.f32 %v1580, %v1604
        %v1617 = vmul.f32 %v1581, %v1605
        %v1618 = vmul.f32 %v1582, %v1606
        %v1619 = vmul.f32 %v1583, %v1607
        %v1620 = vadd.f32 %v1616, 0.0
        %v1621 = vadd.f32 %v1617, 0.0
        %v1622 = vadd.f32 %v1618, 0.0
        %v1623 = vadd.f32 %v1619, 0.0
        %v1624 = vmul.f32 %v1584, %v1604
        %v1625 = vmul.f32 %v1585, %v1605
        %v1626 = vmul.f32 %v1586, %v1606
        %v1627 = vmul.f32 %v1587, %v1607
        %v1628 = vadd.f32 %v1624, 0.0
        %v1629 = vadd.f32 %v1625, 0.0
        %v1630 = vadd.f32 %v1626, 0.0
        %v1631 = vadd.f32 %v1627, 0.0
        %v1632 = vperm.slane %v1600, 0
        %v1633 = vperm.slane %v1601, 0
        %v1634 = vperm.slane %v1602, 0
        %v1635 = vperm.slane %v1603, 0
        %v1636 = vmul.f32 %v1548, %v1632
        %v1637 = vmul.f32 %v1549, %v1633
        %v1638 = vmul.f32 %v1550, %v1634
        %v1639 = vmul.f32 %v1551, %v1635
        %1644 = vst [vmem:[#allocation1] sm:$0xff] %v1636
        %1645 = vst [vmem:[#allocation1 + $0x9] sm:$0xff] %v1637
        %1646 = vst [vmem:[#allocation1 + $0x12] sm:$0xff] %v1638
        %1647 = vst [vmem:[#allocation1 + $0x1b] sm:$0xff] %v1639
        %s1648 = scalar_lea.vmem [#allocation1], 1
        %v1649 = vld [vmem:[%s1648] ss:$9 sm:$0xff]
        %s1650 = scalar_lea.vmem [#allocation1], 2
        %v1651 = vld [vmem:[%s1650] ss:$9 sm:$0xff]
        %s1652 = scalar_lea.vmem [#allocation1], 3
        %v1653 = vld [vmem:[%s1652] ss:$9 sm:$0xff]
        %s1654 = scalar_lea.vmem [#allocation1], 4
        %v1655 = vld [vmem:[%s1654] ss:$9 sm:$0xff]
        %s1656 = scalar_lea.vmem [#allocation1], 5
        %v1657 = vld [vmem:[%s1656] ss:$9 sm:$0xff]
        %s1658 = scalar_lea.vmem [#allocation1], 6
        %v1659 = vld [vmem:[%s1658] ss:$9 sm:$0xff]
        %s1660 = scalar_lea.vmem [#allocation1], 7
        %v1661 = vld [vmem:[%s1660] ss:$9 sm:$0xff]
        %v1662 = vperm.slane %v1649, 0
        %v1663 = vperm.slane %v1649, 1
        %v1664 = vperm.slane %v1649, 2
        %v1665 = vperm.slane %v1649, 3
        %v1666 = vperm.slane %v1651, 0
        %v1667 = vperm.slane %v1651, 1
        %v1668 = vperm.slane %v1651, 2
        %v1669 = vperm.slane %v1651, 3
        %v1670 = vperm.slane %v1653, 0
        %v1671 = vperm.slane %v1653, 1
        %v1672 = vperm.slane %v1653, 2
        %v1673 = vperm.slane %v1653, 3
        %v1674 = vperm.slane %v1655, 0
        %v1675 = vperm.slane %v1655, 1
        %v1676 = vperm.slane %v1655, 2
        %v1677 = vperm.slane %v1655, 3
        %v1678 = vperm.slane %v1657, 0
        %v1679 = vperm.slane %v1657, 1
        %v1680 = vperm.slane %v1657, 2
        %v1681 = vperm.slane %v1657, 3
        %v1682 = vperm.slane %v1659, 0
        %v1683 = vperm.slane %v1659, 1
        %v1684 = vperm.slane %v1659, 2
        %v1685 = vperm.slane %v1659, 3
        %v1686 = vperm.slane %v1661, 0
        %v1687 = vperm.slane %v1661, 1
        %v1688 = vperm.slane %v1661, 2
        %v1689 = vperm.slane %v1661, 3
        %v1718 = vmul.f32 %v1662, %v1548
        %v1719 = vmul.f32 %v1663, %v1549
        %v1720 = vmul.f32 %v1664, %v1550
        %v1721 = vmul.f32 %v1665, %v1551
        %v1722 = vmul.f32 %v1666, %v1548
        %v1723 = vmul.f32 %v1667, %v1549
        %v1724 = vmul.f32 %v1668, %v1550
        %v1725 = vmul.f32 %v1669, %v1551
        %v1726 = vmul.f32 %v1670, %v1548
        %v1727 = vmul.f32 %v1671, %v1549
        %v1728 = vmul.f32 %v1672, %v1550
        %v1729 = vmul.f32 %v1673, %v1551
        %v1730 = vmul.f32 %v1674, %v1548
        %v1731 = vmul.f32 %v1675, %v1549
        %v1732 = vmul.f32 %v1676, %v1550
        %v1733 = vmul.f32 %v1677, %v1551
        %v1734 = vmul.f32 %v1678, %v1548
        %v1735 = vmul.f32 %v1679, %v1549
        %v1736 = vmul.f32 %v1680, %v1550
        %v1737 = vmul.f32 %v1681, %v1551
        %v1738 = vmul.f32 %v1682, %v1548
        %v1739 = vmul.f32 %v1683, %v1549
        %v1740 = vmul.f32 %v1684, %v1550
        %v1741 = vmul.f32 %v1685, %v1551
        %v1742 = vmul.f32 %v1686, %v1548
        %v1743 = vmul.f32 %v1687, %v1549
        %v1744 = vmul.f32 %v1688, %v1550
        %v1745 = vmul.f32 %v1689, %v1551
        %v1746 = vsub.f32 %v1552, %v1718
        %v1747 = vsub.f32 %v1553, %v1719
        %v1748 = vsub.f32 %v1554, %v1720
        %v1749 = vsub.f32 %v1555, %v1721
        %v1750 = vsub.f32 %v1556, %v1722
        %v1751 = vsub.f32 %v1557, %v1723
        %v1752 = vsub.f32 %v1558, %v1724
        %v1753 = vsub.f32 %v1559, %v1725
        %v1754 = vsub.f32 %v1560, %v1726
        %v1755 = vsub.f32 %v1561, %v1727
        %v1756 = vsub.f32 %v1562, %v1728
        %v1757 = vsub.f32 %v1563, %v1729
        %v1758 = vsub.f32 %v1564, %v1730
        %v1759 = vsub.f32 %v1565, %v1731
        %v1760 = vsub.f32 %v1566, %v1732
        %v1761 = vsub.f32 %v1567, %v1733
        %v1762 = vsub.f32 %v1568, %v1734
        %v1763 = vsub.f32 %v1569, %v1735
        %v1764 = vsub.f32 %v1570, %v1736
        %v1765 = vsub.f32 %v1571, %v1737
        %v1766 = vsub.f32 %v1572, %v1738
        %v1767 = vsub.f32 %v1573, %v1739
        %v1768 = vsub.f32 %v1574, %v1740
        %v1769 = vsub.f32 %v1575, %v1741
        %v1770 = vsub.f32 %v1576, %v1742
        %v1771 = vsub.f32 %v1577, %v1743
        %v1772 = vsub.f32 %v1578, %v1744
        %v1773 = vsub.f32 %v1579, %v1745
        %v1774 = vperm.slane %v1011, 0
        %v1775 = vperm.slane %v1012, 0
        %v1776 = vperm.slane %v1013, 0
        %v1777 = vperm.slane %v1014, 0
        %v1778 = vmul.f32 %v1636, %v1774
        %v1779 = vmul.f32 %v1637, %v1775
        %v1780 = vmul.f32 %v1638, %v1776
        %v1781 = vmul.f32 %v1639, %v1777
        %v1782 = vsub.f32 %v1011, %v1778
        %v1783 = vsub.f32 %v1012, %v1779
        %v1784 = vsub.f32 %v1013, %v1780
        %v1785 = vsub.f32 %v1014, %v1781
        %v1786 = vperm.slane %v1580, 0
        %v1787 = vperm.slane %v1581, 0
        %v1788 = vperm.slane %v1582, 0
        %v1789 = vperm.slane %v1583, 0
        %v1790 = vmul.f32 %v1636, %v1786
        %v1791 = vmul.f32 %v1637, %v1787
        %v1792 = vmul.f32 %v1638, %v1788
        %v1793 = vmul.f32 %v1639, %v1789
        %v1794 = vsub.f32 %v1580, %v1790
        %v1795 = vsub.f32 %v1581, %v1791
        %v1796 = vsub.f32 %v1582, %v1792
        %v1797 = vsub.f32 %v1583, %v1793
        %v1798 = vperm.slane %v1584, 0
        %v1799 = vperm.slane %v1585, 0
        %v1800 = vperm.slane %v1586, 0
        %v1801 = vperm.slane %v1587, 0
        %v1802 = vmul.f32 %v1636, %v1798
        %v1803 = vmul.f32 %v1637, %v1799
        %v1804 = vmul.f32 %v1638, %v1800
        %v1805 = vmul.f32 %v1639, %v1801
        %v1806 = vsub.f32 %v1584, %v1802
        %v1807 = vsub.f32 %v1585, %v1803
        %v1808 = vsub.f32 %v1586, %v1804
        %v1809 = vsub.f32 %v1587, %v1805
        %v1810 = vrcp.pop %v1746
        %v1811 = vrcp.pop %v1747
        %v1812 = vrcp.pop %v1748
        %v1813 = vrcp.pop %v1749
        %v1814 = vmul.f32 %v1746, %v1810
        %v1815 = vmul.f32 %v1747, %v1811
        %v1816 = vmul.f32 %v1748, %v1812
        %v1817 = vmul.f32 %v1749, %v1813
        %v1818 = vsub.f32 2.0, %v1814
        %v1819 = vsub.f32 2.0, %v1815
        %v1820 = vsub.f32 2.0, %v1816
        %v1821 = vsub.f32 2.0, %v1817
        %v1822 = vmul.f32 %v1810, %v1818
        %v1823 = vmul.f32 %v1811, %v1819
        %v1824 = vmul.f32 %v1812, %v1820
        %v1825 = vmul.f32 %v1813, %v1821
        %v1826 = vmul.f32 %v1782, %v1822
        %v1827 = vmul.f32 %v1783, %v1823
        %v1828 = vmul.f32 %v1784, %v1824
        %v1829 = vmul.f32 %v1785, %v1825
        %v1830 = vmul.f32 %v1782, %v1826
        %v1831 = vmul.f32 %v1783, %v1827
        %v1832 = vmul.f32 %v1784, %v1828
        %v1833 = vmul.f32 %v1785, %v1829
        %v1838 = vrot.slane %v1830, 1
        %v1839 = vrot.slane %v1831, 1
        %v1840 = vrot.slane %v1832, 1
        %v1841 = vrot.slane %v1833, 1
        %v1846 = vadd.f32 %v1612, %v1838
        %v1847 = vadd.f32 %v1613, %v1839
        %v1848 = vadd.f32 %v1614, %v1840
        %v1849 = vadd.f32 %v1615, %v1841
        %v1850 = vmul.f32 %v1794, %v1826
        %v1851 = vmul.f32 %v1795, %v1827
        %v1852 = vmul.f32 %v1796, %v1828
        %v1853 = vmul.f32 %v1797, %v1829
        %v1858 = vrot.slane %v1850, 1
        %v1859 = vrot.slane %v1851, 1
        %v1860 = vrot.slane %v1852, 1
        %v1861 = vrot.slane %v1853, 1
        %v1866 = vadd.f32 %v1620, %v1858
        %v1867 = vadd.f32 %v1621, %v1859
        %v1868 = vadd.f32 %v1622, %v1860
        %v1869 = vadd.f32 %v1623, %v1861
        %v1870 = vmul.f32 %v1806, %v1826
        %v1871 = vmul.f32 %v1807, %v1827
        %v1872 = vmul.f32 %v1808, %v1828
        %v1873 = vmul.f32 %v1809, %v1829
        %v1878 = vrot.slane %v1870, 1
        %v1879 = vrot.slane %v1871, 1
        %v1880 = vrot.slane %v1872, 1
        %v1881 = vrot.slane %v1873, 1
        %v1886 = vadd.f32 %v1628, %v1878
        %v1887 = vadd.f32 %v1629, %v1879
        %v1888 = vadd.f32 %v1630, %v1880
        %v1889 = vadd.f32 %v1631, %v1881
        %v1890 = vperm.slane %v1822, 1
        %v1891 = vperm.slane %v1823, 1
        %v1892 = vperm.slane %v1824, 1
        %v1893 = vperm.slane %v1825, 1
        %v1894 = vmul.f32 %v1746, %v1890
        %v1895 = vmul.f32 %v1747, %v1891
        %v1896 = vmul.f32 %v1748, %v1892
        %v1897 = vmul.f32 %v1749, %v1893
        %1902 = vst [vmem:[#allocation1] sm:$0xff] %v1894
        %1903 = vst [vmem:[#allocation1 + $0x9] sm:$0xff] %v1895
        %1904 = vst [vmem:[#allocation1 + $0x12] sm:$0xff] %v1896
        %1905 = vst [vmem:[#allocation1 + $0x1b] sm:$0xff] %v1897
        %s1906 = scalar_lea.vmem [#allocation1], 2
        %v1907 = vld [vmem:[%s1906] ss:$9 sm:$0xff]
        %s1908 = scalar_lea.vmem [#allocation1], 3
        %v1909 = vld [vmem:[%s1908] ss:$9 sm:$0xff]
        %s1910 = scalar_lea.vmem [#allocation1], 4
        %v1911 = vld [vmem:[%s1910] ss:$9 sm:$0xff]
        %s1912 = scalar_lea.vmem [#allocation1], 5
        %v1913 = vld [vmem:[%s1912] ss:$9 sm:$0xff]
        %s1914 = scalar_lea.vmem [#allocation1], 6
        %v1915 = vld [vmem:[%s1914] ss:$9 sm:$0xff]
        %s1916 = scalar_lea.vmem [#allocation1], 7
        %v1917 = vld [vmem:[%s1916] ss:$9 sm:$0xff]
        %v1918 = vperm.slane %v1907, 0
        %v1919 = vperm.slane %v1907, 1
        %v1920 = vperm.slane %v1907, 2
        %v1921 = vperm.slane %v1907, 3
        %v1922 = vperm.slane %v1909, 0
        %v1923 = vperm.slane %v1909, 1
        %v1924 = vperm.slane %v1909, 2
        %v1925 = vperm.slane %v1909, 3
        %v1926 = vperm.slane %v1911, 0
        %v1927 = vperm.slane %v1911, 1
        %v1928 = vperm.slane %v1911, 2
        %v1929 = vperm.slane %v1911, 3
        %v1930 = vperm.slane %v1913, 0
        %v1931 = vperm.slane %v1913, 1
        %v1932 = vperm.slane %v1913, 2
        %v1933 = vperm.slane %v1913, 3
        %v1934 = vperm.slane %v1915, 0
        %v1935 = vperm.slane %v1915, 1
        %v1936 = vperm.slane %v1915, 2
        %v1937 = vperm.slane %v1915, 3
        %v1938 = vperm.slane %v1917, 0
        %v1939 = vperm.slane %v1917, 1
        %v1940 = vperm.slane %v1917, 2
        %v1941 = vperm.slane %v1917, 3
        %v1966 = vmul.f32 %v1918, %v1746
        %v1967 = vmul.f32 %v1919, %v1747
        %v1968 = vmul.f32 %v1920, %v1748
        %v1969 = vmul.f32 %v1921, %v1749
        %v1970 = vmul.f32 %v1922, %v1746
        %v1971 = vmul.f32 %v1923, %v1747
        %v1972 = vmul.f32 %v1924, %v1748
        %v1973 = vmul.f32 %v1925, %v1749
        %v1974 = vmul.f32 %v1926, %v1746
        %v1975 = vmul.f32 %v1927, %v1747
        %v1976 = vmul.f32 %v1928, %v1748
        %v1977 = vmul.f32 %v1929, %v1749
        %v1978 = vmul.f32 %v1930, %v1746
        %v1979 = vmul.f32 %v1931, %v1747
        %v1980 = vmul.f32 %v1932, %v1748
        %v1981 = vmul.f32 %v1933, %v1749
        %v1982 = vmul.f32 %v1934, %v1746
        %v1983 = vmul.f32 %v1935, %v1747
        %v1984 = vmul.f32 %v1936, %v1748
        %v1985 = vmul.f32 %v1937, %v1749
        %v1986 = vmul.f32 %v1938, %v1746
        %v1987 = vmul.f32 %v1939, %v1747
        %v1988 = vmul.f32 %v1940, %v1748
        %v1989 = vmul.f32 %v1941, %v1749
        %v1990 = vsub.f32 %v1750, %v1966
        %v1991 = vsub.f32 %v1751, %v1967
        %v1992 = vsub.f32 %v1752, %v1968
        %v1993 = vsub.f32 %v1753, %v1969
        %v1994 = vsub.f32 %v1754, %v1970
        %v1995 = vsub.f32 %v1755, %v1971
        %v1996 = vsub.f32 %v1756, %v1972
        %v1997 = vsub.f32 %v1757, %v1973
        %v1998 = vsub.f32 %v1758, %v1974
        %v1999 = vsub.f32 %v1759, %v1975
        %v2000 = vsub.f32 %v1760, %v1976
        %v2001 = vsub.f32 %v1761, %v1977
        %v2002 = vsub.f32 %v1762, %v1978
        %v2003 = vsub.f32 %v1763, %v1979
        %v2004 = vsub.f32 %v1764, %v1980
        %v2005 = vsub.f32 %v1765, %v1981
        %v2006 = vsub.f32 %v1766, %v1982
        %v2007 = vsub.f32 %v1767, %v1983
        %v2008 = vsub.f32 %v1768, %v1984
        %v2009 = vsub.f32 %v1769, %v1985
        %v2010 = vsub.f32 %v1770, %v1986
        %v2011 = vsub.f32 %v1771, %v1987
        %v2012 = vsub.f32 %v1772, %v1988
        %v2013 = vsub.f32 %v1773, %v1989
        %v2014 = vperm.slane %v1782, 1
        %v2015 = vperm.slane %v1783, 1
        %v2016 = vperm.slane %v1784, 1
        %v2017 = vperm.slane %v1785, 1
        %v2018 = vmul.f32 %v1894, %v2014
        %v2019 = vmul.f32 %v1895, %v2015
        %v2020 = vmul.f32 %v1896, %v2016
        %v2021 = vmul.f32 %v1897, %v2017
        %v2022 = vsub.f32 %v1782, %v2018
        %v2023 = vsub.f32 %v1783, %v2019
        %v2024 = vsub.f32 %v1784, %v2020
        %v2025 = vsub.f32 %v1785, %v2021
        %v2026 = vperm.slane %v1794, 1
        %v2027 = vperm.slane %v1795, 1
        %v2028 = vperm.slane %v1796, 1
        %v2029 = vperm.slane %v1797, 1
        %v2030 = vmul.f32 %v1894, %v2026
        %v2031 = vmul.f32 %v1895, %v2027
        %v2032 = vmul.f32 %v1896, %v2028
        %v2033 = vmul.f32 %v1897, %v2029
        %v2034 = vsub.f32 %v1794, %v2030
        %v2035 = vsub.f32 %v1795, %v2031
        %v2036 = vsub.f32 %v1796, %v2032
        %v2037 = vsub.f32 %v1797, %v2033
        %v2038 = vperm.slane %v1806, 1
        %v2039 = vperm.slane %v1807, 1
        %v2040 = vperm.slane %v1808, 1
        %v2041 = vperm.slane %v1809, 1
        %v2042 = vmul.f32 %v1894, %v2038
        %v2043 = vmul.f32 %v1895, %v2039
        %v2044 = vmul.f32 %v1896, %v2040
        %v2045 = vmul.f32 %v1897, %v2041
        %v2046 = vsub.f32 %v1806, %v2042
        %v2047 = vsub.f32 %v1807, %v2043
        %v2048 = vsub.f32 %v1808, %v2044
        %v2049 = vsub.f32 %v1809, %v2045
        %v2050 = vrcp.pop %v1990
        %v2051 = vrcp.pop %v1991
        %v2052 = vrcp.pop %v1992
        %v2053 = vrcp.pop %v1993
        %v2054 = vmul.f32 %v1990, %v2050
        %v2055 = vmul.f32 %v1991, %v2051
        %v2056 = vmul.f32 %v1992, %v2052
        %v2057 = vmul.f32 %v1993, %v2053
        %v2058 = vsub.f32 2.0, %v2054
        %v2059 = vsub.f32 2.0, %v2055
        %v2060 = vsub.f32 2.0, %v2056
        %v2061 = vsub.f32 2.0, %v2057
        %v2062 = vmul.f32 %v2050, %v2058
        %v2063 = vmul.f32 %v2051, %v2059
        %v2064 = vmul.f32 %v2052, %v2060
        %v2065 = vmul.f32 %v2053, %v2061
        %v2066 = vmul.f32 %v2022, %v2062
        %v2067 = vmul.f32 %v2023, %v2063
        %v2068 = vmul.f32 %v2024, %v2064
        %v2069 = vmul.f32 %v2025, %v2065
        %v2070 = vmul.f32 %v2022, %v2066
        %v2071 = vmul.f32 %v2023, %v2067
        %v2072 = vmul.f32 %v2024, %v2068
        %v2073 = vmul.f32 %v2025, %v2069
        %v2078 = vrot.slane %v2070, 2
        %v2079 = vrot.slane %v2071, 2
        %v2080 = vrot.slane %v2072, 2
        %v2081 = vrot.slane %v2073, 2
        %v2086 = vadd.f32 %v1846, %v2078
        %v2087 = vadd.f32 %v1847, %v2079
        %v2088 = vadd.f32 %v1848, %v2080
        %v2089 = vadd.f32 %v1849, %v2081
        %v2090 = vmul.f32 %v2034, %v2066
        %v2091 = vmul.f32 %v2035, %v2067
        %v2092 = vmul.f32 %v2036, %v2068
        %v2093 = vmul.f32 %v2037, %v2069
        %v2098 = vrot.slane %v2090, 2
        %v2099 = vrot.slane %v2091, 2
        %v2100 = vrot.slane %v2092, 2
        %v2101 = vrot.slane %v2093, 2
        %v2106 = vadd.f32 %v1866, %v2098
        %v2107 = vadd.f32 %v1867, %v2099
        %v2108 = vadd.f32 %v1868, %v2100
        %v2109 = vadd.f32 %v1869, %v2101
        %v2110 = vmul.f32 %v2046, %v2066
        %v2111 = vmul.f32 %v2047, %v2067
        %v2112 = vmul.f32 %v2048, %v2068
        %v2113 = vmul.f32 %v2049, %v2069
        %v2118 = vrot.slane %v2110, 2
        %v2119 = vrot.slane %v2111, 2
        %v2120 = vrot.slane %v2112, 2
        %v2121 = vrot.slane %v2113, 2
        %v2126 = vadd.f32 %v1886, %v2118
        %v2127 = vadd.f32 %v1887, %v2119
        %v2128 = vadd.f32 %v1888, %v2120
        %v2129 = vadd.f32 %v1889, %v2121
        %v2130 = vperm.slane %v2062, 2
        %v2131 = vperm.slane %v2063, 2
        %v2132 = vperm.slane %v2064, 2
        %v2133 = vperm.slane %v2065, 2
        %v2134 = vmul.f32 %v1990, %v2130
        %v2135 = vmul.f32 %v1991, %v2131
        %v2136 = vmul.f32 %v1992, %v2132
        %v2137 = vmul.f32 %v1993, %v2133
        %2142 = vst [vmem:[#allocation1] sm:$0xff] %v2134
        %2143 = vst [vmem:[#allocation1 + $0x9] sm:$0xff] %v2135
        %2144 = vst [vmem:[#allocation1 + $0x12] sm:$0xff] %v2136
        %2145 = vst [vmem:[#allocation1 + $0x1b] sm:$0xff] %v2137
        %s2146 = scalar_lea.vmem [#allocation1], 3
        %v2147 = vld [vmem:[%s2146] ss:$9 sm:$0xff]
        %s2148 = scalar_lea.vmem [#allocation1], 4
        %v2149 = vld [vmem:[%s2148] ss:$9 sm:$0xff]
        %s2150 = scalar_lea.vmem [#allocation1], 5
        %v2151 = vld [vmem:[%s2150] ss:$9 sm:$0xff]
        %s2152 = scalar_lea.vmem [#allocation1], 6
        %v2153 = vld [vmem:[%s2152] ss:$9 sm:$0xff]
        %s2154 = scalar_lea.vmem [#allocation1], 7
        %v2155 = vld [vmem:[%s2154] ss:$9 sm:$0xff]
        %v2156 = vperm.slane %v2147, 0
        %v2157 = vperm.slane %v2147, 1
        %v2158 = vperm.slane %v2147, 2
        %v2159 = vperm.slane %v2147, 3
        %v2160 = vperm.slane %v2149, 0
        %v2161 = vperm.slane %v2149, 1
        %v2162 = vperm.slane %v2149, 2
        %v2163 = vperm.slane %v2149, 3
        %v2164 = vperm.slane %v2151, 0
        %v2165 = vperm.slane %v2151, 1
        %v2166 = vperm.slane %v2151, 2
        %v2167 = vperm.slane %v2151, 3
        %v2168 = vperm.slane %v2153, 0
        %v2169 = vperm.slane %v2153, 1
        %v2170 = vperm.slane %v2153, 2
        %v2171 = vperm.slane %v2153, 3
        %v2172 = vperm.slane %v2155, 0
        %v2173 = vperm.slane %v2155, 1
        %v2174 = vperm.slane %v2155, 2
        %v2175 = vperm.slane %v2155, 3
        %v2196 = vmul.f32 %v2156, %v1990
        %v2197 = vmul.f32 %v2157, %v1991
        %v2198 = vmul.f32 %v2158, %v1992
        %v2199 = vmul.f32 %v2159, %v1993
        %v2200 = vmul.f32 %v2160, %v1990
        %v2201 = vmul.f32 %v2161, %v1991
        %v2202 = vmul.f32 %v2162, %v1992
        %v2203 = vmul.f32 %v2163, %v1993
        %v2204 = vmul.f32 %v2164, %v1990
        %v2205 = vmul.f32 %v2165, %v1991
        %v2206 = vmul.f32 %v2166, %v1992
        %v2207 = vmul.f32 %v2167, %v1993
        %v2208 = vmul.f32 %v2168, %v1990
        %v2209 = vmul.f32 %v2169, %v1991
        %v2210 = vmul.f32 %v2170, %v1992
        %v2211 = vmul.f32 %v2171, %v1993
        %v2212 = vmul.f32 %v2172, %v1990
        %v2213 = vmul.f32 %v2173, %v1991
        %v2214 = vmul.f32 %v2174, %v1992
        %v2215 = vmul.f32 %v2175, %v1993
        %v2216 = vsub.f32 %v1994, %v2196
        %v2217 = vsub.f32 %v1995, %v2197
        %v2218 = vsub.f32 %v1996, %v2198
        %v2219 = vsub.f32 %v1997, %v2199
        %v2220 = vsub.f32 %v1998, %v2200
        %v2221 = vsub.f32 %v1999, %v2201
        %v2222 = vsub.f32 %v2000, %v2202
        %v2223 = vsub.f32 %v2001, %v2203
        %v2224 = vsub.f32 %v2002, %v2204
        %v2225 = vsub.f32 %v2003, %v2205
        %v2226 = vsub.f32 %v2004, %v2206
        %v2227 = vsub.f32 %v2005, %v2207
        %v2228 = vsub.f32 %v2006, %v2208
        %v2229 = vsub.f32 %v2007, %v2209
        %v2230 = vsub.f32 %v2008, %v2210
        %v2231 = vsub.f32 %v2009, %v2211
        %v2232 = vsub.f32 %v2010, %v2212
        %v2233 = vsub.f32 %v2011, %v2213
        %v2234 = vsub.f32 %v2012, %v2214
        %v2235 = vsub.f32 %v2013, %v2215
        %v2236 = vperm.slane %v2022, 2
        %v2237 = vperm.slane %v2023, 2
        %v2238 = vperm.slane %v2024, 2
        %v2239 = vperm.slane %v2025, 2
        %v2240 = vmul.f32 %v2134, %v2236
        %v2241 = vmul.f32 %v2135, %v2237
        %v2242 = vmul.f32 %v2136, %v2238
        %v2243 = vmul.f32 %v2137, %v2239
        %v2244 = vsub.f32 %v2022, %v2240
        %v2245 = vsub.f32 %v2023, %v2241
        %v2246 = vsub.f32 %v2024, %v2242
        %v2247 = vsub.f32 %v2025, %v2243
        %v2248 = vperm.slane %v2034, 2
        %v2249 = vperm.slane %v2035, 2
        %v2250 = vperm.slane %v2036, 2
        %v2251 = vperm.slane %v2037, 2
        %v2252 = vmul.f32 %v2134, %v2248
        %v2253 = vmul.f32 %v2135, %v2249
        %v2254 = vmul.f32 %v2136, %v2250
        %v2255 = vmul.f32 %v2137, %v2251
        %v2256 = vsub.f32 %v2034, %v2252
        %v2257 = vsub.f32 %v2035, %v2253
        %v2258 = vsub.f32 %v2036, %v2254
        %v2259 = vsub.f32 %v2037, %v2255
        %v2260 = vperm.slane %v2046, 2
        %v2261 = vperm.slane %v2047, 2
        %v2262 = vperm.slane %v2048, 2
        %v2263 = vperm.slane %v2049, 2
        %v2264 = vmul.f32 %v2134, %v2260
        %v2265 = vmul.f32 %v2135, %v2261
        %v2266 = vmul.f32 %v2136, %v2262
        %v2267 = vmul.f32 %v2137, %v2263
        %v2268 = vsub.f32 %v2046, %v2264
        %v2269 = vsub.f32 %v2047, %v2265
        %v2270 = vsub.f32 %v2048, %v2266
        %v2271 = vsub.f32 %v2049, %v2267
        %v2272 = vrcp.pop %v2216
        %v2273 = vrcp.pop %v2217
        %v2274 = vrcp.pop %v2218
        %v2275 = vrcp.pop %v2219
        %v2276 = vmul.f32 %v2216, %v2272
        %v2277 = vmul.f32 %v2217, %v2273
        %v2278 = vmul.f32 %v2218, %v2274
        %v2279 = vmul.f32 %v2219, %v2275
        %v2280 = vsub.f32 2.0, %v2276
        %v2281 = vsub.f32 2.0, %v2277
        %v2282 = vsub.f32 2.0, %v2278
        %v2283 = vsub.f32 2.0, %v2279
        %v2284 = vmul.f32 %v2272, %v2280
        %v2285 = vmul.f32 %v2273, %v2281
        %v2286 = vmul.f32 %v2274, %v2282
        %v2287 = vmul.f32 %v2275, %v2283
        %v2288 = vmul.f32 %v2244, %v2284
        %v2289 = vmul.f32 %v2245, %v2285
        %v2290 = vmul.f32 %v2246, %v2286
        %v2291 = vmul.f32 %v2247, %v2287
        %v2292 = vmul.f32 %v2244, %v2288
        %v2293 = vmul.f32 %v2245, %v2289
        %v2294 = vmul.f32 %v2246, %v2290
        %v2295 = vmul.f32 %v2247, %v2291
        %v2300 = vrot.slane %v2292, 3
        %v2301 = vrot.slane %v2293, 3
        %v2302 = vrot.slane %v2294, 3
        %v2303 = vrot.slane %v2295, 3
        %v2308 = vadd.f32 %v2086, %v2300
        %v2309 = vadd.f32 %v2087, %v2301
        %v2310 = vadd.f32 %v2088, %v2302
        %v2311 = vadd.f32 %v2089, %v2303
        %v2312 = vmul.f32 %v2256, %v2288
        %v2313 = vmul.f32 %v2257, %v2289
        %v2314 = vmul.f32 %v2258, %v2290
        %v2315 = vmul.f32 %v2259, %v2291
        %v2320 = vrot.slane %v2312, 3
        %v2321 = vrot.slane %v2313, 3
        %v2322 = vrot.slane %v2314, 3
        %v2323 = vrot.slane %v2315, 3
        %v2328 = vadd.f32 %v2106, %v2320
        %v2329 = vadd.f32 %v2107, %v2321
        %v2330 = vadd.f32 %v2108, %v2322
        %v2331 = vadd.f32 %v2109, %v2323
        %v2332 = vmul.f32 %v2268, %v2288
        %v2333 = vmul.f32 %v2269, %v2289
        %v2334 = vmul.f32 %v2270, %v2290
        %v2335 = vmul.f32 %v2271, %v2291
        %v2340 = vrot.slane %v2332, 3
        %v2341 = vrot.slane %v2333, 3
        %v2342 = vrot.slane %v2334, 3
        %v2343 = vrot.slane %v2335, 3
        %v2348 = vadd.f32 %v2126, %v2340
        %v2349 = vadd.f32 %v2127, %v2341
        %v2350 = vadd.f32 %v2128, %v2342
        %v2351 = vadd.f32 %v2129, %v2343
        %v2352 = vperm.slane %v2284, 3
        %v2353 = vperm.slane %v2285, 3
        %v2354 = vperm.slane %v2286, 3
        %v2355 = vperm.slane %v2287, 3
        %v2356 = vmul.f32 %v2216, %v2352
        %v2357 = vmul.f32 %v2217, %v2353
        %v2358 = vmul.f32 %v2218, %v2354
        %v2359 = vmul.f32 %v2219, %v2355
        %2364 = vst [vmem:[#allocation1] sm:$0xff] %v2356
        %2365 = vst [vmem:[#allocation1 + $0x9] sm:$0xff] %v2357
        %2366 = vst [vmem:[#allocation1 + $0x12] sm:$0xff] %v2358
        %2367 = vst [vmem:[#allocation1 + $0x1b] sm:$0xff] %v2359
        %s2368 = scalar_lea.vmem [#allocation1], 4
        %v2369 = vld [vmem:[%s2368] ss:$9 sm:$0xff]
        %s2370 = scalar_lea.vmem [#allocation1], 5
        %v2371 = vld [vmem:[%s2370] ss:$9 sm:$0xff]
        %s2372 = scalar_lea.vmem [#allocation1], 6
        %v2373 = vld [vmem:[%s2372] ss:$9 sm:$0xff]
        %s2374 = scalar_lea.vmem [#allocation1], 7
        %v2375 = vld [vmem:[%s2374] ss:$9 sm:$0xff]
        %v2376 = vperm.slane %v2369, 0
        %v2377 = vperm.slane %v2369, 1
        %v2378 = vperm.slane %v2369, 2
        %v2379 = vperm.slane %v2369, 3
        %v2380 = vperm.slane %v2371, 0
        %v2381 = vperm.slane %v2371, 1
        %v2382 = vperm.slane %v2371, 2
        %v2383 = vperm.slane %v2371, 3
        %v2384 = vperm.slane %v2373, 0
        %v2385 = vperm.slane %v2373, 1
        %v2386 = vperm.slane %v2373, 2
        %v2387 = vperm.slane %v2373, 3
        %v2388 = vperm.slane %v2375, 0
        %v2389 = vperm.slane %v2375, 1
        %v2390 = vperm.slane %v2375, 2
        %v2391 = vperm.slane %v2375, 3
        %v2408 = vmul.f32 %v2376, %v2216
        %v2409 = vmul.f32 %v2377, %v2217
        %v2410 = vmul.f32 %v2378, %v2218
        %v2411 = vmul.f32 %v2379, %v2219
        %v2412 = vmul.f32 %v2380, %v2216
        %v2413 = vmul.f32 %v2381, %v2217
        %v2414 = vmul.f32 %v2382, %v2218
        %v2415 = vmul.f32 %v2383, %v2219
        %v2416 = vmul.f32 %v2384, %v2216
        %v2417 = vmul.f32 %v2385, %v2217
        %v2418 = vmul.f32 %v2386, %v2218
        %v2419 = vmul.f32 %v2387, %v2219
        %v2420 = vmul.f32 %v2388, %v2216
        %v2421 = vmul.f32 %v2389, %v2217
        %v2422 = vmul.f32 %v2390, %v2218
        %v2423 = vmul.f32 %v2391, %v2219
        %v2424 = vsub.f32 %v2220, %v2408
        %v2425 = vsub.f32 %v2221, %v2409
        %v2426 = vsub.f32 %v2222, %v2410
        %v2427 = vsub.f32 %v2223, %v2411
        %v2428 = vsub.f32 %v2224, %v2412
        %v2429 = vsub.f32 %v2225, %v2413
        %v2430 = vsub.f32 %v2226, %v2414
        %v2431 = vsub.f32 %v2227, %v2415
        %v2432 = vsub.f32 %v2228, %v2416
        %v2433 = vsub.f32 %v2229, %v2417
        %v2434 = vsub.f32 %v2230, %v2418
        %v2435 = vsub.f32 %v2231, %v2419
        %v2436 = vsub.f32 %v2232, %v2420
        %v2437 = vsub.f32 %v2233, %v2421
        %v2438 = vsub.f32 %v2234, %v2422
        %v2439 = vsub.f32 %v2235, %v2423
        %v2440 = vperm.slane %v2244, 3
        %v2441 = vperm.slane %v2245, 3
        %v2442 = vperm.slane %v2246, 3
        %v2443 = vperm.slane %v2247, 3
        %v2444 = vmul.f32 %v2356, %v2440
        %v2445 = vmul.f32 %v2357, %v2441
        %v2446 = vmul.f32 %v2358, %v2442
        %v2447 = vmul.f32 %v2359, %v2443
        %v2448 = vsub.f32 %v2244, %v2444
        %v2449 = vsub.f32 %v2245, %v2445
        %v2450 = vsub.f32 %v2246, %v2446
        %v2451 = vsub.f32 %v2247, %v2447
        %v2452 = vperm.slane %v2256, 3
        %v2453 = vperm.slane %v2257, 3
        %v2454 = vperm.slane %v2258, 3
        %v2455 = vperm.slane %v2259, 3
        %v2456 = vmul.f32 %v2356, %v2452
        %v2457 = vmul.f32 %v2357, %v2453
        %v2458 = vmul.f32 %v2358, %v2454
        %v2459 = vmul.f32 %v2359, %v2455
        %v2460 = vsub.f32 %v2256, %v2456
        %v2461 = vsub.f32 %v2257, %v2457
        %v2462 = vsub.f32 %v2258, %v2458
        %v2463 = vsub.f32 %v2259, %v2459
        %v2464 = vperm.slane %v2268, 3
        %v2465 = vperm.slane %v2269, 3
        %v2466 = vperm.slane %v2270, 3
        %v2467 = vperm.slane %v2271, 3
        %v2468 = vmul.f32 %v2356, %v2464
        %v2469 = vmul.f32 %v2357, %v2465
        %v2470 = vmul.f32 %v2358, %v2466
        %v2471 = vmul.f32 %v2359, %v2467
        %v2472 = vsub.f32 %v2268, %v2468
        %v2473 = vsub.f32 %v2269, %v2469
        %v2474 = vsub.f32 %v2270, %v2470
        %v2475 = vsub.f32 %v2271, %v2471
        %v2476 = vrcp.pop %v2424
        %v2477 = vrcp.pop %v2425
        %v2478 = vrcp.pop %v2426
        %v2479 = vrcp.pop %v2427
        %v2480 = vmul.f32 %v2424, %v2476
        %v2481 = vmul.f32 %v2425, %v2477
        %v2482 = vmul.f32 %v2426, %v2478
        %v2483 = vmul.f32 %v2427, %v2479
        %v2484 = vsub.f32 2.0, %v2480
        %v2485 = vsub.f32 2.0, %v2481
        %v2486 = vsub.f32 2.0, %v2482
        %v2487 = vsub.f32 2.0, %v2483
        %v2488 = vmul.f32 %v2476, %v2484
        %v2489 = vmul.f32 %v2477, %v2485
        %v2490 = vmul.f32 %v2478, %v2486
        %v2491 = vmul.f32 %v2479, %v2487
        %v2492 = vmul.f32 %v2448, %v2488
        %v2493 = vmul.f32 %v2449, %v2489
        %v2494 = vmul.f32 %v2450, %v2490
        %v2495 = vmul.f32 %v2451, %v2491
        %v2496 = vmul.f32 %v2448, %v2492
        %v2497 = vmul.f32 %v2449, %v2493
        %v2498 = vmul.f32 %v2450, %v2494
        %v2499 = vmul.f32 %v2451, %v2495
        %v2504 = vrot.slane %v2496, 4
        %v2505 = vrot.slane %v2497, 4
        %v2506 = vrot.slane %v2498, 4
        %v2507 = vrot.slane %v2499, 4
        %v2512 = vadd.f32 %v2308, %v2504
        %v2513 = vadd.f32 %v2309, %v2505
        %v2514 = vadd.f32 %v2310, %v2506
        %v2515 = vadd.f32 %v2311, %v2507
        %v2516 = vmul.f32 %v2460, %v2492
        %v2517 = vmul.f32 %v2461, %v2493
        %v2518 = vmul.f32 %v2462, %v2494
        %v2519 = vmul.f32 %v2463, %v2495
        %v2524 = vrot.slane %v2516, 4
        %v2525 = vrot.slane %v2517, 4
        %v2526 = vrot.slane %v2518, 4
        %v2527 = vrot.slane %v2519, 4
        %v2532 = vadd.f32 %v2328, %v2524
        %v2533 = vadd.f32 %v2329, %v2525
        %v2534 = vadd.f32 %v2330, %v2526
        %v2535 = vadd.f32 %v2331, %v2527
        %v2536 = vmul.f32 %v2472, %v2492
        %v2537 = vmul.f32 %v2473, %v2493
        %v2538 = vmul.f32 %v2474, %v2494
        %v2539 = vmul.f32 %v2475, %v2495
        %v2544 = vrot.slane %v2536, 4
        %v2545 = vrot.slane %v2537, 4
        %v2546 = vrot.slane %v2538, 4
        %v2547 = vrot.slane %v2539, 4
        %v2552 = vadd.f32 %v2348, %v2544
        %v2553 = vadd.f32 %v2349, %v2545
        %v2554 = vadd.f32 %v2350, %v2546
        %v2555 = vadd.f32 %v2351, %v2547
        %v2556 = vperm.slane %v2488, 4
        %v2557 = vperm.slane %v2489, 4
        %v2558 = vperm.slane %v2490, 4
        %v2559 = vperm.slane %v2491, 4
        %v2560 = vmul.f32 %v2424, %v2556
        %v2561 = vmul.f32 %v2425, %v2557
        %v2562 = vmul.f32 %v2426, %v2558
        %v2563 = vmul.f32 %v2427, %v2559
        %2568 = vst [vmem:[#allocation1] sm:$0xff] %v2560
        %2569 = vst [vmem:[#allocation1 + $0x9] sm:$0xff] %v2561
        %2570 = vst [vmem:[#allocation1 + $0x12] sm:$0xff] %v2562
        %2571 = vst [vmem:[#allocation1 + $0x1b] sm:$0xff] %v2563
        %s2572 = scalar_lea.vmem [#allocation1], 5
        %v2573 = vld [vmem:[%s2572] ss:$9 sm:$0xff]
        %s2574 = scalar_lea.vmem [#allocation1], 6
        %v2575 = vld [vmem:[%s2574] ss:$9 sm:$0xff]
        %s2576 = scalar_lea.vmem [#allocation1], 7
        %v2577 = vld [vmem:[%s2576] ss:$9 sm:$0xff]
        %v2578 = vperm.slane %v2573, 0
        %v2579 = vperm.slane %v2573, 1
        %v2580 = vperm.slane %v2573, 2
        %v2581 = vperm.slane %v2573, 3
        %v2582 = vperm.slane %v2575, 0
        %v2583 = vperm.slane %v2575, 1
        %v2584 = vperm.slane %v2575, 2
        %v2585 = vperm.slane %v2575, 3
        %v2586 = vperm.slane %v2577, 0
        %v2587 = vperm.slane %v2577, 1
        %v2588 = vperm.slane %v2577, 2
        %v2589 = vperm.slane %v2577, 3
        %v2602 = vmul.f32 %v2578, %v2424
        %v2603 = vmul.f32 %v2579, %v2425
        %v2604 = vmul.f32 %v2580, %v2426
        %v2605 = vmul.f32 %v2581, %v2427
        %v2606 = vmul.f32 %v2582, %v2424
        %v2607 = vmul.f32 %v2583, %v2425
        %v2608 = vmul.f32 %v2584, %v2426
        %v2609 = vmul.f32 %v2585, %v2427
        %v2610 = vmul.f32 %v2586, %v2424
        %v2611 = vmul.f32 %v2587, %v2425
        %v2612 = vmul.f32 %v2588, %v2426
        %v2613 = vmul.f32 %v2589, %v2427
        %v2614 = vsub.f32 %v2428, %v2602
        %v2615 = vsub.f32 %v2429, %v2603
        %v2616 = vsub.f32 %v2430, %v2604
        %v2617 = vsub.f32 %v2431, %v2605
        %v2618 = vsub.f32 %v2432, %v2606
        %v2619 = vsub.f32 %v2433, %v2607
        %v2620 = vsub.f32 %v2434, %v2608
        %v2621 = vsub.f32 %v2435, %v2609
        %v2622 = vsub.f32 %v2436, %v2610
        %v2623 = vsub.f32 %v2437, %v2611
        %v2624 = vsub.f32 %v2438, %v2612
        %v2625 = vsub.f32 %v2439, %v2613
        %v2626 = vperm.slane %v2448, 4
        %v2627 = vperm.slane %v2449, 4
        %v2628 = vperm.slane %v2450, 4
        %v2629 = vperm.slane %v2451, 4
        %v2630 = vmul.f32 %v2560, %v2626
        %v2631 = vmul.f32 %v2561, %v2627
        %v2632 = vmul.f32 %v2562, %v2628
        %v2633 = vmul.f32 %v2563, %v2629
        %v2634 = vsub.f32 %v2448, %v2630
        %v2635 = vsub.f32 %v2449, %v2631
        %v2636 = vsub.f32 %v2450, %v2632
        %v2637 = vsub.f32 %v2451, %v2633
        %v2638 = vperm.slane %v2460, 4
        %v2639 = vperm.slane %v2461, 4
        %v2640 = vperm.slane %v2462, 4
        %v2641 = vperm.slane %v2463, 4
        %v2642 = vmul.f32 %v2560, %v2638
        %v2643 = vmul.f32 %v2561, %v2639
        %v2644 = vmul.f32 %v2562, %v2640
        %v2645 = vmul.f32 %v2563, %v2641
        %v2646 = vsub.f32 %v2460, %v2642
        %v2647 = vsub.f32 %v2461, %v2643
        %v2648 = vsub.f32 %v2462, %v2644
        %v2649 = vsub.f32 %v2463, %v2645
        %v2650 = vperm.slane %v2472, 4
        %v2651 = vperm.slane %v2473, 4
        %v2652 = vperm.slane %v2474, 4
        %v2653 = vperm.slane %v2475, 4
        %v2654 = vmul.f32 %v2560, %v2650
        %v2655 = vmul.f32 %v2561, %v2651
        %v2656 = vmul.f32 %v2562, %v2652
        %v2657 = vmul.f32 %v2563, %v2653
        %v2658 = vsub.f32 %v2472, %v2654
        %v2659 = vsub.f32 %v2473, %v2655
        %v2660 = vsub.f32 %v2474, %v2656
        %v2661 = vsub.f32 %v2475, %v2657
        %v2662 = vrcp.pop %v2614
        %v2663 = vrcp.pop %v2615
        %v2664 = vrcp.pop %v2616
        %v2665 = vrcp.pop %v2617
        %v2666 = vmul.f32 %v2614, %v2662
        %v2667 = vmul.f32 %v2615, %v2663
        %v2668 = vmul.f32 %v2616, %v2664
        %v2669 = vmul.f32 %v2617, %v2665
        %v2670 = vsub.f32 2.0, %v2666
        %v2671 = vsub.f32 2.0, %v2667
        %v2672 = vsub.f32 2.0, %v2668
        %v2673 = vsub.f32 2.0, %v2669
        %v2674 = vmul.f32 %v2662, %v2670
        %v2675 = vmul.f32 %v2663, %v2671
        %v2676 = vmul.f32 %v2664, %v2672
        %v2677 = vmul.f32 %v2665, %v2673
        %v2678 = vmul.f32 %v2634, %v2674
        %v2679 = vmul.f32 %v2635, %v2675
        %v2680 = vmul.f32 %v2636, %v2676
        %v2681 = vmul.f32 %v2637, %v2677
        %v2682 = vmul.f32 %v2634, %v2678
        %v2683 = vmul.f32 %v2635, %v2679
        %v2684 = vmul.f32 %v2636, %v2680
        %v2685 = vmul.f32 %v2637, %v2681
        %v2690 = vrot.slane %v2682, 5
        %v2691 = vrot.slane %v2683, 5
        %v2692 = vrot.slane %v2684, 5
        %v2693 = vrot.slane %v2685, 5
        %v2698 = vadd.f32 %v2512, %v2690
        %v2699 = vadd.f32 %v2513, %v2691
        %v2700 = vadd.f32 %v2514, %v2692
        %v2701 = vadd.f32 %v2515, %v2693
        %v2702 = vmul.f32 %v2646, %v2678
        %v2703 = vmul.f32 %v2647, %v2679
        %v2704 = vmul.f32 %v2648, %v2680
        %v2705 = vmul.f32 %v2649, %v2681
        %v2710 = vrot.slane %v2702, 5
        %v2711 = vrot.slane %v2703, 5
        %v2712 = vrot.slane %v2704, 5
        %v2713 = vrot.slane %v2705, 5
        %v2718 = vadd.f32 %v2532, %v2710
        %v2719 = vadd.f32 %v2533, %v2711
        %v2720 = vadd.f32 %v2534, %v2712
        %v2721 = vadd.f32 %v2535, %v2713
        %v2722 = vmul.f32 %v2658, %v2678
        %v2723 = vmul.f32 %v2659, %v2679
        %v2724 = vmul.f32 %v2660, %v2680
        %v2725 = vmul.f32 %v2661, %v2681
        %v2730 = vrot.slane %v2722, 5
        %v2731 = vrot.slane %v2723, 5
        %v2732 = vrot.slane %v2724, 5
        %v2733 = vrot.slane %v2725, 5
        %v2738 = vadd.f32 %v2552, %v2730
        %v2739 = vadd.f32 %v2553, %v2731
        %v2740 = vadd.f32 %v2554, %v2732
        %v2741 = vadd.f32 %v2555, %v2733
        %v2742 = vperm.slane %v2674, 5
        %v2743 = vperm.slane %v2675, 5
        %v2744 = vperm.slane %v2676, 5
        %v2745 = vperm.slane %v2677, 5
        %v2746 = vmul.f32 %v2614, %v2742
        %v2747 = vmul.f32 %v2615, %v2743
        %v2748 = vmul.f32 %v2616, %v2744
        %v2749 = vmul.f32 %v2617, %v2745
        %2754 = vst [vmem:[#allocation1] sm:$0xff] %v2746
        %2755 = vst [vmem:[#allocation1 + $0x9] sm:$0xff] %v2747
        %2756 = vst [vmem:[#allocation1 + $0x12] sm:$0xff] %v2748
        %2757 = vst [vmem:[#allocation1 + $0x1b] sm:$0xff] %v2749
        %s2758 = scalar_lea.vmem [#allocation1], 6
        %v2759 = vld [vmem:[%s2758] ss:$9 sm:$0xff]
        %s2760 = scalar_lea.vmem [#allocation1], 7
        %v2761 = vld [vmem:[%s2760] ss:$9 sm:$0xff]
        %v2762 = vperm.slane %v2759, 0
        %v2763 = vperm.slane %v2759, 1
        %v2764 = vperm.slane %v2759, 2
        %v2765 = vperm.slane %v2759, 3
        %v2766 = vperm.slane %v2761, 0
        %v2767 = vperm.slane %v2761, 1
        %v2768 = vperm.slane %v2761, 2
        %v2769 = vperm.slane %v2761, 3
        %v2778 = vmul.f32 %v2762, %v2614
        %v2779 = vmul.f32 %v2763, %v2615
        %v2780 = vmul.f32 %v2764, %v2616
        %v2781 = vmul.f32 %v2765, %v2617
        %v2782 = vmul.f32 %v2766, %v2614
        %v2783 = vmul.f32 %v2767, %v2615
        %v2784 = vmul.f32 %v2768, %v2616
        %v2785 = vmul.f32 %v2769, %v2617
        %v2786 = vsub.f32 %v2618, %v2778
        %v2787 = vsub.f32 %v2619, %v2779
        %v2788 = vsub.f32 %v2620, %v2780
        %v2789 = vsub.f32 %v2621, %v2781
        %v2790 = vsub.f32 %v2622, %v2782
        %v2791 = vsub.f32 %v2623, %v2783
        %v2792 = vsub.f32 %v2624, %v2784
        %v2793 = vsub.f32 %v2625, %v2785
        %v2794 = vperm.slane %v2634, 5
        %v2795 = vperm.slane %v2635, 5
        %v2796 = vperm.slane %v2636, 5
        %v2797 = vperm.slane %v2637, 5
        %v2798 = vmul.f32 %v2746, %v2794
        %v2799 = vmul.f32 %v2747, %v2795
        %v2800 = vmul.f32 %v2748, %v2796
        %v2801 = vmul.f32 %v2749, %v2797
        %v2802 = vsub.f32 %v2634, %v2798
        %v2803 = vsub.f32 %v2635, %v2799
        %v2804 = vsub.f32 %v2636, %v2800
        %v2805 = vsub.f32 %v2637, %v2801
        %v2806 = vperm.slane %v2646, 5
        %v2807 = vperm.slane %v2647, 5
        %v2808 = vperm.slane %v2648, 5
        %v2809 = vperm.slane %v2649, 5
        %v2810 = vmul.f32 %v2746, %v2806
        %v2811 = vmul.f32 %v2747, %v2807
        %v2812 = vmul.f32 %v2748, %v2808
        %v2813 = vmul.f32 %v2749, %v2809
        %v2814 = vsub.f32 %v2646, %v2810
        %v2815 = vsub.f32 %v2647, %v2811
        %v2816 = vsub.f32 %v2648, %v2812
        %v2817 = vsub.f32 %v2649, %v2813
        %v2818 = vperm.slane %v2658, 5
        %v2819 = vperm.slane %v2659, 5
        %v2820 = vperm.slane %v2660, 5
        %v2821 = vperm.slane %v2661, 5
        %v2822 = vmul.f32 %v2746, %v2818
        %v2823 = vmul.f32 %v2747, %v2819
        %v2824 = vmul.f32 %v2748, %v2820
        %v2825 = vmul.f32 %v2749, %v2821
        %v2826 = vsub.f32 %v2658, %v2822
        %v2827 = vsub.f32 %v2659, %v2823
        %v2828 = vsub.f32 %v2660, %v2824
        %v2829 = vsub.f32 %v2661, %v2825
        %v2830 = vrcp.pop %v2786
        %v2831 = vrcp.pop %v2787
        %v2832 = vrcp.pop %v2788
        %v2833 = vrcp.pop %v2789
        %v2834 = vmul.f32 %v2786, %v2830
        %v2835 = vmul.f32 %v2787, %v2831
        %v2836 = vmul.f32 %v2788, %v2832
        %v2837 = vmul.f32 %v2789, %v2833
        %v2838 = vsub.f32 2.0, %v2834
        %v2839 = vsub.f32 2.0, %v2835
        %v2840 = vsub.f32 2.0, %v2836
        %v2841 = vsub.f32 2.0, %v2837
        %v2842 = vmul.f32 %v2830, %v2838
        %v2843 = vmul.f32 %v2831, %v2839
        %v2844 = vmul.f32 %v2832, %v2840
        %v2845 = vmul.f32 %v2833, %v2841
        %v2846 = vmul.f32 %v2802, %v2842
        %v2847 = vmul.f32 %v2803, %v2843
        %v2848 = vmul.f32 %v2804, %v2844
        %v2849 = vmul.f32 %v2805, %v2845
        %v2850 = vmul.f32 %v2802, %v2846
        %v2851 = vmul.f32 %v2803, %v2847
        %v2852 = vmul.f32 %v2804, %v2848
        %v2853 = vmul.f32 %v2805, %v2849
        %v2858 = vrot.slane %v2850, 6
        %v2859 = vrot.slane %v2851, 6
        %v2860 = vrot.slane %v2852, 6
        %v2861 = vrot.slane %v2853, 6
        %v2866 = vadd.f32 %v2698, %v2858
        %v2867 = vadd.f32 %v2699, %v2859
        %v2868 = vadd.f32 %v2700, %v2860
        %v2869 = vadd.f32 %v2701, %v2861
        %v2870 = vmul.f32 %v2814, %v2846
        %v2871 = vmul.f32 %v2815, %v2847
        %v2872 = vmul.f32 %v2816, %v2848
        %v2873 = vmul.f32 %v2817, %v2849
        %v2878 = vrot.slane %v2870, 6
        %v2879 = vrot.slane %v2871, 6
        %v2880 = vrot.slane %v2872, 6
        %v2881 = vrot.slane %v2873, 6
        %v2886 = vadd.f32 %v2718, %v2878
        %v2887 = vadd.f32 %v2719, %v2879
        %v2888 = vadd.f32 %v2720, %v2880
        %v2889 = vadd.f32 %v2721, %v2881
        %v2890 = vmul.f32 %v2826, %v2846
        %v2891 = vmul.f32 %v2827, %v2847
        %v2892 = vmul.f32 %v2828, %v2848
        %v2893 = vmul.f32 %v2829, %v2849
        %v2898 = vrot.slane %v2890, 6
        %v2899 = vrot.slane %v2891, 6
        %v2900 = vrot.slane %v2892, 6
        %v2901 = vrot.slane %v2893, 6
        %v2906 = vadd.f32 %v2738, %v2898
        %v2907 = vadd.f32 %v2739, %v2899
        %v2908 = vadd.f32 %v2740, %v2900
        %v2909 = vadd.f32 %v2741, %v2901
        %v2914 = vrot.slane %v2842, 7
        %v2915 = vrot.slane %v2843, 7
        %v2916 = vrot.slane %v2844, 7
        %v2917 = vrot.slane %v2845, 7
        %v2922 = vmul.f32 %v2786, %v2914
        %v2923 = vmul.f32 %v2787, %v2915
        %v2924 = vmul.f32 %v2788, %v2916
        %v2925 = vmul.f32 %v2789, %v2917
        %v2926 = vperm.slane %v2922, 7
        %v2927 = vperm.slane %v2923, 7
        %v2928 = vperm.slane %v2924, 7
        %v2929 = vperm.slane %v2925, 7
        %v2930 = vmul.f32 %v2926, %v2786
        %v2931 = vmul.f32 %v2927, %v2787
        %v2932 = vmul.f32 %v2928, %v2788
        %v2933 = vmul.f32 %v2929, %v2789
        %v2934 = vsub.f32 %v2790, %v2930
        %v2935 = vsub.f32 %v2791, %v2931
        %v2936 = vsub.f32 %v2792, %v2932
        %v2937 = vsub.f32 %v2793, %v2933
        %v2942 = vrot.slane %v2802, 7
        %v2943 = vrot.slane %v2803, 7
        %v2944 = vrot.slane %v2804, 7
        %v2945 = vrot.slane %v2805, 7
        %v2950 = vmul.f32 %v2922, %v2942
        %v2951 = vmul.f32 %v2923, %v2943
        %v2952 = vmul.f32 %v2924, %v2944
        %v2953 = vmul.f32 %v2925, %v2945
        %v2954 = vsub.f32 %v2802, %v2950
        %v2955 = vsub.f32 %v2803, %v2951
        %v2956 = vsub.f32 %v2804, %v2952
        %v2957 = vsub.f32 %v2805, %v2953
        %v2962 = vrot.slane %v2814, 7
        %v2963 = vrot.slane %v2815, 7
        %v2964 = vrot.slane %v2816, 7
        %v2965 = vrot.slane %v2817, 7
        %v2970 = vmul.f32 %v2922, %v2962
        %v2971 = vmul.f32 %v2923, %v2963
        %v2972 = vmul.f32 %v2924, %v2964
        %v2973 = vmul.f32 %v2925, %v2965
        %v2974 = vsub.f32 %v2814, %v2970
        %v2975 = vsub.f32 %v2815, %v2971
        %v2976 = vsub.f32 %v2816, %v2972
        %v2977 = vsub.f32 %v2817, %v2973
        %v2982 = vrot.slane %v2826, 7
        %v2983 = vrot.slane %v2827, 7
        %v2984 = vrot.slane %v2828, 7
        %v2985 = vrot.slane %v2829, 7
        %v2990 = vmul.f32 %v2922, %v2982
        %v2991 = vmul.f32 %v2923, %v2983
        %v2992 = vmul.f32 %v2924, %v2984
        %v2993 = vmul.f32 %v2925, %v2985
        %v2994 = vsub.f32 %v2826, %v2990
        %v2995 = vsub.f32 %v2827, %v2991
        %v2996 = vsub.f32 %v2828, %v2992
        %v2997 = vsub.f32 %v2829, %v2993
        %v2998 = vrcp.pop %v2934
        %v2999 = vrcp.pop %v2935
        %v3000 = vrcp.pop %v2936
        %v3001 = vrcp.pop %v2937
        %v3002 = vmul.f32 %v2934, %v2998
        %v3003 = vmul.f32 %v2935, %v2999
        %v3004 = vmul.f32 %v2936, %v3000
        %v3005 = vmul.f32 %v2937, %v3001
        %v3006 = vsub.f32 2.0, %v3002
        %v3007 = vsub.f32 2.0, %v3003
        %v3008 = vsub.f32 2.0, %v3004
        %v3009 = vsub.f32 2.0, %v3005
        %v3010 = vmul.f32 %v2998, %v3006
        %v3011 = vmul.f32 %v2999, %v3007
        %v3012 = vmul.f32 %v3000, %v3008
        %v3013 = vmul.f32 %v3001, %v3009
        %v3014 = vmul.f32 %v2954, %v3010
        %v3015 = vmul.f32 %v2955, %v3011
        %v3016 = vmul.f32 %v2956, %v3012
        %v3017 = vmul.f32 %v2957, %v3013
        %v3018 = vmul.f32 %v2954, %v3014
        %v3019 = vmul.f32 %v2955, %v3015
        %v3020 = vmul.f32 %v2956, %v3016
        %v3021 = vmul.f32 %v2957, %v3017
        %v3026 = vrot.slane %v3018, 7
        %v3027 = vrot.slane %v3019, 7
        %v3028 = vrot.slane %v3020, 7
        %v3029 = vrot.slane %v3021, 7
        %v3034 = vadd.f32 %v2866, %v3026
        %v3035 = vadd.f32 %v2867, %v3027
        %v3036 = vadd.f32 %v2868, %v3028
        %v3037 = vadd.f32 %v2869, %v3029
        %v3038 = vmul.f32 %v2974, %v3014
        %v3039 = vmul.f32 %v2975, %v3015
        %v3040 = vmul.f32 %v2976, %v3016
        %v3041 = vmul.f32 %v2977, %v3017
        %v3046 = vrot.slane %v3038, 7
        %v3047 = vrot.slane %v3039, 7
        %v3048 = vrot.slane %v3040, 7
        %v3049 = vrot.slane %v3041, 7
        %v3054 = vadd.f32 %v2886, %v3046
        %v3055 = vadd.f32 %v2887, %v3047
        %v3056 = vadd.f32 %v2888, %v3048
        %v3057 = vadd.f32 %v2889, %v3049
        %v3058 = vmul.f32 %v2994, %v3014
        %v3059 = vmul.f32 %v2995, %v3015
        %v3060 = vmul.f32 %v2996, %v3016
        %v3061 = vmul.f32 %v2997, %v3017
        %v3066 = vrot.slane %v3058, 7
        %v3067 = vrot.slane %v3059, 7
        %v3068 = vrot.slane %v3060, 7
        %v3069 = vrot.slane %v3061, 7
        %v3074 = vadd.f32 %v2906, %v3066
        %v3075 = vadd.f32 %v2907, %v3067
        %v3076 = vadd.f32 %v2908, %v3068
        %v3077 = vadd.f32 %v2909, %v3069
        %v3078 = vsub.f32 %v1547, %v3034
        %v3079 = vsub.f32 %v1547, %v3035
        %v3080 = vsub.f32 %v1547, %v3036
        %v3081 = vsub.f32 %v1547, %v3037
        %v3082 = vrsqrt.pop %v3078
        %v3083 = vmul.f32 %v3082, %v3078
        %v3084 = vmul.f32 %v3083, %v3082
        %v3085 = vmul.f32 0.5, %v3084
        %v3086 = vsub.f32 1.5, %v3085
        %v3087 = vmul.f32 %v3082, %v3086
        %vm3088 = vweird.f32 %v3078
        %vm3089 = vweird.f32 %v3082
        %vm3090 = vmor %vm3088, %vm3089
        %v3091 = vsel %vm3090, %v3082, %v3087
        %v3092 = vrsqrt.pop %v3079
        %v3093 = vmul.f32 %v3092, %v3079
        %v3094 = vmul.f32 %v3093, %v3092
        %v3095 = vmul.f32 0.5, %v3094
        %v3096 = vsub.f32 1.5, %v3095
        %v3097 = vmul.f32 %v3092, %v3096
        %vm3098 = vweird.f32 %v3079
        %vm3099 = vweird.f32 %v3092
        %vm3100 = vmor %vm3098, %vm3099
        %v3101 = vsel %vm3100, %v3092, %v3097
        %v3102 = vrsqrt.pop %v3080
        %v3103 = vmul.f32 %v3102, %v3080
        %v3104 = vmul.f32 %v3103, %v3102
        %v3105 = vmul.f32 0.5, %v3104
        %v3106 = vsub.f32 1.5, %v3105
        %v3107 = vmul.f32 %v3102, %v3106
        %vm3108 = vweird.f32 %v3080
        %vm3109 = vweird.f32 %v3102
        %vm3110 = vmor %vm3108, %vm3109
        %v3111 = vsel %vm3110, %v3102, %v3107
        %v3112 = vrsqrt.pop %v3081
        %v3113 = vmul.f32 %v3112, %v3081
        %v3114 = vmul.f32 %v3113, %v3112
        %v3115 = vmul.f32 0.5, %v3114
        %v3116 = vsub.f32 1.5, %v3115
        %v3117 = vmul.f32 %v3112, %v3116
        %vm3118 = vweird.f32 %v3081
        %vm3119 = vweird.f32 %v3112
        %vm3120 = vmor %vm3118, %vm3119
        %v3121 = vsel %vm3120, %v3112, %v3117
        %v3122 = vld [vmem:[%s466] sm:$0xf]
        %v3127 = vrot.slane %v3055, 7
        %v3128 = vrot.slane %v3056, 6
        %v3129 = vrot.slane %v3057, 5
        %v3130 = vsel %vm515, %v3054, %v3127
        %v3131 = vsel %vm517, %v3128, %v3129
        %v3132 = vsel %vm519, %v3130, %v3131
        %v3134 = vsub.f32 %v3122, %v3132
        %v3139 = vrot.slane %v3101, 7
        %v3140 = vrot.slane %v3111, 6
        %v3141 = vrot.slane %v3121, 5
        %v3142 = vsel %vm515, %v3091, %v3139
        %v3143 = vsel %vm517, %v3140, %v3141
        %v3144 = vsel %vm519, %v3142, %v3143
        %v3146 = vmul.f32 %v3134, %v3144
        %v3147 = vld [vmem:[%s471] sm:$0xf]
        %v3152 = vrot.slane %v3075, 7
        %v3153 = vrot.slane %v3076, 6
        %v3154 = vrot.slane %v3077, 5
        %v3155 = vsel %vm515, %v3074, %v3152
        %v3156 = vsel %vm517, %v3153, %v3154
        %v3157 = vsel %vm519, %v3155, %v3156
        %v3159 = vsub.f32 %v3147, %v3157
        %v3160 = vmul.f32 %v3159, %v3144
        %v3162 = vperm.slane %v3146, 0
        %v3163 = vperm.slane %v3146, 1
        %v3164 = vperm.slane %v3146, 2
        %v3165 = vperm.slane %v3146, 3
        %v3171 = vperm.slane %v3160, 0
        %v3172 = vperm.slane %v3160, 1
        %v3173 = vperm.slane %v3160, 2
        %v3174 = vperm.slane %v3160, 3
        %v3179 = vsel %vm515, %v3162, %v3171
        %v3180 = vsel %vm515, %v3163, %v3172
        %v3181 = vsel %vm515, %v3164, %v3173
        %v3182 = vsel %vm515, %v3165, %v3174
        %v3187 = vrot.slane %v3180, 6
        %v3188 = vrot.slane %v3181, 4
        %v3189 = vrot.slane %v3182, 2
        %v3190 = vsel %vm519, %v3179, %v3187
        %v3191 = vsel %vm543, %v3188, %v3189
        %vm3192 = vcmask 1043456
        %v3193 = vsel %vm3192, %v3190, %v3191
        %3195 = vst [vmem:[%s477] sm:$0xff] %v3193
        %s3196 = smul.u32 4, %s19
        %p3197 = scmp.lt.s32.totalorder %s3196, 15
        %s3198 = scalar_select %p3197, %s3196, 15
        %s3199 = smul.addr %s3198, 2
        %s3200 = scalar_lea.vmem %s7, %s3199
        // Predicated region
        $region117: #{nngls_forward.3} parent=103 // pred_check
          %p3201 = pneg %p214
        $region118: #{nngls_forward.3} parent=103 // pred_check_branch
          %3203 = sbr.rel (%p3201) target = $region120
        $region119: #{nngls_forward.3} parent=103 // pred_region
          %s3204 = smul.u32 4, %s19
        $region120: #{nngls_forward.3} parent=103 // pred_fallthru
          _
      $region104: #{nngls_forward.3} parent=5 // pred_fallthru
        _
      %p3205 = scmp.le.s32.totalorder 2, %s14
      // Predicated region
      $region121: #{nngls_forward.3} parent=5 // pred_check
        %p3206 = pneg %p3205
      $region122: #{nngls_forward.3} parent=5 // pred_check_branch
        %3208 = sbr.rel (%p3206) target = $region124
      $region123: #{nngls_forward.3} parent=5 // pred_region
        %s3209 = ssub.s32 %s14, 2
        // Predicated region
        $region125: #{nngls_forward.3} parent=123 // pred_check
          %p3210 = pneg %p220
        $region126: #{nngls_forward.3} parent=123 // pred_check_branch
          %3212 = sbr.rel (%p3210) target = $region128
        $region127: #{nngls_forward.3} parent=123 // pred_region
          %s3213 = smul.u32 4, %s20
          %p3214 = scmp.lt.s32.totalorder %s3213, 15
          %s3215 = scalar_select %p3214, %s3213, 15
          %s3216 = smul.addr %s3215, 2
          %s3217 = scalar_lea.vmem %s7, %s3216
        $region128: #{nngls_forward.3} parent=123 // pred_fallthru
          _
      $region124: #{nngls_forward.3} parent=5 // pred_fallthru
        _
    $region6: #{nngls_forward.3} parent=1 // loop_footer
      %s18 = sadd.s32 1, %s14
    $region7: #{nngls_forward.3} parent=1 // loop_footer_branch
      %13 = sbr.rel target = $region3
    $region8: #{nngls_forward.3} parent=1 // loop_exit
      _
    %3218 = vsyncpa [#allocation3], 1
    %s3219 = scalar_lea.sflag [#allocation3], 1
    %3220 = vsyncpa %s3219, 1

</llo_original>
